<compile_context>
chip_gen: v7x
topology: tpu7x:2x2x1
jax: 0.10.0
libtpu: 0.0.40
codegen_flags: <defaults>
</compile_context>

<pallas_src>
import functools
import math

import jax
import jax.numpy as jnp
from jax import lax
from jax.experimental import pallas as pl
from jax.experimental.pallas import tpu as pltpu


def _round_up(x, m):
    return (x + m - 1) // m * m


# ------------------------------------------------------------------
# In-kernel value helpers (pure math on loaded values, f32)
# ------------------------------------------------------------------

def _layernorm(x, g, b, eps):
    mean = jnp.mean(x, axis=-1, keepdims=True)
    xc = x - mean
    var = jnp.mean(xc * xc, axis=-1, keepdims=True)
    return xc * lax.rsqrt(var + eps) * g + b


_ERF_P = 0.3275911
_ERF_A = (0.254829592, -0.284496736, 1.421413741, -1.453152027, 1.061405429)
_SQRT_HALF = 0.7071067811865476


def _erf(x):
    # TODO(synk): Abramowitz&Stegun 7.1.26 polynomial (|err| < 1.5e-7) used in
    # place of lax.erf (lowering inside Mosaic not guaranteed).  This keeps the
    # exact-erf GELU form (nn.GELU default), NOT the tanh approximation.
    a1, a2, a3, a4, a5 = _ERF_A
    ax = jnp.abs(x)
    t = 1.0 / (1.0 + _ERF_P * ax)
    poly = ((((a5 * t + a4) * t + a3) * t + a2) * t + a1) * t
    y = 1.0 - poly * jnp.exp(-(ax * ax))
    return jnp.where(x >= 0, y, -y)


def _gelu_exact(x):
    return 0.5 * x * (1.0 + _erf(x * _SQRT_HALF))


# ------------------------------------------------------------------
# Whole-block kernel: one grid step == one batch element
# ------------------------------------------------------------------

def _block_kernel(x_ref, ln1g_ref, ln1b_ref, wqkv_ref, bqkv_ref,
                  wo_ref, bo_ref, ln2g_ref, ln2b_ref,
                  w1_ref, b1_ref, w2_ref, b2_ref, o_ref,
                  *, num_heads, scale, eps, seq_len):
    x = x_ref[0]                                   # (Lp, E) f32, one batch elem
    Lp, E = x.shape
    d = E // num_heads

    # ---- attention branch:  x1 = x + out_proj(attn(norm1(x))) ----
    xn = _layernorm(x, ln1g_ref[...], ln1b_ref[...], eps)
    qkv = jnp.dot(xn.astype(jnp.bfloat16), wqkv_ref[...],
                  preferred_element_type=jnp.float32) + bqkv_ref[...]   # (Lp, 3E)

    if Lp != seq_len:
        # padded key rows must not take part in the softmax
        key_mask = lax.broadcasted_iota(jnp.int32, (Lp, Lp), 1) < seq_len

    ctx_parts = []
    for hh in range(num_heads):                    # static unroll, num_heads small
        qh = qkv[:, hh * d:(hh + 1) * d].astype(jnp.bfloat16)
        kh = qkv[:, E + hh * d:E + (hh + 1) * d].astype(jnp.bfloat16)
        vh = qkv[:, 2 * E + hh * d:2 * E + (hh + 1) * d].astype(jnp.bfloat16)
        # q @ k^T via dot_general contracting last dims (no explicit k.T)
        s = lax.dot_general(qh, kh, (((1,), (1,)), ((), ())),
                            preferred_element_type=jnp.float32) * scale
        if Lp != seq_len:
            s = jnp.where(key_mask, s, -1e30)
        s = s - jnp.max(s, axis=-1, keepdims=True)
        p = jnp.exp(s)                                                   # EUP
        p = p * pl.reciprocal(jnp.sum(p, axis=-1, keepdims=True), approx=True)
        ctx_parts.append(jnp.dot(p.astype(jnp.bfloat16), vh,
                                 preferred_element_type=jnp.float32))
    # lane-dense (Lp, E) context, consumed directly by out_proj (never stored)
    ctx = jnp.concatenate(ctx_parts, axis=-1).astype(jnp.bfloat16)

    x1 = (jnp.dot(ctx, wo_ref[...], preferred_element_type=jnp.float32)
          + bo_ref[...] + x)                                             # residual

    # ---- MLP branch:  out = x1 + lin2(gelu(lin1(norm2(x1)))) ----
    xn2 = _layernorm(x1, ln2g_ref[...], ln2b_ref[...], eps)
    h = jnp.dot(xn2.astype(jnp.bfloat16), w1_ref[...],
                preferred_element_type=jnp.float32) + b1_ref[...]
    h = _gelu_exact(h)                                                   # exact-erf GELU
    y = (jnp.dot(h.astype(jnp.bfloat16), w2_ref[...],
                 preferred_element_type=jnp.float32) + b2_ref[...] + x1)

    o_ref[0] = y.astype(o_ref.dtype)


# ------------------------------------------------------------------
# TransformerBlock forward (wrapper around the single pallas_call)
# ------------------------------------------------------------------

def transformer_block(x, p, num_heads=8, eps=1e-5):
    """x: (L, N, E) f32 — mirrors PyTorch TransformerBlock.forward."""
    L, N, E = x.shape
    hidden = p['mlp1_w'].shape[1]
    assert E % num_heads == 0 and E % 128 == 0, "E must be lane aligned"
    d = E // num_heads

    Lp = _round_up(L, 8)
    xb = x.astype(jnp.float32).transpose(1, 0, 2)          # (N, L, E) batch-major
    if Lp != L:
        xb = jnp.pad(xb, ((0, 0), (0, Lp - L), (0, 0)))

    def full_spec(shape):
        nd = len(shape)
        return pl.BlockSpec(shape, lambda b, _nd=nd: (0,) * _nd)

    def row(v):
        return v.reshape(1, -1).astype(jnp.float32)

    kernel = functools.partial(_block_kernel, num_heads=num_heads,
                               scale=1.0 / math.sqrt(d), eps=eps, seq_len=L)

    out = pl.pallas_call(
        kernel,
        out_shape=jax.ShapeDtypeStruct((N, Lp, E), jnp.float32),
        grid_spec=pltpu.PrefetchScalarGridSpec(
            num_scalar_prefetch=0,
            grid=(N,),
            in_specs=[
                pl.BlockSpec((1, Lp, E), lambda b: (b, 0, 0)),    # x, per batch elem
                full_spec((1, E)), full_spec((1, E)),             # ln1 gamma / beta
                full_spec((E, 3 * E)), full_spec((1, 3 * E)),     # in_proj  W / b
                full_spec((E, E)), full_spec((1, E)),             # out_proj W / b
                full_spec((1, E)), full_spec((1, E)),             # ln2 gamma / beta
                full_spec((E, hidden)), full_spec((1, hidden)),   # mlp lin1 W / b
                full_spec((hidden, E)), full_spec((1, E)),        # mlp lin2 W / b
            ],
            out_specs=pl.BlockSpec((1, Lp, E), lambda b: (b, 0, 0))),
        compiler_params=pltpu.CompilerParams(
            dimension_semantics=("parallel",)),
    )(xb,
      row(p['ln1_g']), row(p['ln1_b']),
      p['in_proj_w'].astype(jnp.bfloat16), row(p['in_proj_b']),
      p['out_proj_w'].astype(jnp.bfloat16), row(p['out_proj_b']),
      row(p['ln2_g']), row(p['ln2_b']),
      p['mlp1_w'].astype(jnp.bfloat16), row(p['mlp1_b']),
      p['mlp2_w'].astype(jnp.bfloat16), row(p['mlp2_b']))

    if Lp != L:
        out = out[:, :L]
    return out.transpose(1, 0, 2)                           # back to (L, N, E)


# ------------------------------------------------------------------
# Deterministic parameter init (weights stored (in, out), pre-cast to bf16)
# ------------------------------------------------------------------

def init_params(key, dim=256, mlp_ratio=4.0):
    hidden = int(dim * mlp_ratio)
    ks = jax.random.split(key, 8)
    s = 0.05

    def w(k, shape):
        return (jax.random.normal(k, shape, jnp.float32) * s).astype(jnp.bfloat16)

    def b(k, n):
        return jax.random.normal(k, (n,), jnp.float32) * s

    return {
        'ln1_g': jnp.ones((dim,), jnp.float32),
        'ln1_b': jnp.zeros((dim,), jnp.float32),
        'in_proj_w': w(ks[0], (dim, 3 * dim)),   # = torch in_proj_weight.T
        'in_proj_b': b(ks[1], 3 * dim),
        'out_proj_w': w(ks[2], (dim, dim)),      # = torch out_proj.weight.T
        'out_proj_b': b(ks[3], dim),
        'ln2_g': jnp.ones((dim,), jnp.float32),
        'ln2_b': jnp.zeros((dim,), jnp.float32),
        'mlp1_w': w(ks[4], (dim, hidden)),
        'mlp1_b': b(ks[5], hidden),
        'mlp2_w': w(ks[6], (hidden, dim)),
        'mlp2_b': b(ks[7], dim),
    }


# ------------------------------------------------------------------

if __name__ == "__main__":
    key = jax.random.PRNGKey(0)
    pkey, xkey = jax.random.split(key)

    L, N, E, num_heads = 16, 2, 256, 8            # (L, N, E) torch MHA layout
    params = init_params(pkey, dim=E)
    x = jax.random.normal(xkey, (L, N, E), jnp.float32)

    fwd = jax.jit(functools.partial(transformer_block, num_heads=num_heads))
    out = jax.block_until_ready(fwd(x, params))

    assert out.shape == (L, N, E), out.shape
    assert bool(jnp.all(jnp.isfinite(out)))
    print("KERNEL_OK")
</pallas_src>

<mosaic_0001>
module attributes {stable_mosaic.version = 11 : i64} {
  func.func @_block_kernel(%arg0: i32, %arg1: memref<1x16x256xf32, #tpu.memory_space<vmem>>, %arg2: memref<1x256xf32, #tpu.memory_space<vmem>>, %arg3: memref<1x256xf32, #tpu.memory_space<vmem>>, %arg4: memref<256x768xbf16, #tpu.memory_space<vmem>>, %arg5: memref<1x768xf32, #tpu.memory_space<vmem>>, %arg6: memref<256x256xbf16, #tpu.memory_space<vmem>>, %arg7: memref<1x256xf32, #tpu.memory_space<vmem>>, %arg8: memref<1x256xf32, #tpu.memory_space<vmem>>, %arg9: memref<1x256xf32, #tpu.memory_space<vmem>>, %arg10: memref<256x1024xbf16, #tpu.memory_space<vmem>>, %arg11: memref<1x1024xf32, #tpu.memory_space<vmem>>, %arg12: memref<1024x256xbf16, #tpu.memory_space<vmem>>, %arg13: memref<1x256xf32, #tpu.memory_space<vmem>>, %arg14: memref<1x16x256xf32, #tpu.memory_space<vmem>>) attributes {dimension_semantics = [#tpu.dimension_semantics<parallel>], iteration_bounds = array<i64: 2>, scalar_prefetch = 0 : i64, scratch_operands = 0 : i64, tpu.core_type = #tpu.core_type<tc>, window_params = [{transform_indices = @transform_0, window_bounds = array<i64: 1, 16, 256>}, {pipeline_mode = #tpu.pipeline_mode<synchronous>, transform_indices = @transform_1, window_bounds = array<i64: 1, 256>}, {pipeline_mode = #tpu.pipeline_mode<synchronous>, transform_indices = @transform_2, window_bounds = array<i64: 1, 256>}, {pipeline_mode = #tpu.pipeline_mode<synchronous>, transform_indices = @transform_3, window_bounds = array<i64: 256, 768>}, {pipeline_mode = #tpu.pipeline_mode<synchronous>, transform_indices = @transform_4, window_bounds = array<i64: 1, 768>}, {pipeline_mode = #tpu.pipeline_mode<synchronous>, transform_indices = @transform_5, window_bounds = array<i64: 256, 256>}, {pipeline_mode = #tpu.pipeline_mode<synchronous>, transform_indices = @transform_6, window_bounds = array<i64: 1, 256>}, {pipeline_mode = #tpu.pipeline_mode<synchronous>, transform_indices = @transform_7, window_bounds = array<i64: 1, 256>}, {pipeline_mode = #tpu.pipeline_mode<synchronous>, transform_indices = @transform_8, window_bounds = array<i64: 1, 256>}, {pipeline_mode = #tpu.pipeline_mode<synchronous>, transform_indices = @transform_9, window_bounds = array<i64: 256, 1024>}, {pipeline_mode = #tpu.pipeline_mode<synchronous>, transform_indices = @transform_10, window_bounds = array<i64: 1, 1024>}, {pipeline_mode = #tpu.pipeline_mode<synchronous>, transform_indices = @transform_11, window_bounds = array<i64: 1024, 256>}, {pipeline_mode = #tpu.pipeline_mode<synchronous>, transform_indices = @transform_12, window_bounds = array<i64: 1, 256>}, {transform_indices = @transform_13, window_bounds = array<i64: 1, 16, 256>}]} {
    %c0 = arith.constant 0 : index
    %c0_0 = arith.constant 0 : index
    %c0_1 = arith.constant 0 : index
    %0 = vector.load %arg1[%c0, %c0_0, %c0_1] : memref<1x16x256xf32, #tpu.memory_space<vmem>>, vector<1x16x256xf32>
    %1 = vector.shape_cast %0 : vector<1x16x256xf32> to vector<16x256xf32>
    %c0_2 = arith.constant 0 : index
    %c0_3 = arith.constant 0 : index
    %2 = vector.load %arg2[%c0_2, %c0_3] : memref<1x256xf32, #tpu.memory_space<vmem>>, vector<1x256xf32>
    %c0_4 = arith.constant 0 : index
    %c0_5 = arith.constant 0 : index
    %3 = vector.load %arg3[%c0_4, %c0_5] : memref<1x256xf32, #tpu.memory_space<vmem>>, vector<1x256xf32>
    %cst = arith.constant dense<0.000000e+00> : vector<16xf32>
    %4 = vector.multi_reduction <add>, %1, %cst [1] : vector<16x256xf32> to vector<16xf32>
    %5 = vector.shape_cast %4 : vector<16xf32> to vector<16x1xf32>
    %cst_6 = arith.constant 2.560000e+02 : f32
    %6 = vector.broadcast %cst_6 : f32 to vector<16x1xf32>
    %7 = arith.divf %5, %6 : vector<16x1xf32>
    %8 = vector.broadcast %7 : vector<16x1xf32> to vector<16x256xf32>
    %9 = arith.subf %1, %8 : vector<16x256xf32>
    %10 = arith.mulf %9, %9 : vector<16x256xf32>
    %cst_7 = arith.constant dense<0.000000e+00> : vector<16xf32>
    %11 = vector.multi_reduction <add>, %10, %cst_7 [1] : vector<16x256xf32> to vector<16xf32>
    %12 = vector.shape_cast %11 : vector<16xf32> to vector<16x1xf32>
    %cst_8 = arith.constant 2.560000e+02 : f32
    %13 = vector.broadcast %cst_8 : f32 to vector<16x1xf32>
    %14 = arith.divf %12, %13 : vector<16x1xf32>
    %cst_9 = arith.constant 9.99999974E-6 : f32
    %15 = vector.broadcast %cst_9 : f32 to vector<16x1xf32>
    %16 = arith.addf %14, %15 : vector<16x1xf32>
    %17 = math.rsqrt %16 : vector<16x1xf32>
    %18 = vector.broadcast %17 : vector<16x1xf32> to vector<16x256xf32>
    %19 = arith.mulf %9, %18 : vector<16x256xf32>
    %20 = vector.broadcast %2 : vector<1x256xf32> to vector<16x256xf32>
    %21 = arith.mulf %19, %20 : vector<16x256xf32>
    %22 = vector.broadcast %3 : vector<1x256xf32> to vector<16x256xf32>
    %23 = arith.addf %21, %22 : vector<16x256xf32>
    %24 = arith.truncf %23 : vector<16x256xf32> to vector<16x256xbf16>
    %c0_10 = arith.constant 0 : index
    %c0_11 = arith.constant 0 : index
    %25 = vector.load %arg4[%c0_10, %c0_11] : memref<256x768xbf16, #tpu.memory_space<vmem>>, vector<256x768xbf16>
    %cst_12 = arith.constant dense<0.000000e+00> : vector<16x768xf32>
    %26 = tpu.matmul %24, %25, %cst_12 {dimension_numbers = #tpu.dot_dimension_numbers<[1], [0], [0], [1], [0, 0, 1, 1], [], []>} : vector<16x256xbf16>, vector<256x768xbf16>, vector<16x768xf32> -> vector<16x768xf32>
    %c0_13 = arith.constant 0 : index
    %c0_14 = arith.constant 0 : index
    %27 = vector.load %arg5[%c0_13, %c0_14] : memref<1x768xf32, #tpu.memory_space<vmem>>, vector<1x768xf32>
    %28 = vector.broadcast %27 : vector<1x768xf32> to vector<16x768xf32>
    %29 = arith.addf %26, %28 : vector<16x768xf32>
    %30 = vector.extract_strided_slice %29 {offsets = [0, 0], sizes = [16, 32], strides = [1, 1]} : vector<16x768xf32> to vector<16x32xf32>
    %31 = arith.truncf %30 : vector<16x32xf32> to vector<16x32xbf16>
    %32 = vector.extract_strided_slice %29 {offsets = [0, 256], sizes = [16, 32], strides = [1, 1]} : vector<16x768xf32> to vector<16x32xf32>
    %33 = arith.truncf %32 : vector<16x32xf32> to vector<16x32xbf16>
    %34 = vector.extract_strided_slice %29 {offsets = [0, 512], sizes = [16, 32], strides = [1, 1]} : vector<16x768xf32> to vector<16x32xf32>
    %35 = arith.truncf %34 : vector<16x32xf32> to vector<16x32xbf16>
    %cst_15 = arith.constant dense<0.000000e+00> : vector<16x16xf32>
    %36 = tpu.matmul %31, %33, %cst_15 {dimension_numbers = #tpu.dot_dimension_numbers<[1], [1], [0], [0], [0, 0, 1, 0], [], []>} : vector<16x32xbf16>, vector<16x32xbf16>, vector<16x16xf32> -> vector<16x16xf32>
    %cst_16 = arith.constant 0.176776692 : f32
    %37 = vector.broadcast %cst_16 : f32 to vector<16x16xf32>
    %38 = arith.mulf %36, %37 : vector<16x16xf32>
    %cst_17 = arith.constant dense<0xFF800000> : vector<16xf32>
    %39 = vector.multi_reduction <maximumf>, %38, %cst_17 [1] : vector<16x16xf32> to vector<16xf32>
    %40 = vector.shape_cast %39 : vector<16xf32> to vector<16x1xf32>
    %41 = vector.broadcast %40 : vector<16x1xf32> to vector<16x16xf32>
    %42 = arith.subf %38, %41 : vector<16x16xf32>
    %43 = math.exp %42 : vector<16x16xf32>
    %cst_18 = arith.constant dense<0.000000e+00> : vector<16xf32>
    %44 = vector.multi_reduction <add>, %43, %cst_18 [1] : vector<16x16xf32> to vector<16xf32>
    %45 = vector.shape_cast %44 : vector<16xf32> to vector<16x1xf32>
    %46 = tpu.reciprocal %45 {approx = true} : vector<16x1xf32> -> vector<16x1xf32>
    %47 = vector.broadcast %46 : vector<16x1xf32> to vector<16x16xf32>
    %48 = arith.mulf %43, %47 : vector<16x16xf32>
    %49 = arith.truncf %48 : vector<16x16xf32> to vector<16x16xbf16>
    %cst_19 = arith.constant dense<0.000000e+00> : vector<16x32xf32>
    %50 = tpu.matmul %49, %35, %cst_19 {dimension_numbers = #tpu.dot_dimension_numbers<[1], [0], [0], [1], [0, 0, 1, 1], [], []>} : vector<16x16xbf16>, vector<16x32xbf16>, vector<16x32xf32> -> vector<16x32xf32>
    %51 = vector.extract_strided_slice %29 {offsets = [0, 32], sizes = [16, 32], strides = [1, 1]} : vector<16x768xf32> to vector<16x32xf32>
    %52 = arith.truncf %51 : vector<16x32xf32> to vector<16x32xbf16>
    %53 = vector.extract_strided_slice %29 {offsets = [0, 288], sizes = [16, 32], strides = [1, 1]} : vector<16x768xf32> to vector<16x32xf32>
    %54 = arith.truncf %53 : vector<16x32xf32> to vector<16x32xbf16>
    %55 = vector.extract_strided_slice %29 {offsets = [0, 544], sizes = [16, 32], strides = [1, 1]} : vector<16x768xf32> to vector<16x32xf32>
    %56 = arith.truncf %55 : vector<16x32xf32> to vector<16x32xbf16>
    %cst_20 = arith.constant dense<0.000000e+00> : vector<16x16xf32>
    %57 = tpu.matmul %52, %54, %cst_20 {dimension_numbers = #tpu.dot_dimension_numbers<[1], [1], [0], [0], [0, 0, 1, 0], [], []>} : vector<16x32xbf16>, vector<16x32xbf16>, vector<16x16xf32> -> vector<16x16xf32>
    %cst_21 = arith.constant 0.176776692 : f32
    %58 = vector.broadcast %cst_21 : f32 to vector<16x16xf32>
    %59 = arith.mulf %57, %58 : vector<16x16xf32>
    %cst_22 = arith.constant dense<0xFF800000> : vector<16xf32>
    %60 = vector.multi_reduction <maximumf>, %59, %cst_22 [1] : vector<16x16xf32> to vector<16xf32>
    %61 = vector.shape_cast %60 : vector<16xf32> to vector<16x1xf32>
    %62 = vector.broadcast %61 : vector<16x1xf32> to vector<16x16xf32>
    %63 = arith.subf %59, %62 : vector<16x16xf32>
    %64 = math.exp %63 : vector<16x16xf32>
    %cst_23 = arith.constant dense<0.000000e+00> : vector<16xf32>
    %65 = vector.multi_reduction <add>, %64, %cst_23 [1] : vector<16x16xf32> to vector<16xf32>
    %66 = vector.shape_cast %65 : vector<16xf32> to vector<16x1xf32>
    %67 = tpu.reciprocal %66 {approx = true} : vector<16x1xf32> -> vector<16x1xf32>
    %68 = vector.broadcast %67 : vector<16x1xf32> to vector<16x16xf32>
    %69 = arith.mulf %64, %68 : vector<16x16xf32>
    %70 = arith.truncf %69 : vector<16x16xf32> to vector<16x16xbf16>
    %cst_24 = arith.constant dense<0.000000e+00> : vector<16x32xf32>
    %71 = tpu.matmul %70, %56, %cst_24 {dimension_numbers = #tpu.dot_dimension_numbers<[1], [0], [0], [1], [0, 0, 1, 1], [], []>} : vector<16x16xbf16>, vector<16x32xbf16>, vector<16x32xf32> -> vector<16x32xf32>
    %72 = vector.extract_strided_slice %29 {offsets = [0, 64], sizes = [16, 32], strides = [1, 1]} : vector<16x768xf32> to vector<16x32xf32>
    %73 = arith.truncf %72 : vector<16x32xf32> to vector<16x32xbf16>
    %74 = vector.extract_strided_slice %29 {offsets = [0, 320], sizes = [16, 32], strides = [1, 1]} : vector<16x768xf32> to vector<16x32xf32>
    %75 = arith.truncf %74 : vector<16x32xf32> to vector<16x32xbf16>
    %76 = vector.extract_strided_slice %29 {offsets = [0, 576], sizes = [16, 32], strides = [1, 1]} : vector<16x768xf32> to vector<16x32xf32>
    %77 = arith.truncf %76 : vector<16x32xf32> to vector<16x32xbf16>
    %cst_25 = arith.constant dense<0.000000e+00> : vector<16x16xf32>
    %78 = tpu.matmul %73, %75, %cst_25 {dimension_numbers = #tpu.dot_dimension_numbers<[1], [1], [0], [0], [0, 0, 1, 0], [], []>} : vector<16x32xbf16>, vector<16x32xbf16>, vector<16x16xf32> -> vector<16x16xf32>
    %cst_26 = arith.constant 0.176776692 : f32
    %79 = vector.broadcast %cst_26 : f32 to vector<16x16xf32>
    %80 = arith.mulf %78, %79 : vector<16x16xf32>
    %cst_27 = arith.constant dense<0xFF800000> : vector<16xf32>
    %81 = vector.multi_reduction <maximumf>, %80, %cst_27 [1] : vector<16x16xf32> to vector<16xf32>
    %82 = vector.shape_cast %81 : vector<16xf32> to vector<16x1xf32>
    %83 = vector.broadcast %82 : vector<16x1xf32> to vector<16x16xf32>
    %84 = arith.subf %80, %83 : vector<16x16xf32>
    %85 = math.exp %84 : vector<16x16xf32>
    %cst_28 = arith.constant dense<0.000000e+00> : vector<16xf32>
    %86 = vector.multi_reduction <add>, %85, %cst_28 [1] : vector<16x16xf32> to vector<16xf32>
    %87 = vector.shape_cast %86 : vector<16xf32> to vector<16x1xf32>
    %88 = tpu.reciprocal %87 {approx = true} : vector<16x1xf32> -> vector<16x1xf32>
    %89 = vector.broadcast %88 : vector<16x1xf32> to vector<16x16xf32>
    %90 = arith.mulf %85, %89 : vector<16x16xf32>
    %91 = arith.truncf %90 : vector<16x16xf32> to vector<16x16xbf16>
    %cst_29 = arith.constant dense<0.000000e+00> : vector<16x32xf32>
    %92 = tpu.matmul %91, %77, %cst_29 {dimension_numbers = #tpu.dot_dimension_numbers<[1], [0], [0], [1], [0, 0, 1, 1], [], []>} : vector<16x16xbf16>, vector<16x32xbf16>, vector<16x32xf32> -> vector<16x32xf32>
    %93 = vector.extract_strided_slice %29 {offsets = [0, 96], sizes = [16, 32], strides = [1, 1]} : vector<16x768xf32> to vector<16x32xf32>
    %94 = arith.truncf %93 : vector<16x32xf32> to vector<16x32xbf16>
    %95 = vector.extract_strided_slice %29 {offsets = [0, 352], sizes = [16, 32], strides = [1, 1]} : vector<16x768xf32> to vector<16x32xf32>
    %96 = arith.truncf %95 : vector<16x32xf32> to vector<16x32xbf16>
    %97 = vector.extract_strided_slice %29 {offsets = [0, 608], sizes = [16, 32], strides = [1, 1]} : vector<16x768xf32> to vector<16x32xf32>
    %98 = arith.truncf %97 : vector<16x32xf32> to vector<16x32xbf16>
    %cst_30 = arith.constant dense<0.000000e+00> : vector<16x16xf32>
    %99 = tpu.matmul %94, %96, %cst_30 {dimension_numbers = #tpu.dot_dimension_numbers<[1], [1], [0], [0], [0, 0, 1, 0], [], []>} : vector<16x32xbf16>, vector<16x32xbf16>, vector<16x16xf32> -> vector<16x16xf32>
    %cst_31 = arith.constant 0.176776692 : f32
    %100 = vector.broadcast %cst_31 : f32 to vector<16x16xf32>
    %101 = arith.mulf %99, %100 : vector<16x16xf32>
    %cst_32 = arith.constant dense<0xFF800000> : vector<16xf32>
    %102 = vector.multi_reduction <maximumf>, %101, %cst_32 [1] : vector<16x16xf32> to vector<16xf32>
    %103 = vector.shape_cast %102 : vector<16xf32> to vector<16x1xf32>
    %104 = vector.broadcast %103 : vector<16x1xf32> to vector<16x16xf32>
    %105 = arith.subf %101, %104 : vector<16x16xf32>
    %106 = math.exp %105 : vector<16x16xf32>
    %cst_33 = arith.constant dense<0.000000e+00> : vector<16xf32>
    %107 = vector.multi_reduction <add>, %106, %cst_33 [1] : vector<16x16xf32> to vector<16xf32>
    %108 = vector.shape_cast %107 : vector<16xf32> to vector<16x1xf32>
    %109 = tpu.reciprocal %108 {approx = true} : vector<16x1xf32> -> vector<16x1xf32>
    %110 = vector.broadcast %109 : vector<16x1xf32> to vector<16x16xf32>
    %111 = arith.mulf %106, %110 : vector<16x16xf32>
    %112 = arith.truncf %111 : vector<16x16xf32> to vector<16x16xbf16>
    %cst_34 = arith.constant dense<0.000000e+00> : vector<16x32xf32>
    %113 = tpu.matmul %112, %98, %cst_34 {dimension_numbers = #tpu.dot_dimension_numbers<[1], [0], [0], [1], [0, 0, 1, 1], [], []>} : vector<16x16xbf16>, vector<16x32xbf16>, vector<16x32xf32> -> vector<16x32xf32>
    %114 = vector.extract_strided_slice %29 {offsets = [0, 128], sizes = [16, 32], strides = [1, 1]} : vector<16x768xf32> to vector<16x32xf32>
    %115 = arith.truncf %114 : vector<16x32xf32> to vector<16x32xbf16>
    %116 = vector.extract_strided_slice %29 {offsets = [0, 384], sizes = [16, 32], strides = [1, 1]} : vector<16x768xf32> to vector<16x32xf32>
    %117 = arith.truncf %116 : vector<16x32xf32> to vector<16x32xbf16>
    %118 = vector.extract_strided_slice %29 {offsets = [0, 640], sizes = [16, 32], strides = [1, 1]} : vector<16x768xf32> to vector<16x32xf32>
    %119 = arith.truncf %118 : vector<16x32xf32> to vector<16x32xbf16>
    %cst_35 = arith.constant dense<0.000000e+00> : vector<16x16xf32>
    %120 = tpu.matmul %115, %117, %cst_35 {dimension_numbers = #tpu.dot_dimension_numbers<[1], [1], [0], [0], [0, 0, 1, 0], [], []>} : vector<16x32xbf16>, vector<16x32xbf16>, vector<16x16xf32> -> vector<16x16xf32>
    %cst_36 = arith.constant 0.176776692 : f32
    %121 = vector.broadcast %cst_36 : f32 to vector<16x16xf32>
    %122 = arith.mulf %120, %121 : vector<16x16xf32>
    %cst_37 = arith.constant dense<0xFF800000> : vector<16xf32>
    %123 = vector.multi_reduction <maximumf>, %122, %cst_37 [1] : vector<16x16xf32> to vector<16xf32>
    %124 = vector.shape_cast %123 : vector<16xf32> to vector<16x1xf32>
    %125 = vector.broadcast %124 : vector<16x1xf32> to vector<16x16xf32>
    %126 = arith.subf %122, %125 : vector<16x16xf32>
    %127 = math.exp %126 : vector<16x16xf32>
    %cst_38 = arith.constant dense<0.000000e+00> : vector<16xf32>
    %128 = vector.multi_reduction <add>, %127, %cst_38 [1] : vector<16x16xf32> to vector<16xf32>
    %129 = vector.shape_cast %128 : vector<16xf32> to vector<16x1xf32>
    %130 = tpu.reciprocal %129 {approx = true} : vector<16x1xf32> -> vector<16x1xf32>
    %131 = vector.broadcast %130 : vector<16x1xf32> to vector<16x16xf32>
    %132 = arith.mulf %127, %131 : vector<16x16xf32>
    %133 = arith.truncf %132 : vector<16x16xf32> to vector<16x16xbf16>
    %cst_39 = arith.constant dense<0.000000e+00> : vector<16x32xf32>
    %134 = tpu.matmul %133, %119, %cst_39 {dimension_numbers = #tpu.dot_dimension_numbers<[1], [0], [0], [1], [0, 0, 1, 1], [], []>} : vector<16x16xbf16>, vector<16x32xbf16>, vector<16x32xf32> -> vector<16x32xf32>
    %135 = vector.extract_strided_slice %29 {offsets = [0, 160], sizes = [16, 32], strides = [1, 1]} : vector<16x768xf32> to vector<16x32xf32>
    %136 = arith.truncf %135 : vector<16x32xf32> to vector<16x32xbf16>
    %137 = vector.extract_strided_slice %29 {offsets = [0, 416], sizes = [16, 32], strides = [1, 1]} : vector<16x768xf32> to vector<16x32xf32>
    %138 = arith.truncf %137 : vector<16x32xf32> to vector<16x32xbf16>
    %139 = vector.extract_strided_slice %29 {offsets = [0, 672], sizes = [16, 32], strides = [1, 1]} : vector<16x768xf32> to vector<16x32xf32>
    %140 = arith.truncf %139 : vector<16x32xf32> to vector<16x32xbf16>
    %cst_40 = arith.constant dense<0.000000e+00> : vector<16x16xf32>
    %141 = tpu.matmul %136, %138, %cst_40 {dimension_numbers = #tpu.dot_dimension_numbers<[1], [1], [0], [0], [0, 0, 1, 0], [], []>} : vector<16x32xbf16>, vector<16x32xbf16>, vector<16x16xf32> -> vector<16x16xf32>
    %cst_41 = arith.constant 0.176776692 : f32
    %142 = vector.broadcast %cst_41 : f32 to vector<16x16xf32>
    %143 = arith.mulf %141, %142 : vector<16x16xf32>
    %cst_42 = arith.constant dense<0xFF800000> : vector<16xf32>
    %144 = vector.multi_reduction <maximumf>, %143, %cst_42 [1] : vector<16x16xf32> to vector<16xf32>
    %145 = vector.shape_cast %144 : vector<16xf32> to vector<16x1xf32>
    %146 = vector.broadcast %145 : vector<16x1xf32> to vector<16x16xf32>
    %147 = arith.subf %143, %146 : vector<16x16xf32>
    %148 = math.exp %147 : vector<16x16xf32>
    %cst_43 = arith.constant dense<0.000000e+00> : vector<16xf32>
    %149 = vector.multi_reduction <add>, %148, %cst_43 [1] : vector<16x16xf32> to vector<16xf32>
    %150 = vector.shape_cast %149 : vector<16xf32> to vector<16x1xf32>
    %151 = tpu.reciprocal %150 {approx = true} : vector<16x1xf32> -> vector<16x1xf32>
    %152 = vector.broadcast %151 : vector<16x1xf32> to vector<16x16xf32>
    %153 = arith.mulf %148, %152 : vector<16x16xf32>
    %154 = arith.truncf %153 : vector<16x16xf32> to vector<16x16xbf16>
    %cst_44 = arith.constant dense<0.000000e+00> : vector<16x32xf32>
    %155 = tpu.matmul %154, %140, %cst_44 {dimension_numbers = #tpu.dot_dimension_numbers<[1], [0], [0], [1], [0, 0, 1, 1], [], []>} : vector<16x16xbf16>, vector<16x32xbf16>, vector<16x32xf32> -> vector<16x32xf32>
    %156 = vector.extract_strided_slice %29 {offsets = [0, 192], sizes = [16, 32], strides = [1, 1]} : vector<16x768xf32> to vector<16x32xf32>
    %157 = arith.truncf %156 : vector<16x32xf32> to vector<16x32xbf16>
    %158 = vector.extract_strided_slice %29 {offsets = [0, 448], sizes = [16, 32], strides = [1, 1]} : vector<16x768xf32> to vector<16x32xf32>
    %159 = arith.truncf %158 : vector<16x32xf32> to vector<16x32xbf16>
    %160 = vector.extract_strided_slice %29 {offsets = [0, 704], sizes = [16, 32], strides = [1, 1]} : vector<16x768xf32> to vector<16x32xf32>
    %161 = arith.truncf %160 : vector<16x32xf32> to vector<16x32xbf16>
    %cst_45 = arith.constant dense<0.000000e+00> : vector<16x16xf32>
    %162 = tpu.matmul %157, %159, %cst_45 {dimension_numbers = #tpu.dot_dimension_numbers<[1], [1], [0], [0], [0, 0, 1, 0], [], []>} : vector<16x32xbf16>, vector<16x32xbf16>, vector<16x16xf32> -> vector<16x16xf32>
    %cst_46 = arith.constant 0.176776692 : f32
    %163 = vector.broadcast %cst_46 : f32 to vector<16x16xf32>
    %164 = arith.mulf %162, %163 : vector<16x16xf32>
    %cst_47 = arith.constant dense<0xFF800000> : vector<16xf32>
    %165 = vector.multi_reduction <maximumf>, %164, %cst_47 [1] : vector<16x16xf32> to vector<16xf32>
    %166 = vector.shape_cast %165 : vector<16xf32> to vector<16x1xf32>
    %167 = vector.broadcast %166 : vector<16x1xf32> to vector<16x16xf32>
    %168 = arith.subf %164, %167 : vector<16x16xf32>
    %169 = math.exp %168 : vector<16x16xf32>
    %cst_48 = arith.constant dense<0.000000e+00> : vector<16xf32>
    %170 = vector.multi_reduction <add>, %169, %cst_48 [1] : vector<16x16xf32> to vector<16xf32>
    %171 = vector.shape_cast %170 : vector<16xf32> to vector<16x1xf32>
    %172 = tpu.reciprocal %171 {approx = true} : vector<16x1xf32> -> vector<16x1xf32>
    %173 = vector.broadcast %172 : vector<16x1xf32> to vector<16x16xf32>
    %174 = arith.mulf %169, %173 : vector<16x16xf32>
    %175 = arith.truncf %174 : vector<16x16xf32> to vector<16x16xbf16>
    %cst_49 = arith.constant dense<0.000000e+00> : vector<16x32xf32>
    %176 = tpu.matmul %175, %161, %cst_49 {dimension_numbers = #tpu.dot_dimension_numbers<[1], [0], [0], [1], [0, 0, 1, 1], [], []>} : vector<16x16xbf16>, vector<16x32xbf16>, vector<16x32xf32> -> vector<16x32xf32>
    %177 = vector.extract_strided_slice %29 {offsets = [0, 224], sizes = [16, 32], strides = [1, 1]} : vector<16x768xf32> to vector<16x32xf32>
    %178 = arith.truncf %177 : vector<16x32xf32> to vector<16x32xbf16>
    %179 = vector.extract_strided_slice %29 {offsets = [0, 480], sizes = [16, 32], strides = [1, 1]} : vector<16x768xf32> to vector<16x32xf32>
    %180 = arith.truncf %179 : vector<16x32xf32> to vector<16x32xbf16>
    %181 = vector.extract_strided_slice %29 {offsets = [0, 736], sizes = [16, 32], strides = [1, 1]} : vector<16x768xf32> to vector<16x32xf32>
    %182 = arith.truncf %181 : vector<16x32xf32> to vector<16x32xbf16>
    %cst_50 = arith.constant dense<0.000000e+00> : vector<16x16xf32>
    %183 = tpu.matmul %178, %180, %cst_50 {dimension_numbers = #tpu.dot_dimension_numbers<[1], [1], [0], [0], [0, 0, 1, 0], [], []>} : vector<16x32xbf16>, vector<16x32xbf16>, vector<16x16xf32> -> vector<16x16xf32>
    %cst_51 = arith.constant 0.176776692 : f32
    %184 = vector.broadcast %cst_51 : f32 to vector<16x16xf32>
    %185 = arith.mulf %183, %184 : vector<16x16xf32>
    %cst_52 = arith.constant dense<0xFF800000> : vector<16xf32>
    %186 = vector.multi_reduction <maximumf>, %185, %cst_52 [1] : vector<16x16xf32> to vector<16xf32>
    %187 = vector.shape_cast %186 : vector<16xf32> to vector<16x1xf32>
    %188 = vector.broadcast %187 : vector<16x1xf32> to vector<16x16xf32>
    %189 = arith.subf %185, %188 : vector<16x16xf32>
    %190 = math.exp %189 : vector<16x16xf32>
    %cst_53 = arith.constant dense<0.000000e+00> : vector<16xf32>
    %191 = vector.multi_reduction <add>, %190, %cst_53 [1] : vector<16x16xf32> to vector<16xf32>
    %192 = vector.shape_cast %191 : vector<16xf32> to vector<16x1xf32>
    %193 = tpu.reciprocal %192 {approx = true} : vector<16x1xf32> -> vector<16x1xf32>
    %194 = vector.broadcast %193 : vector<16x1xf32> to vector<16x16xf32>
    %195 = arith.mulf %190, %194 : vector<16x16xf32>
    %196 = arith.truncf %195 : vector<16x16xf32> to vector<16x16xbf16>
    %cst_54 = arith.constant dense<0.000000e+00> : vector<16x32xf32>
    %197 = tpu.matmul %196, %182, %cst_54 {dimension_numbers = #tpu.dot_dimension_numbers<[1], [0], [0], [1], [0, 0, 1, 1], [], []>} : vector<16x16xbf16>, vector<16x32xbf16>, vector<16x32xf32> -> vector<16x32xf32>
    %198 = tpu.concatenate %50, %71, %92, %113, %134, %155, %176, %197 in 1 : vector<16x32xf32>, vector<16x32xf32>, vector<16x32xf32>, vector<16x32xf32>, vector<16x32xf32>, vector<16x32xf32>, vector<16x32xf32>, vector<16x32xf32> -> vector<16x256xf32>
    %199 = arith.truncf %198 : vector<16x256xf32> to vector<16x256xbf16>
    %c0_55 = arith.constant 0 : index
    %c0_56 = arith.constant 0 : index
    %200 = vector.load %arg6[%c0_55, %c0_56] : memref<256x256xbf16, #tpu.memory_space<vmem>>, vector<256x256xbf16>
    %cst_57 = arith.constant dense<0.000000e+00> : vector<16x256xf32>
    %201 = tpu.matmul %199, %200, %cst_57 {dimension_numbers = #tpu.dot_dimension_numbers<[1], [0], [0], [1], [0, 0, 1, 1], [], []>} : vector<16x256xbf16>, vector<256x256xbf16>, vector<16x256xf32> -> vector<16x256xf32>
    %c0_58 = arith.constant 0 : index
    %c0_59 = arith.constant 0 : index
    %202 = vector.load %arg7[%c0_58, %c0_59] : memref<1x256xf32, #tpu.memory_space<vmem>>, vector<1x256xf32>
    %203 = vector.broadcast %202 : vector<1x256xf32> to vector<16x256xf32>
    %204 = arith.addf %201, %203 : vector<16x256xf32>
    %205 = arith.addf %204, %1 : vector<16x256xf32>
    %c0_60 = arith.constant 0 : index
    %c0_61 = arith.constant 0 : index
    %206 = vector.load %arg8[%c0_60, %c0_61] : memref<1x256xf32, #tpu.memory_space<vmem>>, vector<1x256xf32>
    %c0_62 = arith.constant 0 : index
    %c0_63 = arith.constant 0 : index
    %207 = vector.load %arg9[%c0_62, %c0_63] : memref<1x256xf32, #tpu.memory_space<vmem>>, vector<1x256xf32>
    %cst_64 = arith.constant dense<0.000000e+00> : vector<16xf32>
    %208 = vector.multi_reduction <add>, %205, %cst_64 [1] : vector<16x256xf32> to vector<16xf32>
    %209 = vector.shape_cast %208 : vector<16xf32> to vector<16x1xf32>
    %cst_65 = arith.constant 2.560000e+02 : f32
    %210 = vector.broadcast %cst_65 : f32 to vector<16x1xf32>
    %211 = arith.divf %209, %210 : vector<16x1xf32>
    %212 = vector.broadcast %211 : vector<16x1xf32> to vector<16x256xf32>
    %213 = arith.subf %205, %212 : vector<16x256xf32>
    %214 = arith.mulf %213, %213 : vector<16x256xf32>
    %cst_66 = arith.constant dense<0.000000e+00> : vector<16xf32>
    %215 = vector.multi_reduction <add>, %214, %cst_66 [1] : vector<16x256xf32> to vector<16xf32>
    %216 = vector.shape_cast %215 : vector<16xf32> to vector<16x1xf32>
    %cst_67 = arith.constant 2.560000e+02 : f32
    %217 = vector.broadcast %cst_67 : f32 to vector<16x1xf32>
    %218 = arith.divf %216, %217 : vector<16x1xf32>
    %cst_68 = arith.constant 9.99999974E-6 : f32
    %219 = vector.broadcast %cst_68 : f32 to vector<16x1xf32>
    %220 = arith.addf %218, %219 : vector<16x1xf32>
    %221 = math.rsqrt %220 : vector<16x1xf32>
    %222 = vector.broadcast %221 : vector<16x1xf32> to vector<16x256xf32>
    %223 = arith.mulf %213, %222 : vector<16x256xf32>
    %224 = vector.broadcast %206 : vector<1x256xf32> to vector<16x256xf32>
    %225 = arith.mulf %223, %224 : vector<16x256xf32>
    %226 = vector.broadcast %207 : vector<1x256xf32> to vector<16x256xf32>
    %227 = arith.addf %225, %226 : vector<16x256xf32>
    %228 = arith.truncf %227 : vector<16x256xf32> to vector<16x256xbf16>
    %c0_69 = arith.constant 0 : index
    %c0_70 = arith.constant 0 : index
    %229 = vector.load %arg10[%c0_69, %c0_70] : memref<256x1024xbf16, #tpu.memory_space<vmem>>, vector<256x1024xbf16>
    %cst_71 = arith.constant dense<0.000000e+00> : vector<16x1024xf32>
    %230 = tpu.matmul %228, %229, %cst_71 {dimension_numbers = #tpu.dot_dimension_numbers<[1], [0], [0], [1], [0, 0, 1, 1], [], []>} : vector<16x256xbf16>, vector<256x1024xbf16>, vector<16x1024xf32> -> vector<16x1024xf32>
    %c0_72 = arith.constant 0 : index
    %c0_73 = arith.constant 0 : index
    %231 = vector.load %arg11[%c0_72, %c0_73] : memref<1x1024xf32, #tpu.memory_space<vmem>>, vector<1x1024xf32>
    %232 = vector.broadcast %231 : vector<1x1024xf32> to vector<16x1024xf32>
    %233 = arith.addf %230, %232 : vector<16x1024xf32>
    %cst_74 = arith.constant 5.000000e-01 : f32
    %234 = vector.broadcast %cst_74 : f32 to vector<16x1024xf32>
    %235 = arith.mulf %234, %233 : vector<16x1024xf32>
    %cst_75 = arith.constant 0.707106769 : f32
    %236 = vector.broadcast %cst_75 : f32 to vector<16x1024xf32>
    %237 = arith.mulf %233, %236 : vector<16x1024xf32>
    %238 = math.absf %237 : vector<16x1024xf32>
    %cst_76 = arith.constant 0.327591091 : f32
    %239 = vector.broadcast %cst_76 : f32 to vector<16x1024xf32>
    %240 = arith.mulf %239, %238 : vector<16x1024xf32>
    %cst_77 = arith.constant 1.000000e+00 : f32
    %241 = vector.broadcast %cst_77 : f32 to vector<16x1024xf32>
    %242 = arith.addf %241, %240 : vector<16x1024xf32>
    %cst_78 = arith.constant 1.000000e+00 : f32
    %243 = vector.broadcast %cst_78 : f32 to vector<16x1024xf32>
    %244 = arith.divf %243, %242 : vector<16x1024xf32>
    %cst_79 = arith.constant 1.06140542 : f32
    %245 = vector.broadcast %cst_79 : f32 to vector<16x1024xf32>
    %246 = arith.mulf %245, %244 : vector<16x1024xf32>
    %cst_80 = arith.constant -1.45315206 : f32
    %247 = vector.broadcast %cst_80 : f32 to vector<16x1024xf32>
    %248 = arith.addf %246, %247 : vector<16x1024xf32>
    %249 = arith.mulf %248, %244 : vector<16x1024xf32>
    %cst_81 = arith.constant 1.42141378 : f32
    %250 = vector.broadcast %cst_81 : f32 to vector<16x1024xf32>
    %251 = arith.addf %249, %250 : vector<16x1024xf32>
    %252 = arith.mulf %251, %244 : vector<16x1024xf32>
    %cst_82 = arith.constant -0.284496725 : f32
    %253 = vector.broadcast %cst_82 : f32 to vector<16x1024xf32>
    %254 = arith.addf %252, %253 : vector<16x1024xf32>
    %255 = arith.mulf %254, %244 : vector<16x1024xf32>
    %cst_83 = arith.constant 0.254829586 : f32
    %256 = vector.broadcast %cst_83 : f32 to vector<16x1024xf32>
    %257 = arith.addf %255, %256 : vector<16x1024xf32>
    %258 = arith.mulf %257, %244 : vector<16x1024xf32>
    %259 = arith.mulf %238, %238 : vector<16x1024xf32>
    %cst_84 = arith.constant 0.000000e+00 : f32
    %260 = vector.broadcast %cst_84 : f32 to vector<16x1024xf32>
    %261 = arith.subf %260, %259 : vector<16x1024xf32>
    %262 = math.exp %261 : vector<16x1024xf32>
    %263 = arith.mulf %258, %262 : vector<16x1024xf32>
    %cst_85 = arith.constant 1.000000e+00 : f32
    %264 = vector.broadcast %cst_85 : f32 to vector<16x1024xf32>
    %265 = arith.subf %264, %263 : vector<16x1024xf32>
    %cst_86 = arith.constant 0.000000e+00 : f32
    %266 = vector.broadcast %cst_86 : f32 to vector<16x1024xf32>
    %267 = arith.cmpf oge, %237, %266 : vector<16x1024xf32>
    %cst_87 = arith.constant 0.000000e+00 : f32
    %268 = vector.broadcast %cst_87 : f32 to vector<16x1024xf32>
    %269 = arith.subf %268, %265 : vector<16x1024xf32>
    %270 = arith.select %267, %265, %269 : vector<16x1024xi1>, vector<16x1024xf32>
    %cst_88 = arith.constant 1.000000e+00 : f32
    %271 = vector.broadcast %cst_88 : f32 to vector<16x1024xf32>
    %272 = arith.addf %271, %270 : vector<16x1024xf32>
    %273 = arith.mulf %235, %272 : vector<16x1024xf32>
    %274 = arith.truncf %273 : vector<16x1024xf32> to vector<16x1024xbf16>
    %c0_89 = arith.constant 0 : index
    %c0_90 = arith.constant 0 : index
    %275 = vector.load %arg12[%c0_89, %c0_90] : memref<1024x256xbf16, #tpu.memory_space<vmem>>, vector<1024x256xbf16>
    %cst_91 = arith.constant dense<0.000000e+00> : vector<16x256xf32>
    %276 = tpu.matmul %274, %275, %cst_91 {dimension_numbers = #tpu.dot_dimension_numbers<[1], [0], [0], [1], [0, 0, 1, 1], [], []>} : vector<16x1024xbf16>, vector<1024x256xbf16>, vector<16x256xf32> -> vector<16x256xf32>
    %c0_92 = arith.constant 0 : index
    %c0_93 = arith.constant 0 : index
    %277 = vector.load %arg13[%c0_92, %c0_93] : memref<1x256xf32, #tpu.memory_space<vmem>>, vector<1x256xf32>
    %278 = vector.broadcast %277 : vector<1x256xf32> to vector<16x256xf32>
    %279 = arith.addf %276, %278 : vector<16x256xf32>
    %280 = arith.addf %279, %205 : vector<16x256xf32>
    %c0_94 = arith.constant 0 : index
    %c0_95 = arith.constant 0 : index
    %c0_96 = arith.constant 0 : index
    %281 = vector.load %arg14[%c0_94, %c0_95, %c0_96] : memref<1x16x256xf32, #tpu.memory_space<vmem>>, vector<1x16x256xf32>
    %282 = vector.shape_cast %281 : vector<1x16x256xf32> to vector<16x256xf32>
    %283 = vector.shape_cast %280 : vector<16x256xf32> to vector<1x16x256xf32>
    tpu.vector_store %arg14[%c0_94, %c0_95, %c0_96], %283 {strides = array<i32>} : memref<1x16x256xf32, #tpu.memory_space<vmem>>, vector<1x16x256xf32>,
    return
  }
  func.func @transform_0(%arg0: i32) -> (i32, i32, i32) {
    %c0_i32 = arith.constant 0 : i32
    %c0_i32_0 = arith.constant 0 : i32
    %c0_i32_1 = arith.constant 0 : i32
    return %arg0, %c0_i32, %c0_i32_0 : i32, i32, i32
  }
  func.func @transform_1(%arg0: i32) -> (i32, i32) {
    %c0_i32 = arith.constant 0 : i32
    %c0_i32_0 = arith.constant 0 : i32
    %c0_i32_1 = arith.constant 0 : i32
    return %c0_i32, %c0_i32_0 : i32, i32
  }
  func.func @transform_2(%arg0: i32) -> (i32, i32) {
    %c0_i32 = arith.constant 0 : i32
    %c0_i32_0 = arith.constant 0 : i32
    %c0_i32_1 = arith.constant 0 : i32
    return %c0_i32, %c0_i32_0 : i32, i32
  }
  func.func @transform_3(%arg0: i32) -> (i32, i32) {
    %c0_i32 = arith.constant 0 : i32
    %c0_i32_0 = arith.constant 0 : i32
    %c0_i32_1 = arith.constant 0 : i32
    return %c0_i32, %c0_i32_0 : i32, i32
  }
  func.func @transform_4(%arg0: i32) -> (i32, i32) {
    %c0_i32 = arith.constant 0 : i32
    %c0_i32_0 = arith.constant 0 : i32
    %c0_i32_1 = arith.constant 0 : i32
    return %c0_i32, %c0_i32_0 : i32, i32
  }
  func.func @transform_5(%arg0: i32) -> (i32, i32) {
    %c0_i32 = arith.constant 0 : i32
    %c0_i32_0 = arith.constant 0 : i32
    %c0_i32_1 = arith.constant 0 : i32
    return %c0_i32, %c0_i32_0 : i32, i32
  }
  func.func @transform_6(%arg0: i32) -> (i32, i32) {
    %c0_i32 = arith.constant 0 : i32
    %c0_i32_0 = arith.constant 0 : i32
    %c0_i32_1 = arith.constant 0 : i32
    return %c0_i32, %c0_i32_0 : i32, i32
  }
  func.func @transform_7(%arg0: i32) -> (i32, i32) {
    %c0_i32 = arith.constant 0 : i32
    %c0_i32_0 = arith.constant 0 : i32
    %c0_i32_1 = arith.constant 0 : i32
    return %c0_i32, %c0_i32_0 : i32, i32
  }
  func.func @transform_8(%arg0: i32) -> (i32, i32) {
    %c0_i32 = arith.constant 0 : i32
    %c0_i32_0 = arith.constant 0 : i32
    %c0_i32_1 = arith.constant 0 : i32
    return %c0_i32, %c0_i32_0 : i32, i32
  }
  func.func @transform_9(%arg0: i32) -> (i32, i32) {
    %c0_i32 = arith.constant 0 : i32
    %c0_i32_0 = arith.constant 0 : i32
    %c0_i32_1 = arith.constant 0 : i32
    return %c0_i32, %c0_i32_0 : i32, i32
  }
  func.func @transform_10(%arg0: i32) -> (i32, i32) {
    %c0_i32 = arith.constant 0 : i32
    %c0_i32_0 = arith.constant 0 : i32
    %c0_i32_1 = arith.constant 0 : i32
    return %c0_i32, %c0_i32_0 : i32, i32
  }
  func.func @transform_11(%arg0: i32) -> (i32, i32) {
    %c0_i32 = arith.constant 0 : i32
    %c0_i32_0 = arith.constant 0 : i32
    %c0_i32_1 = arith.constant 0 : i32
    return %c0_i32, %c0_i32_0 : i32, i32
  }
  func.func @transform_12(%arg0: i32) -> (i32, i32) {
    %c0_i32 = arith.constant 0 : i32
    %c0_i32_0 = arith.constant 0 : i32
    %c0_i32_1 = arith.constant 0 : i32
    return %c0_i32, %c0_i32_0 : i32, i32
  }
  func.func @transform_13(%arg0: i32) -> (i32, i32, i32) {
    %c0_i32 = arith.constant 0 : i32
    %c0_i32_0 = arith.constant 0 : i32
    %c0_i32_1 = arith.constant 0 : i32
    return %arg0, %c0_i32, %c0_i32_0 : i32, i32, i32
  }
}

</mosaic_0001>

<llo_original>
// kernel: transformer_block.1
$region0: #{transformer_block.1}
  #allocation0 [shape = 'u32[]', space=smem, size = 0x4, offset = 0x4, fixed_abs, tag = 'smem constant byte address 0x4 - core index']
  #allocation1 [shape = 'u32[144,128]{1,0:T(1,128)}', space=vmem, size = 0x12000, scoped, tag = 'internal scratch']
  %s0 = inlined_call_operand.vmem [shape: f32[2,16,256], index: 0, kind: input, shape index: {}]
  %s1 = inlined_call_operand.vmem [shape: f32[1,256], index: 1, kind: input, shape index: {}]
  %s2 = inlined_call_operand.vmem [shape: f32[1,256], index: 2, kind: input, shape index: {}]
  %s3 = inlined_call_operand.hbm [shape: bf16[256,768], index: 3, kind: input, shape index: {}]
  %s4 = inlined_call_operand.vmem [shape: f32[1,768], index: 4, kind: input, shape index: {}]
  %s5 = inlined_call_operand.hbm [shape: bf16[256,256], index: 5, kind: input, shape index: {}]
  %s6 = inlined_call_operand.vmem [shape: f32[1,256], index: 6, kind: input, shape index: {}]
  %s7 = inlined_call_operand.vmem [shape: f32[1,256], index: 7, kind: input, shape index: {}]
  %s8 = inlined_call_operand.vmem [shape: f32[1,256], index: 8, kind: input, shape index: {}]
  %s9 = inlined_call_operand.hbm [shape: bf16[256,1024], index: 9, kind: input, shape index: {}]
  %s10 = inlined_call_operand.vmem [shape: f32[1,1024], index: 10, kind: input, shape index: {}]
  %s11 = inlined_call_operand.hbm [shape: bf16[1024,256], index: 11, kind: input, shape index: {}]
  %s12 = inlined_call_operand.vmem [shape: f32[1,256], index: 12, kind: input, shape index: {}]
  %s13 = inlined_call_operand.vmem [shape: f32[2,16,256], index: 13, kind: output, shape index: {}]
  %s14 = sld [smem:[#allocation0]]
  $region101: #{transformer_block.1} parent=0
    _
  %s16 = ssub.s32 1, %s14
  %s17 = scalar_select 0, %s16, %s14
  $region1: #{transformer_block.1} parent=0
    #allocation2 [shape = 'u8[393216]{0}', space=vmem, size = 0x60000, scoped, tag = 'input window, operand 3, single buffered']
    #allocation3 [shape = 's32[2]{0}', space=sflag, size = 0x8, scoped, tag = 'scoped memory for transformer_block.1']
    #allocation4 [shape = 'u8[131072]{0}', space=vmem, size = 0x20000, scoped, tag = 'input window, operand 5, single buffered']
    #allocation5 [shape = 's32[1]{0}', space=sflag, size = 0x4, scoped, tag = 'scoped memory for transformer_block.1']
    #allocation6 [shape = 'u8[524288]{0}', space=vmem, size = 0x80000, scoped, tag = 'input window, operand 9, single buffered']
    #allocation7 [shape = 'u8[524288]{0}', space=vmem, size = 0x80000, scoped, tag = 'input window, operand 11, single buffered']
    #allocation8 [shape = 's32[1]{0}', space=sflag, size = 0x4, scoped, tag = 'scoped memory for transformer_block.1']
    %18 = vsyncpa [#allocation3], 0
    %19 = vsyncpa [#allocation5], 0
    %20 = vsyncpa [#allocation8], 0
    loop: start=0, step=1, limit=4
    $region2: #{transformer_block.1} parent=1 // loop_pre_header
      _
    $region3: #{transformer_block.1} parent=1 // loop_header
      %s22 = sphi 0, %s26
      %p23 = scmp.ge.s32.totalorder %s22, 4
      %s32 = sphi 0, %s34
      %s35 = sphi 0, %s32
      %s36 = sphi 0, %s35
      %s52 = sphi 0, %s36
      %s56 = sphi 0, %s56
      %s58 = sphi 0, %s56
      %s59 = sphi 0, %s58
      %s73 = sphi 0, %s59
      %s77 = sphi 0, %s77
      %s79 = sphi 0, %s77
      %s80 = sphi 0, %s79
      %s94 = sphi 0, %s80
      %s98 = sphi 0, %s98
      %s100 = sphi 0, %s98
      %s101 = sphi 0, %s100
      %s115 = sphi 0, %s101
      %s119 = sphi 0, %s119
      %s121 = sphi 0, %s119
      %s122 = sphi 0, %s121
      %s136 = sphi 0, %s122
      %s140 = sphi 0, %s140
      %s142 = sphi 0, %s140
      %s143 = sphi 0, %s142
      %s157 = sphi 0, %s143
      %s161 = sphi 0, %s161
      %s163 = sphi 0, %s161
      %s164 = sphi 0, %s163
      %s178 = sphi 0, %s164
      %s182 = sphi 0, %s182
      %s184 = sphi 0, %s182
      %s185 = sphi 0, %s184
      %s199 = sphi 0, %s185
      %s203 = sphi 0, %s203
      %s205 = sphi 0, %s203
      %s206 = sphi 0, %s205
      %s220 = sphi 0, %s206
      %s224 = sphi 0, %s224
      %s226 = sphi 0, %s224
      %s227 = sphi 0, %s226
      %s241 = sphi 0, %s227
      %s245 = sphi 0, %s245
      %s247 = sphi 0, %s245
      %s248 = sphi 0, %s247
      %s262 = sphi 0, %s248
      %s266 = sphi 0, %s266
      %s268 = sphi 0, %s266
      %s269 = sphi 0, %s268
      %s283 = sphi 0, %s269
      %s287 = sphi 0, %s287
      %s289 = sphi 0, %s287
      %s290 = sphi 0, %s289
      %s304 = sphi 0, %s290
      %s310 = sphi 0, %s312
      %s313 = sphi 0, %s310
      %s314 = sphi 0, %s313
      %s330 = sphi 0, %s314
    $region4: #{transformer_block.1} parent=1 // loop_header_branch
      %25 = sbr.rel (%p23) target = $region8
    $region5: #{transformer_block.1} parent=1 // loop_body
      %s27 = ssub.s32 %s22, 1
      %s28 = ssub.s32 %s22, 2
      %s29 = sadd.s32 %s22, 1
      %s30 = ssub.s32 %s22, %s29
      %p31 = scmp.eq.s32.totalorder %s30, 0
      %s33 = sadd.s32 %s32, 1
      %s34 = scalar_select %p31, %s32, %s33
      %p37 = pneg %p31
      %p38 = scmp.eq.s32.totalorder %s22, 1
      %p39 = por %p37, %p38
      %p40 = scmp.ne.s32.totalorder %s32, %s35
      %p41 = scmp.eq.s32.totalorder %s22, 0
      %p42 = por %p40, %p41
      %p43 = scmp.ne.s32.totalorder %s32, %s35
      %p44 = scmp.eq.s32.totalorder %s27, 1
      %p45 = por %p43, %p44
      %p46 = scmp.ne.s32.totalorder %s35, %s36
      %p47 = scmp.eq.s32.totalorder %s27, 0
      %p48 = por %p46, %p47
      %p49 = scmp.ne.s32.totalorder %s35, %s36
      %p50 = scmp.eq.s32.totalorder %s28, 1
      %p51 = por %p49, %p50
      %p53 = scmp.ne.s32.totalorder %s36, %s52
      %p54 = scmp.eq.s32.totalorder %s28, 0
      %p55 = por %p53, %p54
      %s57 = sadd.s32 %s56, 1
      %p60 = scmp.eq.s32.totalorder %s22, 1
      %p61 = scmp.ne.s32.totalorder %s56, %s58
      %p62 = scmp.eq.s32.totalorder %s22, 0
      %p63 = por %p61, %p62
      %p64 = scmp.ne.s32.totalorder %s56, %s58
      %p65 = scmp.eq.s32.totalorder %s27, 1
      %p66 = por %p64, %p65
      %p67 = scmp.ne.s32.totalorder %s58, %s59
      %p68 = scmp.eq.s32.totalorder %s27, 0
      %p69 = por %p67, %p68
      %p70 = scmp.ne.s32.totalorder %s58, %s59
      %p71 = scmp.eq.s32.totalorder %s28, 1
      %p72 = por %p70, %p71
      %p74 = scmp.ne.s32.totalorder %s59, %s73
      %p75 = scmp.eq.s32.totalorder %s28, 0
      %p76 = por %p74, %p75
      %s78 = sadd.s32 %s77, 1
      %p81 = scmp.eq.s32.totalorder %s22, 1
      %p82 = scmp.ne.s32.totalorder %s77, %s79
      %p83 = scmp.eq.s32.totalorder %s22, 0
      %p84 = por %p82, %p83
      %p85 = scmp.ne.s32.totalorder %s77, %s79
      %p86 = scmp.eq.s32.totalorder %s27, 1
      %p87 = por %p85, %p86
      %p88 = scmp.ne.s32.totalorder %s79, %s80
      %p89 = scmp.eq.s32.totalorder %s27, 0
      %p90 = por %p88, %p89
      %p91 = scmp.ne.s32.totalorder %s79, %s80
      %p92 = scmp.eq.s32.totalorder %s28, 1
      %p93 = por %p91, %p92
      %p95 = scmp.ne.s32.totalorder %s80, %s94
      %p96 = scmp.eq.s32.totalorder %s28, 0
      %p97 = por %p95, %p96
      %s99 = sadd.s32 %s98, 1
      %p102 = scmp.eq.s32.totalorder %s22, 1
      %p103 = scmp.ne.s32.totalorder %s98, %s100
      %p104 = scmp.eq.s32.totalorder %s22, 0
      %p105 = por %p103, %p104
      %p106 = scmp.ne.s32.totalorder %s98, %s100
      %p107 = scmp.eq.s32.totalorder %s27, 1
      %p108 = por %p106, %p107
      %p109 = scmp.ne.s32.totalorder %s100, %s101
      %p110 = scmp.eq.s32.totalorder %s27, 0
      %p111 = por %p109, %p110
      %p112 = scmp.ne.s32.totalorder %s100, %s101
      %p113 = scmp.eq.s32.totalorder %s28, 1
      %p114 = por %p112, %p113
      %p116 = scmp.ne.s32.totalorder %s101, %s115
      %p117 = scmp.eq.s32.totalorder %s28, 0
      %p118 = por %p116, %p117
      %s120 = sadd.s32 %s119, 1
      %p123 = scmp.eq.s32.totalorder %s22, 1
      %p124 = scmp.ne.s32.totalorder %s119, %s121
      %p125 = scmp.eq.s32.totalorder %s22, 0
      %p126 = por %p124, %p125
      %p127 = scmp.ne.s32.totalorder %s119, %s121
      %p128 = scmp.eq.s32.totalorder %s27, 1
      %p129 = por %p127, %p128
      %p130 = scmp.ne.s32.totalorder %s121, %s122
      %p131 = scmp.eq.s32.totalorder %s27, 0
      %p132 = por %p130, %p131
      %p133 = scmp.ne.s32.totalorder %s121, %s122
      %p134 = scmp.eq.s32.totalorder %s28, 1
      %p135 = por %p133, %p134
      %p137 = scmp.ne.s32.totalorder %s122, %s136
      %p138 = scmp.eq.s32.totalorder %s28, 0
      %p139 = por %p137, %p138
      %s141 = sadd.s32 %s140, 1
      %p144 = scmp.eq.s32.totalorder %s22, 1
      %p145 = scmp.ne.s32.totalorder %s140, %s142
      %p146 = scmp.eq.s32.totalorder %s22, 0
      %p147 = por %p145, %p146
      %p148 = scmp.ne.s32.totalorder %s140, %s142
      %p149 = scmp.eq.s32.totalorder %s27, 1
      %p150 = por %p148, %p149
      %p151 = scmp.ne.s32.totalorder %s142, %s143
      %p152 = scmp.eq.s32.totalorder %s27, 0
      %p153 = por %p151, %p152
      %p154 = scmp.ne.s32.totalorder %s142, %s143
      %p155 = scmp.eq.s32.totalorder %s28, 1
      %p156 = por %p154, %p155
      %p158 = scmp.ne.s32.totalorder %s143, %s157
      %p159 = scmp.eq.s32.totalorder %s28, 0
      %p160 = por %p158, %p159
      %s162 = sadd.s32 %s161, 1
      %p165 = scmp.eq.s32.totalorder %s22, 1
      %p166 = scmp.ne.s32.totalorder %s161, %s163
      %p167 = scmp.eq.s32.totalorder %s22, 0
      %p168 = por %p166, %p167
      %p169 = scmp.ne.s32.totalorder %s161, %s163
      %p170 = scmp.eq.s32.totalorder %s27, 1
      %p171 = por %p169, %p170
      %p172 = scmp.ne.s32.totalorder %s163, %s164
      %p173 = scmp.eq.s32.totalorder %s27, 0
      %p174 = por %p172, %p173
      %p175 = scmp.ne.s32.totalorder %s163, %s164
      %p176 = scmp.eq.s32.totalorder %s28, 1
      %p177 = por %p175, %p176
      %p179 = scmp.ne.s32.totalorder %s164, %s178
      %p180 = scmp.eq.s32.totalorder %s28, 0
      %p181 = por %p179, %p180
      %s183 = sadd.s32 %s182, 1
      %p186 = scmp.eq.s32.totalorder %s22, 1
      %p187 = scmp.ne.s32.totalorder %s182, %s184
      %p188 = scmp.eq.s32.totalorder %s22, 0
      %p189 = por %p187, %p188
      %p190 = scmp.ne.s32.totalorder %s182, %s184
      %p191 = scmp.eq.s32.totalorder %s27, 1
      %p192 = por %p190, %p191
      %p193 = scmp.ne.s32.totalorder %s184, %s185
      %p194 = scmp.eq.s32.totalorder %s27, 0
      %p195 = por %p193, %p194
      %p196 = scmp.ne.s32.totalorder %s184, %s185
      %p197 = scmp.eq.s32.totalorder %s28, 1
      %p198 = por %p196, %p197
      %p200 = scmp.ne.s32.totalorder %s185, %s199
      %p201 = scmp.eq.s32.totalorder %s28, 0
      %p202 = por %p200, %p201
      %s204 = sadd.s32 %s203, 1
      %p207 = scmp.eq.s32.totalorder %s22, 1
      %p208 = scmp.ne.s32.totalorder %s203, %s205
      %p209 = scmp.eq.s32.totalorder %s22, 0
      %p210 = por %p208, %p209
      %p211 = scmp.ne.s32.totalorder %s203, %s205
      %p212 = scmp.eq.s32.totalorder %s27, 1
      %p213 = por %p211, %p212
      %p214 = scmp.ne.s32.totalorder %s205, %s206
      %p215 = scmp.eq.s32.totalorder %s27, 0
      %p216 = por %p214, %p215
      %p217 = scmp.ne.s32.totalorder %s205, %s206
      %p218 = scmp.eq.s32.totalorder %s28, 1
      %p219 = por %p217, %p218
      %p221 = scmp.ne.s32.totalorder %s206, %s220
      %p222 = scmp.eq.s32.totalorder %s28, 0
      %p223 = por %p221, %p222
      %s225 = sadd.s32 %s224, 1
      %p228 = scmp.eq.s32.totalorder %s22, 1
      %p229 = scmp.ne.s32.totalorder %s224, %s226
      %p230 = scmp.eq.s32.totalorder %s22, 0
      %p231 = por %p229, %p230
      %p232 = scmp.ne.s32.totalorder %s224, %s226
      %p233 = scmp.eq.s32.totalorder %s27, 1
      %p234 = por %p232, %p233
      %p235 = scmp.ne.s32.totalorder %s226, %s227
      %p236 = scmp.eq.s32.totalorder %s27, 0
      %p237 = por %p235, %p236
      %p238 = scmp.ne.s32.totalorder %s226, %s227
      %p239 = scmp.eq.s32.totalorder %s28, 1
      %p240 = por %p238, %p239
      %p242 = scmp.ne.s32.totalorder %s227, %s241
      %p243 = scmp.eq.s32.totalorder %s28, 0
      %p244 = por %p242, %p243
      %s246 = sadd.s32 %s245, 1
      %p249 = scmp.eq.s32.totalorder %s22, 1
      %p250 = scmp.ne.s32.totalorder %s245, %s247
      %p251 = scmp.eq.s32.totalorder %s22, 0
      %p252 = por %p250, %p251
      %p253 = scmp.ne.s32.totalorder %s245, %s247
      %p254 = scmp.eq.s32.totalorder %s27, 1
      %p255 = por %p253, %p254
      %p256 = scmp.ne.s32.totalorder %s247, %s248
      %p257 = scmp.eq.s32.totalorder %s27, 0
      %p258 = por %p256, %p257
      %p259 = scmp.ne.s32.totalorder %s247, %s248
      %p260 = scmp.eq.s32.totalorder %s28, 1
      %p261 = por %p259, %p260
      %p263 = scmp.ne.s32.totalorder %s248, %s262
      %p264 = scmp.eq.s32.totalorder %s28, 0
      %p265 = por %p263, %p264
      %s267 = sadd.s32 %s266, 1
      %p270 = scmp.eq.s32.totalorder %s22, 1
      %p271 = scmp.ne.s32.totalorder %s266, %s268
      %p272 = scmp.eq.s32.totalorder %s22, 0
      %p273 = por %p271, %p272
      %p274 = scmp.ne.s32.totalorder %s266, %s268
      %p275 = scmp.eq.s32.totalorder %s27, 1
      %p276 = por %p274, %p275
      %p277 = scmp.ne.s32.totalorder %s268, %s269
      %p278 = scmp.eq.s32.totalorder %s27, 0
      %p279 = por %p277, %p278
      %p280 = scmp.ne.s32.totalorder %s268, %s269
      %p281 = scmp.eq.s32.totalorder %s28, 1
      %p282 = por %p280, %p281
      %p284 = scmp.ne.s32.totalorder %s269, %s283
      %p285 = scmp.eq.s32.totalorder %s28, 0
      %p286 = por %p284, %p285
      %s288 = sadd.s32 %s287, 1
      %p291 = scmp.eq.s32.totalorder %s22, 1
      %p292 = scmp.ne.s32.totalorder %s287, %s289
      %p293 = scmp.eq.s32.totalorder %s22, 0
      %p294 = por %p292, %p293
      %p295 = scmp.ne.s32.totalorder %s287, %s289
      %p296 = scmp.eq.s32.totalorder %s27, 1
      %p297 = por %p295, %p296
      %p298 = scmp.ne.s32.totalorder %s289, %s290
      %p299 = scmp.eq.s32.totalorder %s27, 0
      %p300 = por %p298, %p299
      %p301 = scmp.ne.s32.totalorder %s289, %s290
      %p302 = scmp.eq.s32.totalorder %s28, 1
      %p303 = por %p301, %p302
      %p305 = scmp.ne.s32.totalorder %s290, %s304
      %p306 = scmp.eq.s32.totalorder %s28, 0
      %p307 = por %p305, %p306
      %s308 = ssub.s32 %s22, %s29
      %p309 = scmp.eq.s32.totalorder %s308, 0
      %s311 = sadd.s32 %s310, 1
      %s312 = scalar_select %p309, %s310, %s311
      %p315 = pneg %p309
      %p316 = scmp.eq.s32.totalorder %s22, 1
      %p317 = por %p315, %p316
      %p318 = scmp.ne.s32.totalorder %s310, %s313
      %p319 = scmp.eq.s32.totalorder %s22, 0
      %p320 = por %p318, %p319
      %p321 = scmp.ne.s32.totalorder %s310, %s313
      %p322 = scmp.eq.s32.totalorder %s27, 1
      %p323 = por %p321, %p322
      %p324 = scmp.ne.s32.totalorder %s313, %s314
      %p325 = scmp.eq.s32.totalorder %s27, 0
      %p326 = por %p324, %p325
      %p327 = scmp.ne.s32.totalorder %s313, %s314
      %p328 = scmp.eq.s32.totalorder %s28, 1
      %p329 = por %p327, %p328
      %p331 = scmp.ne.s32.totalorder %s314, %s330
      %p332 = scmp.eq.s32.totalorder %s28, 0
      %p333 = por %p331, %p332
      %p334 = scmp.le.s32.totalorder 1, %s22
      %p335 = scmp.lt.s32.totalorder %s22, 3
      %p336 = pnand %p334, %p335
      %p337 = pneg %p336
      // Predicated region
      $region9: #{transformer_block.1} parent=5 // pred_check
        _
      $region10: #{transformer_block.1} parent=5 // pred_check_branch
        %339 = sbr.rel (%p336) target = $region12
      $region11: #{transformer_block.1} parent=5 // pred_region
        %s340 = ssub.s32 %s22, 1
        // Predicated region
        $region13: #{transformer_block.1} parent=11 // pred_check
          %p341 = pneg %p69
        $region14: #{transformer_block.1} parent=11 // pred_check_branch
          %343 = sbr.rel (%p341) target = $region16
        $region15: #{transformer_block.1} parent=11 // pred_region
          _
        $region16: #{transformer_block.1} parent=11 // pred_fallthru
          _
        // Predicated region
        $region17: #{transformer_block.1} parent=11 // pred_check
          %p344 = pneg %p90
        $region18: #{transformer_block.1} parent=11 // pred_check_branch
          %346 = sbr.rel (%p344) target = $region20
        $region19: #{transformer_block.1} parent=11 // pred_region
          _
        $region20: #{transformer_block.1} parent=11 // pred_fallthru
          _
        // Predicated region
        $region21: #{transformer_block.1} parent=11 // pred_check
          %p347 = pneg %p111
        $region22: #{transformer_block.1} parent=11 // pred_check_branch
          %349 = sbr.rel (%p347) target = $region24
        $region23: #{transformer_block.1} parent=11 // pred_region
          %s351 = ssub.s32 12288, 12288
          %352 = vsyncadd [#allocation3], %s351
          %s353 = sshll.u32 [#allocation2], 4
          %s354 = int_to_ptr.vmem [resolvable:$true] %s353
          %359 = dma.hbm_to_vmem [thread:$0]  %s3, 12288, %s354, [#allocation3], 384, 384, 24
        $region24: #{transformer_block.1} parent=11 // pred_fallthru
          _
        // Predicated region
        $region25: #{transformer_block.1} parent=11 // pred_check
          %p360 = pneg %p132
        $region26: #{transformer_block.1} parent=11 // pred_check_branch
          %362 = sbr.rel (%p360) target = $region28
        $region27: #{transformer_block.1} parent=11 // pred_region
          _
        $region28: #{transformer_block.1} parent=11 // pred_fallthru
          _
        // Predicated region
        $region29: #{transformer_block.1} parent=11 // pred_check
          %p363 = pneg %p153
        $region30: #{transformer_block.1} parent=11 // pred_check_branch
          %365 = sbr.rel (%p363) target = $region32
        $region31: #{transformer_block.1} parent=11 // pred_region
          %s367 = ssub.s32 4096, 4096
          %368 = vsyncadd [#allocation5], %s367
          %s369 = sshll.u32 [#allocation4], 4
          %s370 = int_to_ptr.vmem [resolvable:$true] %s369
          %375 = dma.hbm_to_vmem [thread:$0]  %s5, 4096, %s370, [#allocation5], 128, 128, 8
        $region32: #{transformer_block.1} parent=11 // pred_fallthru
          _
        // Predicated region
        $region33: #{transformer_block.1} parent=11 // pred_check
          %p376 = pneg %p174
        $region34: #{transformer_block.1} parent=11 // pred_check_branch
          %378 = sbr.rel (%p376) target = $region36
        $region35: #{transformer_block.1} parent=11 // pred_region
          _
        $region36: #{transformer_block.1} parent=11 // pred_fallthru
          _
        // Predicated region
        $region37: #{transformer_block.1} parent=11 // pred_check
          %p379 = pneg %p195
        $region38: #{transformer_block.1} parent=11 // pred_check_branch
          %381 = sbr.rel (%p379) target = $region40
        $region39: #{transformer_block.1} parent=11 // pred_region
          _
        $region40: #{transformer_block.1} parent=11 // pred_fallthru
          _
        // Predicated region
        $region41: #{transformer_block.1} parent=11 // pred_check
          %p382 = pneg %p216
        $region42: #{transformer_block.1} parent=11 // pred_check_branch
          %384 = sbr.rel (%p382) target = $region44
        $region43: #{transformer_block.1} parent=11 // pred_region
          _
        $region44: #{transformer_block.1} parent=11 // pred_fallthru
          _
        // Predicated region
        $region45: #{transformer_block.1} parent=11 // pred_check
          %p385 = pneg %p237
        $region46: #{transformer_block.1} parent=11 // pred_check_branch
          %387 = sbr.rel (%p385) target = $region48
        $region47: #{transformer_block.1} parent=11 // pred_region
          %s389 = ssub.s32 16384, 16384
          %390 = vsyncadd [#allocation5], %s389
          %s391 = sshll.u32 [#allocation6], 4
          %s392 = int_to_ptr.vmem [resolvable:$true] %s391
          %397 = dma.hbm_to_vmem [thread:$0]  %s9, 16384, %s392, [#allocation5], 512, 512, 32
        $region48: #{transformer_block.1} parent=11 // pred_fallthru
          _
        // Predicated region
        $region49: #{transformer_block.1} parent=11 // pred_check
          %p398 = pneg %p258
        $region50: #{transformer_block.1} parent=11 // pred_check_branch
          %400 = sbr.rel (%p398) target = $region52
        $region51: #{transformer_block.1} parent=11 // pred_region
          _
        $region52: #{transformer_block.1} parent=11 // pred_fallthru
          _
        // Predicated region
        $region53: #{transformer_block.1} parent=11 // pred_check
          %p401 = pneg %p279
        $region54: #{transformer_block.1} parent=11 // pred_check_branch
          %403 = sbr.rel (%p401) target = $region56
        $region55: #{transformer_block.1} parent=11 // pred_region
          %s405 = ssub.s32 16384, 16384
          %406 = vsyncadd [#allocation8], %s405
          %s407 = sshll.u32 [#allocation7], 4
          %s408 = int_to_ptr.vmem [resolvable:$true] %s407
          %413 = dma.hbm_to_vmem [thread:$0]  %s11, 16384, %s408, [#allocation8], 128, 128, 8
        $region56: #{transformer_block.1} parent=11 // pred_fallthru
          _
        // Predicated region
        $region57: #{transformer_block.1} parent=11 // pred_check
          %p414 = pneg %p300
        $region58: #{transformer_block.1} parent=11 // pred_check_branch
          %416 = sbr.rel (%p414) target = $region60
        $region59: #{transformer_block.1} parent=11 // pred_region
          _
        $region60: #{transformer_block.1} parent=11 // pred_fallthru
          _
      $region12: #{transformer_block.1} parent=5 // pred_fallthru
        _
      %p417 = scmp.lt.s32.totalorder %s22, 2
      // Predicated region
      $region61: #{transformer_block.1} parent=5 // pred_check
        %p418 = pneg %p417
      $region62: #{transformer_block.1} parent=5 // pred_check_branch
        %420 = sbr.rel (%p418) target = $region64
      $region63: #{transformer_block.1} parent=5 // pred_region
        // Predicated region
        $region65: #{transformer_block.1} parent=63 // pred_check
          %p421 = pneg %p42
        $region66: #{transformer_block.1} parent=63 // pred_check_branch
          %423 = sbr.rel (%p421) target = $region68
        $region67: #{transformer_block.1} parent=63 // pred_region
          %p424 = scmp.lt.s32.totalorder %s22, 1
          %s425 = scalar_select %p424, %s22, 1
          %s426 = smul.addr %s425, 4
          %s427 = smul.addr %s426, 8
          %s428 = scalar_lea.vmem %s0, %s427
        $region68: #{transformer_block.1} parent=63 // pred_fallthru
          _
      $region64: #{transformer_block.1} parent=5 // pred_fallthru
        _
      %p429 = scmp.le.s32.totalorder 1, %s22
      %p430 = scmp.lt.s32.totalorder %s22, 3
      %p431 = pnand %p429, %p430
      %p432 = pneg %p431
      // Predicated region
      $region69: #{transformer_block.1} parent=5 // pred_check
        _
      $region70: #{transformer_block.1} parent=5 // pred_check_branch
        %434 = sbr.rel (%p431) target = $region72
      $region71: #{transformer_block.1} parent=5 // pred_region
        %s435 = ssub.s32 %s22, 1
        // Predicated region
        $region73: #{transformer_block.1} parent=71 // pred_check
          %p436 = pneg %p111
        $region74: #{transformer_block.1} parent=71 // pred_check_branch
          %438 = sbr.rel (%p436) target = $region76
        $region75: #{transformer_block.1} parent=71 // pred_region
          %439 = dma.done [#allocation3], 12288
        $region76: #{transformer_block.1} parent=71 // pred_fallthru
          _
        // Predicated region
        $region77: #{transformer_block.1} parent=71 // pred_check
          %p440 = pneg %p153
        $region78: #{transformer_block.1} parent=71 // pred_check_branch
          %442 = sbr.rel (%p440) target = $region80
        $region79: #{transformer_block.1} parent=71 // pred_region
          %443 = dma.done [#allocation5], 4096
        $region80: #{transformer_block.1} parent=71 // pred_fallthru
          _
        // Predicated region
        $region81: #{transformer_block.1} parent=71 // pred_check
          %p444 = pneg %p237
        $region82: #{transformer_block.1} parent=71 // pred_check_branch
          %446 = sbr.rel (%p444) target = $region84
        $region83: #{transformer_block.1} parent=71 // pred_region
          %447 = dma.done [#allocation5], 16384
        $region84: #{transformer_block.1} parent=71 // pred_fallthru
          _
        // Predicated region
        $region85: #{transformer_block.1} parent=71 // pred_check
          %p448 = pneg %p279
        $region86: #{transformer_block.1} parent=71 // pred_check_branch
          %450 = sbr.rel (%p448) target = $region88
        $region87: #{transformer_block.1} parent=71 // pred_region
          %451 = dma.done [#allocation8], 16384
        $region88: #{transformer_block.1} parent=71 // pred_fallthru
          _
        %p452 = scmp.lt.s32.totalorder %s27, 1
        %s453 = scalar_select %p452, %s27, 1
        %s454 = smul.addr %s453, 4
        %s455 = smul.addr %s454, 8
        %s456 = scalar_lea.vmem %s0, %s455
        %p457 = pneg %p48
        %p458 = pneg %p45
        %p459 = pneg %p69
        %p460 = pneg %p66
        %p461 = pneg %p90
        %p462 = pneg %p87
        %p463 = pneg %p111
        %p464 = pneg %p108
        %p465 = pneg %p132
        %p466 = pneg %p129
        %p467 = pneg %p153
        %p468 = pneg %p150
        %p469 = pneg %p174
        %p470 = pneg %p171
        %p471 = pneg %p195
        %p472 = pneg %p192
        %p473 = pneg %p216
        %p474 = pneg %p213
        %p475 = pneg %p237
        %p476 = pneg %p234
        %p477 = pneg %p258
        %p478 = pneg %p255
        %p479 = pneg %p279
        %p480 = pneg %p276
        %p481 = pneg %p300
        %p482 = pneg %p297
        %p483 = pneg %p326
        %p484 = pneg %p323
        %p485 = scmp.lt.s32.totalorder %s27, 1
        %s486 = scalar_select %p485, %s27, 1
        %s487 = smul.addr %s486, 4
        %s488 = smul.addr %s487, 8
        %s489 = scalar_lea.vmem %s13, %s488
        %p490 = scmp.lt.s32.totalorder %s27, 1
        %s491 = scalar_select %p490, %s27, 1
        %s492 = smul.addr %s491, 4
        %s493 = smul.addr %s492, 8
        %s494 = scalar_lea.vmem %s0, %s493
        %p495 = scmp.lt.s32.totalorder %s27, 1
        %s496 = scalar_select %p495, %s27, 1
        %s497 = smul.addr %s496, 4
        %s498 = smul.addr %s497, 8
        %s499 = scalar_lea.vmem %s13, %s498
        %v501 = vld [vmem:[%s494] sm:$0xff]
        %v502 = vld [vmem:[%s494 + $0x8] sm:$0xff]
        %v503 = vld [vmem:[%s494 + $0x10] sm:$0xff]
        %v504 = vld [vmem:[%s494 + $0x18] sm:$0xff]
        %v505 = vld [vmem:[%s1] sm:$0x3]
        %v506 = vld [vmem:[%s2] sm:$0x3]
        %v507 = vadd.f32 %v501, %v502
        %508 = vadd.xlane.f32.xlu0 %v507
        %v509 = vpop.xlane.xlu0 %508
        %v510 = vadd.f32 %v503, %v504
        %511 = vadd.xlane.f32.xlu0 %v510
        %v512 = vpop.xlane.xlu0 %511
        %v513 = vrcp.pop 256.0
        %v514 = vmul.f32 %v509, %v513
        %v515 = vmul.f32 %v512, %v513
        %v516 = vsub.f32 %v501, %v514
        %v517 = vsub.f32 %v502, %v514
        %v518 = vsub.f32 %v503, %v515
        %v519 = vsub.f32 %v504, %v515
        %v520 = vmul.f32 %v516, %v516
        %v521 = vmul.f32 %v517, %v517
        %v522 = vmul.f32 %v518, %v518
        %v523 = vmul.f32 %v519, %v519
        %v524 = vadd.f32 %v520, %v521
        %525 = vadd.xlane.f32.xlu0 %v524
        %v526 = vpop.xlane.xlu0 %525
        %v527 = vadd.f32 %v522, %v523
        %528 = vadd.xlane.f32.xlu0 %v527
        %v529 = vpop.xlane.xlu0 %528
        %v530 = vmul.f32 %v526, %v513
        %v531 = vmul.f32 %v529, %v513
        %v532 = vadd.f32 %v530, 1e-05
        %v533 = vadd.f32 %v531, 1e-05
        %v534 = vrsqrt.pop %v532
        %v535 = vrsqrt.pop %v533
        %v536 = vmul.f32 %v516, %v534
        %v537 = vmul.f32 %v517, %v534
        %v538 = vmul.f32 %v518, %v535
        %v539 = vmul.f32 %v519, %v535
        %v541 = vlaneseq
        %v542 = vshrl.u32 %v541, 7
        %v543 = vsub.s32 0, %v542
        %v544 = vrot.slane %v505, %v543
        %v545 = vlaneseq
        %v546 = vshrl.u32 %v545, 7
        %v547 = vsub.s32 1, %v546
        %v548 = vrot.slane %v505, %v547
        %v551 = vmul.f32 %v536, %v544
        %v552 = vmul.f32 %v537, %v548
        %v553 = vmul.f32 %v538, %v544
        %v554 = vmul.f32 %v539, %v548
        %v556 = vlaneseq
        %v557 = vshrl.u32 %v556, 7
        %v558 = vsub.s32 0, %v557
        %v559 = vrot.slane %v506, %v558
        %v560 = vlaneseq
        %v561 = vshrl.u32 %v560, 7
        %v562 = vsub.s32 1, %v561
        %v563 = vrot.slane %v506, %v562
        %v566 = vadd.f32 %v551, %v559
        %v567 = vadd.f32 %v552, %v563
        %v568 = vadd.f32 %v553, %v559
        %v569 = vadd.f32 %v554, %v563
        %v570 = vpack.c.bf16 %v568, %v566
        %v571 = vpack.c.bf16 %v569, %v567
        %v572 = vld [vmem:[#allocation2] sm:$0xff]
        %v573 = vld [vmem:[#allocation2 + $0x8] sm:$0xff]
        %v574 = vld [vmem:[#allocation2 + $0x10] sm:$0xff]
        %v575 = vld [vmem:[#allocation2 + $0x18] sm:$0xff]
        %v576 = vld [vmem:[#allocation2 + $0x20] sm:$0xff]
        %v577 = vld [vmem:[#allocation2 + $0x28] sm:$0xff]
        %v578 = vld [vmem:[#allocation2 + $0x30] sm:$0xff]
        %v579 = vld [vmem:[#allocation2 + $0x38] sm:$0xff]
        %v580 = vld [vmem:[#allocation2 + $0x40] sm:$0xff]
        %v581 = vld [vmem:[#allocation2 + $0x48] sm:$0xff]
        %v582 = vld [vmem:[#allocation2 + $0x50] sm:$0xff]
        %v583 = vld [vmem:[#allocation2 + $0x58] sm:$0xff]
        %v584 = vld [vmem:[#allocation2 + $0x60] sm:$0xff]
        %v585 = vld [vmem:[#allocation2 + $0x68] sm:$0xff]
        %v586 = vld [vmem:[#allocation2 + $0x70] sm:$0xff]
        %v587 = vld [vmem:[#allocation2 + $0x78] sm:$0xff]
        %v588 = vld [vmem:[#allocation2 + $0x80] sm:$0xff]
        %v589 = vld [vmem:[#allocation2 + $0x88] sm:$0xff]
        %v590 = vld [vmem:[#allocation2 + $0x90] sm:$0xff]
        %v591 = vld [vmem:[#allocation2 + $0x98] sm:$0xff]
        %v592 = vld [vmem:[#allocation2 + $0xa0] sm:$0xff]
        %v593 = vld [vmem:[#allocation2 + $0xa8] sm:$0xff]
        %v594 = vld [vmem:[#allocation2 + $0xb0] sm:$0xff]
        %v595 = vld [vmem:[#allocation2 + $0xb8] sm:$0xff]
        %v596 = vld [vmem:[#allocation2 + $0xc0] sm:$0xff]
        %v597 = vld [vmem:[#allocation2 + $0xc8] sm:$0xff]
        %v598 = vld [vmem:[#allocation2 + $0xd0] sm:$0xff]
        %v599 = vld [vmem:[#allocation2 + $0xd8] sm:$0xff]
        %v600 = vld [vmem:[#allocation2 + $0xe0] sm:$0xff]
        %v601 = vld [vmem:[#allocation2 + $0xe8] sm:$0xff]
        %v602 = vld [vmem:[#allocation2 + $0xf0] sm:$0xff]
        %v603 = vld [vmem:[#allocation2 + $0xf8] sm:$0xff]
        %v604 = vld [vmem:[#allocation2 + $0x100] sm:$0xff]
        %v605 = vld [vmem:[#allocation2 + $0x108] sm:$0xff]
        %v606 = vld [vmem:[#allocation2 + $0x110] sm:$0xff]
        %v607 = vld [vmem:[#allocation2 + $0x118] sm:$0xff]
        %v608 = vld [vmem:[#allocation2 + $0x120] sm:$0xff]
        %v609 = vld [vmem:[#allocation2 + $0x128] sm:$0xff]
        %v610 = vld [vmem:[#allocation2 + $0x130] sm:$0xff]
        %v611 = vld [vmem:[#allocation2 + $0x138] sm:$0xff]
        %v612 = vld [vmem:[#allocation2 + $0x140] sm:$0xff]
        %v613 = vld [vmem:[#allocation2 + $0x148] sm:$0xff]
        %v614 = vld [vmem:[#allocation2 + $0x150] sm:$0xff]
        %v615 = vld [vmem:[#allocation2 + $0x158] sm:$0xff]
        %v616 = vld [vmem:[#allocation2 + $0x160] sm:$0xff]
        %v617 = vld [vmem:[#allocation2 + $0x168] sm:$0xff]
        %v618 = vld [vmem:[#allocation2 + $0x170] sm:$0xff]
        %v619 = vld [vmem:[#allocation2 + $0x178] sm:$0xff]
        %v620 = vld [vmem:[#allocation2 + $0x180] sm:$0xff]
        %v621 = vld [vmem:[#allocation2 + $0x188] sm:$0xff]
        %v622 = vld [vmem:[#allocation2 + $0x190] sm:$0xff]
        %v623 = vld [vmem:[#allocation2 + $0x198] sm:$0xff]
        %v624 = vld [vmem:[#allocation2 + $0x1a0] sm:$0xff]
        %v625 = vld [vmem:[#allocation2 + $0x1a8] sm:$0xff]
        %v626 = vld [vmem:[#allocation2 + $0x1b0] sm:$0xff]
        %v627 = vld [vmem:[#allocation2 + $0x1b8] sm:$0xff]
        %v628 = vld [vmem:[#allocation2 + $0x1c0] sm:$0xff]
        %v629 = vld [vmem:[#allocation2 + $0x1c8] sm:$0xff]
        %v630 = vld [vmem:[#allocation2 + $0x1d0] sm:$0xff]
        %v631 = vld [vmem:[#allocation2 + $0x1d8] sm:$0xff]
        %v632 = vld [vmem:[#allocation2 + $0x1e0] sm:$0xff]
        %v633 = vld [vmem:[#allocation2 + $0x1e8] sm:$0xff]
        %v634 = vld [vmem:[#allocation2 + $0x1f0] sm:$0xff]
        %v635 = vld [vmem:[#allocation2 + $0x1f8] sm:$0xff]
        %v636 = vld [vmem:[#allocation2 + $0x200] sm:$0xff]
        %v637 = vld [vmem:[#allocation2 + $0x208] sm:$0xff]
        %v638 = vld [vmem:[#allocation2 + $0x210] sm:$0xff]
        %v639 = vld [vmem:[#allocation2 + $0x218] sm:$0xff]
        %v640 = vld [vmem:[#allocation2 + $0x220] sm:$0xff]
        %v641 = vld [vmem:[#allocation2 + $0x228] sm:$0xff]
        %v642 = vld [vmem:[#allocation2 + $0x230] sm:$0xff]
        %v643 = vld [vmem:[#allocation2 + $0x238] sm:$0xff]
        %v644 = vld [vmem:[#allocation2 + $0x240] sm:$0xff]
        %v645 = vld [vmem:[#allocation2 + $0x248] sm:$0xff]
        %v646 = vld [vmem:[#allocation2 + $0x250] sm:$0xff]
        %v647 = vld [vmem:[#allocation2 + $0x258] sm:$0xff]
        %v648 = vld [vmem:[#allocation2 + $0x260] sm:$0xff]
        %v649 = vld [vmem:[#allocation2 + $0x268] sm:$0xff]
        %v650 = vld [vmem:[#allocation2 + $0x270] sm:$0xff]
        %v651 = vld [vmem:[#allocation2 + $0x278] sm:$0xff]
        %v652 = vld [vmem:[#allocation2 + $0x280] sm:$0xff]
        %v653 = vld [vmem:[#allocation2 + $0x288] sm:$0xff]
        %v654 = vld [vmem:[#allocation2 + $0x290] sm:$0xff]
        %v655 = vld [vmem:[#allocation2 + $0x298] sm:$0xff]
        %v656 = vld [vmem:[#allocation2 + $0x2a0] sm:$0xff]
        %v657 = vld [vmem:[#allocation2 + $0x2a8] sm:$0xff]
        %v658 = vld [vmem:[#allocation2 + $0x2b0] sm:$0xff]
        %v659 = vld [vmem:[#allocation2 + $0x2b8] sm:$0xff]
        %v660 = vld [vmem:[#allocation2 + $0x2c0] sm:$0xff]
        %v661 = vld [vmem:[#allocation2 + $0x2c8] sm:$0xff]
        %v662 = vld [vmem:[#allocation2 + $0x2d0] sm:$0xff]
        %v663 = vld [vmem:[#allocation2 + $0x2d8] sm:$0xff]
        %v664 = vld [vmem:[#allocation2 + $0x2e0] sm:$0xff]
        %v665 = vld [vmem:[#allocation2 + $0x2e8] sm:$0xff]
        %v666 = vld [vmem:[#allocation2 + $0x2f0] sm:$0xff]
        %v667 = vld [vmem:[#allocation2 + $0x2f8] sm:$0xff]
        %v668 = vld [vmem:[%s4] sm:$0x3f]
        %v670 = vlaneseq
        %v671 = vshrl.u32 %v670, 7
        %v672 = vsub.s32 0, %v671
        %v673 = vrot.slane %v668, %v672
        %v674 = vlaneseq
        %v675 = vshrl.u32 %v674, 7
        %v676 = vsub.s32 1, %v675
        %v677 = vrot.slane %v668, %v676
        %v678 = vlaneseq
        %v679 = vshrl.u32 %v678, 7
        %v680 = vsub.s32 2, %v679
        %v681 = vrot.slane %v668, %v680
        %v682 = vlaneseq
        %v683 = vshrl.u32 %v682, 7
        %v684 = vsub.s32 3, %v683
        %v685 = vrot.slane %v668, %v684
        %v686 = vlaneseq
        %v687 = vshrl.u32 %v686, 7
        %v688 = vsub.s32 4, %v687
        %v689 = vrot.slane %v668, %v688
        %v690 = vlaneseq
        %v691 = vshrl.u32 %v690, 7
        %v692 = vsub.s32 5, %v691
        %v693 = vrot.slane %v668, %v692
        %v796 = vunpack.c.l.b16 %v572
        %v797 = vunpack.c.h.b16 %v572
        %v798 = vunpack.c.l.b16 %v573
        %v799 = vunpack.c.h.b16 %v573
        %v800 = vunpack.c.l.b16 %v574
        %v801 = vunpack.c.h.b16 %v574
        %v802 = vunpack.c.l.b16 %v575
        %v803 = vunpack.c.h.b16 %v575
        %v804 = vunpack.c.l.b16 %v576
        %v805 = vunpack.c.h.b16 %v576
        %v806 = vunpack.c.l.b16 %v577
        %v807 = vunpack.c.h.b16 %v577
        %v808 = vunpack.c.l.b16 %v578
        %v809 = vunpack.c.h.b16 %v578
        %v810 = vunpack.c.l.b16 %v579
        %v811 = vunpack.c.h.b16 %v579
        %v812 = vunpack.c.l.b16 %v580
        %v813 = vunpack.c.h.b16 %v580
        %v814 = vunpack.c.l.b16 %v581
        %v815 = vunpack.c.h.b16 %v581
        %v816 = vunpack.c.l.b16 %v582
        %v817 = vunpack.c.h.b16 %v582
        %v818 = vunpack.c.l.b16 %v583
        %v819 = vunpack.c.h.b16 %v583
        %v820 = vunpack.c.l.b16 %v584
        %v821 = vunpack.c.h.b16 %v584
        %v822 = vunpack.c.l.b16 %v585
        %v823 = vunpack.c.h.b16 %v585
        %v824 = vunpack.c.l.b16 %v586
        %v825 = vunpack.c.h.b16 %v586
        %v826 = vunpack.c.l.b16 %v587
        %v827 = vunpack.c.h.b16 %v587
        %v828 = vunpack.c.l.b16 %v588
        %v829 = vunpack.c.h.b16 %v588
        %v830 = vunpack.c.l.b16 %v589
        %v831 = vunpack.c.h.b16 %v589
        %v832 = vunpack.c.l.b16 %v590
        %v833 = vunpack.c.h.b16 %v590
        %v834 = vunpack.c.l.b16 %v591
        %v835 = vunpack.c.h.b16 %v591
        %v836 = vunpack.c.l.b16 %v592
        %v837 = vunpack.c.h.b16 %v592
        %v838 = vunpack.c.l.b16 %v593
        %v839 = vunpack.c.h.b16 %v593
        %v840 = vunpack.c.l.b16 %v594
        %v841 = vunpack.c.h.b16 %v594
        %v842 = vunpack.c.l.b16 %v595
        %v843 = vunpack.c.h.b16 %v595
        %v844 = vunpack.c.l.b16 %v596
        %v845 = vunpack.c.h.b16 %v596
        %v846 = vunpack.c.l.b16 %v597
        %v847 = vunpack.c.h.b16 %v597
        %v848 = vunpack.c.l.b16 %v598
        %v849 = vunpack.c.h.b16 %v598
        %v850 = vunpack.c.l.b16 %v599
        %v851 = vunpack.c.h.b16 %v599
        %v852 = vunpack.c.l.b16 %v600
        %v853 = vunpack.c.h.b16 %v600
        %v854 = vunpack.c.l.b16 %v601
        %v855 = vunpack.c.h.b16 %v601
        %v856 = vunpack.c.l.b16 %v602
        %v857 = vunpack.c.h.b16 %v602
        %v858 = vunpack.c.l.b16 %v603
        %v859 = vunpack.c.h.b16 %v603
        %v860 = vunpack.c.l.b16 %v604
        %v861 = vunpack.c.h.b16 %v604
        %v862 = vunpack.c.l.b16 %v605
        %v863 = vunpack.c.h.b16 %v605
        %v864 = vunpack.c.l.b16 %v606
        %v865 = vunpack.c.h.b16 %v606
        %v866 = vunpack.c.l.b16 %v607
        %v867 = vunpack.c.h.b16 %v607
        %v868 = vunpack.c.l.b16 %v608
        %v869 = vunpack.c.h.b16 %v608
        %v870 = vunpack.c.l.b16 %v609
        %v871 = vunpack.c.h.b16 %v609
        %v872 = vunpack.c.l.b16 %v610
        %v873 = vunpack.c.h.b16 %v610
        %v874 = vunpack.c.l.b16 %v611
        %v875 = vunpack.c.h.b16 %v611
        %v876 = vunpack.c.l.b16 %v612
        %v877 = vunpack.c.h.b16 %v612
        %v878 = vunpack.c.l.b16 %v613
        %v879 = vunpack.c.h.b16 %v613
        %v880 = vunpack.c.l.b16 %v614
        %v881 = vunpack.c.h.b16 %v614
        %v882 = vunpack.c.l.b16 %v615
        %v883 = vunpack.c.h.b16 %v615
        %v884 = vunpack.c.l.b16 %v616
        %v885 = vunpack.c.h.b16 %v616
        %v886 = vunpack.c.l.b16 %v617
        %v887 = vunpack.c.h.b16 %v617
        %v888 = vunpack.c.l.b16 %v618
        %v889 = vunpack.c.h.b16 %v618
        %v890 = vunpack.c.l.b16 %v619
        %v891 = vunpack.c.h.b16 %v619
        %v892 = vunpack.c.l.b16 %v620
        %v893 = vunpack.c.h.b16 %v620
        %v894 = vunpack.c.l.b16 %v621
        %v895 = vunpack.c.h.b16 %v621
        %v896 = vunpack.c.l.b16 %v622
        %v897 = vunpack.c.h.b16 %v622
        %v898 = vunpack.c.l.b16 %v623
        %v899 = vunpack.c.h.b16 %v623
        %v900 = vunpack.c.l.b16 %v624
        %v901 = vunpack.c.h.b16 %v624
        %v902 = vunpack.c.l.b16 %v625
        %v903 = vunpack.c.h.b16 %v625
        %v904 = vunpack.c.l.b16 %v626
        %v905 = vunpack.c.h.b16 %v626
        %v906 = vunpack.c.l.b16 %v627
        %v907 = vunpack.c.h.b16 %v627
        %v908 = vunpack.c.l.b16 %v628
        %v909 = vunpack.c.h.b16 %v628
        %v910 = vunpack.c.l.b16 %v629
        %v911 = vunpack.c.h.b16 %v629
        %v912 = vunpack.c.l.b16 %v630
        %v913 = vunpack.c.h.b16 %v630
        %v914 = vunpack.c.l.b16 %v631
        %v915 = vunpack.c.h.b16 %v631
        %v916 = vunpack.c.l.b16 %v632
        %v917 = vunpack.c.h.b16 %v632
        %v918 = vunpack.c.l.b16 %v633
        %v919 = vunpack.c.h.b16 %v633
        %v920 = vunpack.c.l.b16 %v634
        %v921 = vunpack.c.h.b16 %v634
        %v922 = vunpack.c.l.b16 %v635
        %v923 = vunpack.c.h.b16 %v635
        %v924 = vunpack.c.l.b16 %v636
        %v925 = vunpack.c.h.b16 %v636
        %v926 = vunpack.c.l.b16 %v637
        %v927 = vunpack.c.h.b16 %v637
        %v928 = vunpack.c.l.b16 %v638
        %v929 = vunpack.c.h.b16 %v638
        %v930 = vunpack.c.l.b16 %v639
        %v931 = vunpack.c.h.b16 %v639
        %v932 = vunpack.c.l.b16 %v640
        %v933 = vunpack.c.h.b16 %v640
        %v934 = vunpack.c.l.b16 %v641
        %v935 = vunpack.c.h.b16 %v641
        %v936 = vunpack.c.l.b16 %v642
        %v937 = vunpack.c.h.b16 %v642
        %v938 = vunpack.c.l.b16 %v643
        %v939 = vunpack.c.h.b16 %v643
        %v940 = vunpack.c.l.b16 %v644
        %v941 = vunpack.c.h.b16 %v644
        %v942 = vunpack.c.l.b16 %v645
        %v943 = vunpack.c.h.b16 %v645
        %v944 = vunpack.c.l.b16 %v646
        %v945 = vunpack.c.h.b16 %v646
        %v946 = vunpack.c.l.b16 %v647
        %v947 = vunpack.c.h.b16 %v647
        %v948 = vunpack.c.l.b16 %v648
        %v949 = vunpack.c.h.b16 %v648
        %v950 = vunpack.c.l.b16 %v649
        %v951 = vunpack.c.h.b16 %v649
        %v952 = vunpack.c.l.b16 %v650
        %v953 = vunpack.c.h.b16 %v650
        %v954 = vunpack.c.l.b16 %v651
        %v955 = vunpack.c.h.b16 %v651
        %v956 = vunpack.c.l.b16 %v652
        %v957 = vunpack.c.h.b16 %v652
        %v958 = vunpack.c.l.b16 %v653
        %v959 = vunpack.c.h.b16 %v653
        %v960 = vunpack.c.l.b16 %v654
        %v961 = vunpack.c.h.b16 %v654
        %v962 = vunpack.c.l.b16 %v655
        %v963 = vunpack.c.h.b16 %v655
        %v964 = vunpack.c.l.b16 %v656
        %v965 = vunpack.c.h.b16 %v656
        %v966 = vunpack.c.l.b16 %v657
        %v967 = vunpack.c.h.b16 %v657
        %v968 = vunpack.c.l.b16 %v658
        %v969 = vunpack.c.h.b16 %v658
        %v970 = vunpack.c.l.b16 %v659
        %v971 = vunpack.c.h.b16 %v659
        %v972 = vunpack.c.l.b16 %v660
        %v973 = vunpack.c.h.b16 %v660
        %v974 = vunpack.c.l.b16 %v661
        %v975 = vunpack.c.h.b16 %v661
        %v976 = vunpack.c.l.b16 %v662
        %v977 = vunpack.c.h.b16 %v662
        %v978 = vunpack.c.l.b16 %v663
        %v979 = vunpack.c.h.b16 %v663
        %v980 = vunpack.c.l.b16 %v664
        %v981 = vunpack.c.h.b16 %v664
        %v982 = vunpack.c.l.b16 %v665
        %v983 = vunpack.c.h.b16 %v665
        %v984 = vunpack.c.l.b16 %v666
        %v985 = vunpack.c.h.b16 %v666
        %v986 = vunpack.c.l.b16 %v667
        %v987 = vunpack.c.h.b16 %v667
        %v988 = vpack.c.b16 %v802, %v796
        %v989 = vpack.c.b16 %v803, %v797
        %v990 = vpack.c.b16 %v804, %v798
        %v991 = vpack.c.b16 %v805, %v799
        %v992 = vpack.c.b16 %v806, %v800
        %v993 = vpack.c.b16 %v807, %v801
        %v994 = vpack.c.b16 %v814, %v808
        %v995 = vpack.c.b16 %v815, %v809
        %v996 = vpack.c.b16 %v816, %v810
        %v997 = vpack.c.b16 %v817, %v811
        %v998 = vpack.c.b16 %v818, %v812
        %v999 = vpack.c.b16 %v819, %v813
        %v1000 = vpack.c.b16 %v826, %v820
        %v1001 = vpack.c.b16 %v827, %v821
        %v1002 = vpack.c.b16 %v828, %v822
        %v1003 = vpack.c.b16 %v829, %v823
        %v1004 = vpack.c.b16 %v830, %v824
        %v1005 = vpack.c.b16 %v831, %v825
        %v1006 = vpack.c.b16 %v838, %v832
        %v1007 = vpack.c.b16 %v839, %v833
        %v1008 = vpack.c.b16 %v840, %v834
        %v1009 = vpack.c.b16 %v841, %v835
        %v1010 = vpack.c.b16 %v842, %v836
        %v1011 = vpack.c.b16 %v843, %v837
        %v1012 = vpack.c.b16 %v850, %v844
        %v1013 = vpack.c.b16 %v851, %v845
        %v1014 = vpack.c.b16 %v852, %v846
        %v1015 = vpack.c.b16 %v853, %v847
        %v1016 = vpack.c.b16 %v854, %v848
        %v1017 = vpack.c.b16 %v855, %v849
        %v1018 = vpack.c.b16 %v862, %v856
        %v1019 = vpack.c.b16 %v863, %v857
        %v1020 = vpack.c.b16 %v864, %v858
        %v1021 = vpack.c.b16 %v865, %v859
        %v1022 = vpack.c.b16 %v866, %v860
        %v1023 = vpack.c.b16 %v867, %v861
        %v1024 = vpack.c.b16 %v874, %v868
        %v1025 = vpack.c.b16 %v875, %v869
        %v1026 = vpack.c.b16 %v876, %v870
        %v1027 = vpack.c.b16 %v877, %v871
        %v1028 = vpack.c.b16 %v878, %v872
        %v1029 = vpack.c.b16 %v879, %v873
        %v1030 = vpack.c.b16 %v886, %v880
        %v1031 = vpack.c.b16 %v887, %v881
        %v1032 = vpack.c.b16 %v888, %v882
        %v1033 = vpack.c.b16 %v889, %v883
        %v1034 = vpack.c.b16 %v890, %v884
        %v1035 = vpack.c.b16 %v891, %v885
        %v1036 = vpack.c.b16 %v898, %v892
        %v1037 = vpack.c.b16 %v899, %v893
        %v1038 = vpack.c.b16 %v900, %v894
        %v1039 = vpack.c.b16 %v901, %v895
        %v1040 = vpack.c.b16 %v902, %v896
        %v1041 = vpack.c.b16 %v903, %v897
        %v1042 = vpack.c.b16 %v910, %v904
        %v1043 = vpack.c.b16 %v911, %v905
        %v1044 = vpack.c.b16 %v912, %v906
        %v1045 = vpack.c.b16 %v913, %v907
        %v1046 = vpack.c.b16 %v914, %v908
        %v1047 = vpack.c.b16 %v915, %v909
        %v1048 = vpack.c.b16 %v922, %v916
        %v1049 = vpack.c.b16 %v923, %v917
        %v1050 = vpack.c.b16 %v924, %v918
        %v1051 = vpack.c.b16 %v925, %v919
        %v1052 = vpack.c.b16 %v926, %v920
        %v1053 = vpack.c.b16 %v927, %v921
        %v1054 = vpack.c.b16 %v934, %v928
        %v1055 = vpack.c.b16 %v935, %v929
        %v1056 = vpack.c.b16 %v936, %v930
        %v1057 = vpack.c.b16 %v937, %v931
        %v1058 = vpack.c.b16 %v938, %v932
        %v1059 = vpack.c.b16 %v939, %v933
        %v1060 = vpack.c.b16 %v946, %v940
        %v1061 = vpack.c.b16 %v947, %v941
        %v1062 = vpack.c.b16 %v948, %v942
        %v1063 = vpack.c.b16 %v949, %v943
        %v1064 = vpack.c.b16 %v950, %v944
        %v1065 = vpack.c.b16 %v951, %v945
        %v1066 = vpack.c.b16 %v958, %v952
        %v1067 = vpack.c.b16 %v959, %v953
        %v1068 = vpack.c.b16 %v960, %v954
        %v1069 = vpack.c.b16 %v961, %v955
        %v1070 = vpack.c.b16 %v962, %v956
        %v1071 = vpack.c.b16 %v963, %v957
        %v1072 = vpack.c.b16 %v970, %v964
        %v1073 = vpack.c.b16 %v971, %v965
        %v1074 = vpack.c.b16 %v972, %v966
        %v1075 = vpack.c.b16 %v973, %v967
        %v1076 = vpack.c.b16 %v974, %v968
        %v1077 = vpack.c.b16 %v975, %v969
        %v1078 = vpack.c.b16 %v982, %v976
        %v1079 = vpack.c.b16 %v983, %v977
        %v1080 = vpack.c.b16 %v984, %v978
        %v1081 = vpack.c.b16 %v985, %v979
        %v1082 = vpack.c.b16 %v986, %v980
        %v1083 = vpack.c.b16 %v987, %v981
        %1180 = vmatprep.subr.bf16.mxu0 %v989
        %1181 = vmatpush1.bf16.msra.mxu0 %v988
        %1182 = vmatprep.subr.bf16.mxu0 %v995
        %1183 = vmatpush1.bf16.msra.mxu0 %v994
        %1184 = vmatprep.subr.bf16.mxu0 %v1001
        %1185 = vmatpush1.bf16.msra.mxu0 %v1000
        %1186 = vmatprep.subr.bf16.mxu0 %v1007
        %1187 = vmatpush1.bf16.msra.mxu0 %v1006
        %1188 = vmatprep.subr.bf16.mxu0 %v1013
        %1189 = vmatpush1.bf16.msra.mxu0 %v1012
        %1190 = vmatprep.subr.bf16.mxu0 %v1019
        %1191 = vmatpush1.bf16.msra.mxu0 %v1018
        %1192 = vmatprep.subr.bf16.mxu0 %v1025
        %1193 = vmatpush1.bf16.msra.mxu0 %v1024
        %1194 = vmatprep.subr.bf16.mxu0 %v1031
        %1195 = vmatpush1.bf16.msra.mxu0 %v1030
        %1196 = vmatprep.subr.bf16.mxu0 %v1037
        %1197 = vmatpush1.bf16.msra.mxu0 %v1036
        %1198 = vmatprep.subr.bf16.mxu0 %v1043
        %1199 = vmatpush1.bf16.msra.mxu0 %v1042
        %1200 = vmatprep.subr.bf16.mxu0 %v1049
        %1201 = vmatpush1.bf16.msra.mxu0 %v1048
        %1202 = vmatprep.subr.bf16.mxu0 %v1055
        %1203 = vmatpush1.bf16.msra.mxu0 %v1054
        %1204 = vmatprep.subr.bf16.mxu0 %v1061
        %1205 = vmatpush1.bf16.msra.mxu0 %v1060
        %1206 = vmatprep.subr.bf16.mxu0 %v1067
        %1207 = vmatpush1.bf16.msra.mxu0 %v1066
        %1208 = vmatprep.subr.bf16.mxu0 %v1073
        %1209 = vmatpush1.bf16.msra.mxu0 %v1072
        %1210 = vmatprep.subr.bf16.mxu0 %v1079
        %1211 = vmatpush1.bf16.msra.mxu0 %v1078
        %1212 = vmatprep.mubr.bf16.mxu0 %v571
        %1213 = vmatmul.mubr.bf16.gmra.mrb[0].mxu0 %v570
        %v1214 = vpop.f32.mrb[0].mxu0
        %v1215 = vadd.f32 %v673, %v1214
        %v1216 = vpop.f32.mrb[0].mxu0
        %v1217 = vadd.f32 %v677, %v1216
        %v1218 = vpop.f32.mrb[0].mxu0
        %v1219 = vadd.f32 %v673, %v1218
        %v1220 = vpop.f32.mrb[0].mxu0
        %v1221 = vadd.f32 %v677, %v1220
        %1222 = vdwg.mxu0
        %1223 = vmatprep.subr.bf16.mxu0 %v991
        %1224 = vmatpush1.bf16.msra.mxu0 %v990
        %1225 = vmatprep.subr.bf16.mxu0 %v997
        %1226 = vmatpush1.bf16.msra.mxu0 %v996
        %1227 = vmatprep.subr.bf16.mxu0 %v1003
        %1228 = vmatpush1.bf16.msra.mxu0 %v1002
        %1229 = vmatprep.subr.bf16.mxu0 %v1009
        %1230 = vmatpush1.bf16.msra.mxu0 %v1008
        %1231 = vmatprep.subr.bf16.mxu0 %v1015
        %1232 = vmatpush1.bf16.msra.mxu0 %v1014
        %1233 = vmatprep.subr.bf16.mxu0 %v1021
        %1234 = vmatpush1.bf16.msra.mxu0 %v1020
        %1235 = vmatprep.subr.bf16.mxu0 %v1027
        %1236 = vmatpush1.bf16.msra.mxu0 %v1026
        %1237 = vmatprep.subr.bf16.mxu0 %v1033
        %1238 = vmatpush1.bf16.msra.mxu0 %v1032
        %1239 = vmatprep.subr.bf16.mxu0 %v1039
        %1240 = vmatpush1.bf16.msra.mxu0 %v1038
        %1241 = vmatprep.subr.bf16.mxu0 %v1045
        %1242 = vmatpush1.bf16.msra.mxu0 %v1044
        %1243 = vmatprep.subr.bf16.mxu0 %v1051
        %1244 = vmatpush1.bf16.msra.mxu0 %v1050
        %1245 = vmatprep.subr.bf16.mxu0 %v1057
        %1246 = vmatpush1.bf16.msra.mxu0 %v1056
        %1247 = vmatprep.subr.bf16.mxu0 %v1063
        %1248 = vmatpush1.bf16.msra.mxu0 %v1062
        %1249 = vmatprep.subr.bf16.mxu0 %v1069
        %1250 = vmatpush1.bf16.msra.mxu0 %v1068
        %1251 = vmatprep.subr.bf16.mxu0 %v1075
        %1252 = vmatpush1.bf16.msra.mxu0 %v1074
        %1253 = vmatprep.subr.bf16.mxu0 %v1081
        %1254 = vmatpush1.bf16.msra.mxu0 %v1080
        %1255 = vmatprep.mubr.bf16.mxu0 %v571
        %1256 = vmatmul.mubr.bf16.gmra.mrb[0].mxu0 %v570
        %v1257 = vpop.f32.mrb[0].mxu0
        %v1258 = vadd.f32 %v681, %v1257
        %v1259 = vpop.f32.mrb[0].mxu0
        %v1260 = vadd.f32 %v685, %v1259
        %v1261 = vpop.f32.mrb[0].mxu0
        %v1262 = vadd.f32 %v681, %v1261
        %v1263 = vpop.f32.mrb[0].mxu0
        %v1264 = vadd.f32 %v685, %v1263
        %1265 = vdwg.mxu0
        %1266 = vmatprep.subr.bf16.mxu0 %v993
        %1267 = vmatpush1.bf16.msra.mxu0 %v992
        %1268 = vmatprep.subr.bf16.mxu0 %v999
        %1269 = vmatpush1.bf16.msra.mxu0 %v998
        %1270 = vmatprep.subr.bf16.mxu0 %v1005
        %1271 = vmatpush1.bf16.msra.mxu0 %v1004
        %1272 = vmatprep.subr.bf16.mxu0 %v1011
        %1273 = vmatpush1.bf16.msra.mxu0 %v1010
        %1274 = vmatprep.subr.bf16.mxu0 %v1017
        %1275 = vmatpush1.bf16.msra.mxu0 %v1016
        %1276 = vmatprep.subr.bf16.mxu0 %v1023
        %1277 = vmatpush1.bf16.msra.mxu0 %v1022
        %1278 = vmatprep.subr.bf16.mxu0 %v1029
        %1279 = vmatpush1.bf16.msra.mxu0 %v1028
        %1280 = vmatprep.subr.bf16.mxu0 %v1035
        %1281 = vmatpush1.bf16.msra.mxu0 %v1034
        %1282 = vmatprep.subr.bf16.mxu0 %v1041
        %1283 = vmatpush1.bf16.msra.mxu0 %v1040
        %1284 = vmatprep.subr.bf16.mxu0 %v1047
        %1285 = vmatpush1.bf16.msra.mxu0 %v1046
        %1286 = vmatprep.subr.bf16.mxu0 %v1053
        %1287 = vmatpush1.bf16.msra.mxu0 %v1052
        %1288 = vmatprep.subr.bf16.mxu0 %v1059
        %1289 = vmatpush1.bf16.msra.mxu0 %v1058
        %1290 = vmatprep.subr.bf16.mxu0 %v1065
        %1291 = vmatpush1.bf16.msra.mxu0 %v1064
        %1292 = vmatprep.subr.bf16.mxu0 %v1071
        %1293 = vmatpush1.bf16.msra.mxu0 %v1070
        %1294 = vmatprep.subr.bf16.mxu0 %v1077
        %1295 = vmatpush1.bf16.msra.mxu0 %v1076
        %1296 = vmatprep.subr.bf16.mxu0 %v1083
        %1297 = vmatpush1.bf16.msra.mxu0 %v1082
        %1298 = vmatprep.mubr.bf16.mxu0 %v571
        %1299 = vmatmul.mubr.bf16.gmra.mrb[0].mxu0 %v570
        %v1300 = vpop.f32.mrb[0].mxu0
        %v1301 = vadd.f32 %v689, %v1300
        %v1302 = vpop.f32.mrb[0].mxu0
        %v1303 = vadd.f32 %v693, %v1302
        %v1304 = vpop.f32.mrb[0].mxu0
        %v1305 = vadd.f32 %v689, %v1304
        %v1306 = vpop.f32.mrb[0].mxu0
        %v1307 = vadd.f32 %v693, %v1306
        %1308 = vdwg.mxu0
        %v1309 = vpack.c.bf16 %v1219, %v1215
        %v1310 = vpack.c.bf16 %v1262, %v1258
        %v1311 = vpack.c.bf16 %v1305, %v1301
        %vm1312 = vcmask 261120
        %v1314 = vsel %vm1312, %v1309, 0
        %v1317 = vsel %vm1312, %v1310, 0
        %1319 = vmatprep.subr.bf16.mxu0 0
        %1320 = vmatpush1.bf16.xpose.msra.mxu0 %v1317
        %1321 = vmatprep.subr.bf16.mxu0 0
        %1322 = vmatpush1.bf16.xpose.msra.mxu0 0
        %1323 = vmatprep.subr.bf16.mxu0 0
        %1324 = vmatpush1.bf16.xpose.msra.mxu0 0
        %1325 = vmatprep.subr.bf16.mxu0 0
        %1326 = vmatpush1.bf16.xpose.msra.mxu0 0
        %1327 = vmatprep.subr.bf16.mxu0 0
        %1328 = vmatpush1.bf16.xpose.msra.mxu0 0
        %1329 = vmatprep.subr.bf16.mxu0 0
        %1330 = vmatpush1.bf16.xpose.msra.mxu0 0
        %1331 = vmatprep.subr.bf16.mxu0 0
        %1332 = vmatpush1.bf16.xpose.msra.mxu0 0
        %1333 = vmatprep.subr.bf16.mxu0 0
        %1334 = vmatpush1.bf16.xpose.msra.mxu0 0
        %1335 = vmatprep.subr.bf16.mxu0 0
        %1336 = vmatpush1.bf16.xpose.msra.mxu0 0
        %1337 = vmatprep.subr.bf16.mxu0 0
        %1338 = vmatpush1.bf16.xpose.msra.mxu0 0
        %1339 = vmatprep.subr.bf16.mxu0 0
        %1340 = vmatpush1.bf16.xpose.msra.mxu0 0
        %1341 = vmatprep.subr.bf16.mxu0 0
        %1342 = vmatpush1.bf16.xpose.msra.mxu0 0
        %1343 = vmatprep.subr.bf16.mxu0 0
        %1344 = vmatpush1.bf16.xpose.msra.mxu0 0
        %1345 = vmatprep.subr.bf16.mxu0 0
        %1346 = vmatpush1.bf16.xpose.msra.mxu0 0
        %1347 = vmatprep.subr.bf16.mxu0 0
        %1348 = vmatpush1.bf16.xpose.msra.mxu0 0
        %1349 = vmatprep.subr.bf16.mxu0 0
        %1350 = vmatpush1.bf16.xpose.msra.mxu0 0
        %1351 = vmatprep.mubr.bf16.mxu0 0
        %1352 = vmatmul.mubr.bf16.gmra.mrb[0].mxu0 %v1314
        %v1353 = vpop.f32.mrb[0].mxu0
        %v1354 = vadd.f32 0.0, %v1353
        %v1355 = vpop.f32.mrb[0].mxu0
        %v1356 = vpop.f32.mrb[0].mxu0
        %v1357 = vadd.f32 0.0, %v1356
        %v1358 = vpop.f32.mrb[0].mxu0
        %1359 = vdwg.mxu0
        %v1360 = vmul.f32 %v1354, 0.17677669
        %v1361 = vmul.f32 %v1357, 0.17677669
        %vm1362 = vcmask 130048
        %v1363 = vsel %vm1362, %v1360, -inf
        %1364 = vmax.xlane.f32.xlu0 %v1363
        %v1365 = vpop.xlane.xlu0 %1364
        %v1366 = vsel %vm1362, %v1361, -inf
        %1367 = vmax.xlane.f32.xlu0 %v1366
        %v1368 = vpop.xlane.xlu0 %1367
        %v1369 = vsub.f32 %v1360, %v1365
        %v1370 = vsub.f32 %v1361, %v1368
        %v1371 = vmul.f32 %v1369, 1.442695
        %v1372 = vpow.pop %v1371
        %v1373 = vmul.f32 %v1370, 1.442695
        %v1374 = vpow.pop %v1373
        %v1375 = vsel %vm1362, %v1372, 0.0
        %1376 = vadd.xlane.f32.xlu0 %v1375
        %v1377 = vpop.xlane.xlu0 %1376
        %v1378 = vsel %vm1362, %v1374, 0.0
        %1379 = vadd.xlane.f32.xlu0 %v1378
        %v1380 = vpop.xlane.xlu0 %1379
        %v1381 = vrcp.pop %v1377
        %v1382 = vrcp.pop %v1380
        %v1383 = vmul.f32 %v1372, %v1381
        %v1384 = vmul.f32 %v1374, %v1382
        %v1385 = vpack.c.bf16 %v1384, %v1383
        %v1387 = vsel %vm1362, %v1385, 0
        %1389 = vmatprep.subr.bf16.mxu0 0
        %1390 = vmatpush1.bf16.msra.mxu0 %v1311
        %1391 = vmatprep.subr.bf16.mxu0 0
        %1392 = vmatpush1.bf16.msra.mxu0 0
        %1393 = vmatprep.subr.bf16.mxu0 0
        %1394 = vmatpush1.bf16.msra.mxu0 0
        %1395 = vmatprep.subr.bf16.mxu0 0
        %1396 = vmatpush1.bf16.msra.mxu0 0
        %1397 = vmatprep.subr.bf16.mxu0 0
        %1398 = vmatpush1.bf16.msra.mxu0 0
        %1399 = vmatprep.subr.bf16.mxu0 0
        %1400 = vmatpush1.bf16.msra.mxu0 0
        %1401 = vmatprep.subr.bf16.mxu0 0
        %1402 = vmatpush1.bf16.msra.mxu0 0
        %1403 = vmatprep.subr.bf16.mxu0 0
        %1404 = vmatpush1.bf16.msra.mxu0 0
        %1405 = vmatprep.subr.bf16.mxu0 0
        %1406 = vmatpush1.bf16.msra.mxu0 0
        %1407 = vmatprep.subr.bf16.mxu0 0
        %1408 = vmatpush1.bf16.msra.mxu0 0
        %1409 = vmatprep.subr.bf16.mxu0 0
        %1410 = vmatpush1.bf16.msra.mxu0 0
        %1411 = vmatprep.subr.bf16.mxu0 0
        %1412 = vmatpush1.bf16.msra.mxu0 0
        %1413 = vmatprep.subr.bf16.mxu0 0
        %1414 = vmatpush1.bf16.msra.mxu0 0
        %1415 = vmatprep.subr.bf16.mxu0 0
        %1416 = vmatpush1.bf16.msra.mxu0 0
        %1417 = vmatprep.subr.bf16.mxu0 0
        %1418 = vmatpush1.bf16.msra.mxu0 0
        %1419 = vmatprep.subr.bf16.mxu0 0
        %1420 = vmatpush1.bf16.msra.mxu0 0
        %1421 = vmatprep.mubr.bf16.mxu0 0
        %1422 = vmatmul.mubr.bf16.gmra.mrb[0].mxu0 %v1387
        %v1423 = vpop.f32.mrb[0].mxu0
        %v1424 = vadd.f32 0.0, %v1423
        %v1425 = vpop.f32.mrb[0].mxu0
        %v1426 = vpop.f32.mrb[0].mxu0
        %v1427 = vadd.f32 0.0, %v1426
        %v1428 = vpop.f32.mrb[0].mxu0
        %1429 = vdwg.mxu0
        %1431 = vrot.lane.b32.xlu0 %v1309, 96
        %v1432 = vpop.permute.xlu0 %1431
        %1434 = vrot.lane.b32.xlu0 %v1310, 96
        %v1435 = vpop.permute.xlu0 %1434
        %v1437 = vsel %vm1312, %v1432, 0
        %v1440 = vsel %vm1312, %v1435, 0
        %1442 = vmatprep.subr.bf16.mxu0 0
        %1443 = vmatpush1.bf16.xpose.msra.mxu0 %v1440
        %1444 = vmatprep.subr.bf16.mxu0 0
        %1445 = vmatpush1.bf16.xpose.msra.mxu0 0
        %1446 = vmatprep.subr.bf16.mxu0 0
        %1447 = vmatpush1.bf16.xpose.msra.mxu0 0
        %1448 = vmatprep.subr.bf16.mxu0 0
        %1449 = vmatpush1.bf16.xpose.msra.mxu0 0
        %1450 = vmatprep.subr.bf16.mxu0 0
        %1451 = vmatpush1.bf16.xpose.msra.mxu0 0
        %1452 = vmatprep.subr.bf16.mxu0 0
        %1453 = vmatpush1.bf16.xpose.msra.mxu0 0
        %1454 = vmatprep.subr.bf16.mxu0 0
        %1455 = vmatpush1.bf16.xpose.msra.mxu0 0
        %1456 = vmatprep.subr.bf16.mxu0 0
        %1457 = vmatpush1.bf16.xpose.msra.mxu0 0
        %1458 = vmatprep.subr.bf16.mxu0 0
        %1459 = vmatpush1.bf16.xpose.msra.mxu0 0
        %1460 = vmatprep.subr.bf16.mxu0 0
        %1461 = vmatpush1.bf16.xpose.msra.mxu0 0
        %1462 = vmatprep.subr.bf16.mxu0 0
        %1463 = vmatpush1.bf16.xpose.msra.mxu0 0
        %1464 = vmatprep.subr.bf16.mxu0 0
        %1465 = vmatpush1.bf16.xpose.msra.mxu0 0
        %1466 = vmatprep.subr.bf16.mxu0 0
        %1467 = vmatpush1.bf16.xpose.msra.mxu0 0
        %1468 = vmatprep.subr.bf16.mxu0 0
        %1469 = vmatpush1.bf16.xpose.msra.mxu0 0
        %1470 = vmatprep.subr.bf16.mxu0 0
        %1471 = vmatpush1.bf16.xpose.msra.mxu0 0
        %1472 = vmatprep.subr.bf16.mxu0 0
        %1473 = vmatpush1.bf16.xpose.msra.mxu0 0
        %1474 = vmatprep.mubr.bf16.mxu0 0
        %1475 = vmatmul.mubr.bf16.gmra.mrb[0].mxu0 %v1437
        %v1476 = vpop.f32.mrb[0].mxu0
        %v1477 = vadd.f32 0.0, %v1476
        %v1478 = vpop.f32.mrb[0].mxu0
        %v1479 = vpop.f32.mrb[0].mxu0
        %v1480 = vadd.f32 0.0, %v1479
        %v1481 = vpop.f32.mrb[0].mxu0
        %1482 = vdwg.mxu0
        %v1483 = vmul.f32 %v1477, 0.17677669
        %v1484 = vmul.f32 %v1480, 0.17677669
        %v1485 = vsel %vm1362, %v1483, -inf
        %1486 = vmax.xlane.f32.xlu0 %v1485
        %v1487 = vpop.xlane.xlu0 %1486
        %v1488 = vsel %vm1362, %v1484, -inf
        %1489 = vmax.xlane.f32.xlu0 %v1488
        %v1490 = vpop.xlane.xlu0 %1489
        %v1491 = vsub.f32 %v1483, %v1487
        %v1492 = vsub.f32 %v1484, %v1490
        %v1493 = vmul.f32 %v1491, 1.442695
        %v1494 = vpow.pop %v1493
        %v1495 = vmul.f32 %v1492, 1.442695
        %v1496 = vpow.pop %v1495
        %v1497 = vsel %vm1362, %v1494, 0.0
        %1498 = vadd.xlane.f32.xlu0 %v1497
        %v1499 = vpop.xlane.xlu0 %1498
        %v1500 = vsel %vm1362, %v1496, 0.0
        %1501 = vadd.xlane.f32.xlu0 %v1500
        %v1502 = vpop.xlane.xlu0 %1501
        %v1503 = vrcp.pop %v1499
        %v1504 = vrcp.pop %v1502
        %v1505 = vmul.f32 %v1494, %v1503
        %v1506 = vmul.f32 %v1496, %v1504
        %v1507 = vpack.c.bf16 %v1506, %v1505
        %1509 = vrot.lane.b32.xlu0 %v1311, 96
        %v1510 = vpop.permute.xlu0 %1509
        %v1513 = vsel %vm1362, %v1507, 0
        %1515 = vmatprep.subr.bf16.mxu0 0
        %1516 = vmatpush1.bf16.msra.mxu0 %v1510
        %1517 = vmatprep.subr.bf16.mxu0 0
        %1518 = vmatpush1.bf16.msra.mxu0 0
        %1519 = vmatprep.subr.bf16.mxu0 0
        %1520 = vmatpush1.bf16.msra.mxu0 0
        %1521 = vmatprep.subr.bf16.mxu0 0
        %1522 = vmatpush1.bf16.msra.mxu0 0
        %1523 = vmatprep.subr.bf16.mxu0 0
        %1524 = vmatpush1.bf16.msra.mxu0 0
        %1525 = vmatprep.subr.bf16.mxu0 0
        %1526 = vmatpush1.bf16.msra.mxu0 0
        %1527 = vmatprep.subr.bf16.mxu0 0
        %1528 = vmatpush1.bf16.msra.mxu0 0
        %1529 = vmatprep.subr.bf16.mxu0 0
        %1530 = vmatpush1.bf16.msra.mxu0 0
        %1531 = vmatprep.subr.bf16.mxu0 0
        %1532 = vmatpush1.bf16.msra.mxu0 0
        %1533 = vmatprep.subr.bf16.mxu0 0
        %1534 = vmatpush1.bf16.msra.mxu0 0
        %1535 = vmatprep.subr.bf16.mxu0 0
        %1536 = vmatpush1.bf16.msra.mxu0 0
        %1537 = vmatprep.subr.bf16.mxu0 0
        %1538 = vmatpush1.bf16.msra.mxu0 0
        %1539 = vmatprep.subr.bf16.mxu0 0
        %1540 = vmatpush1.bf16.msra.mxu0 0
        %1541 = vmatprep.subr.bf16.mxu0 0
        %1542 = vmatpush1.bf16.msra.mxu0 0
        %1543 = vmatprep.subr.bf16.mxu0 0
        %1544 = vmatpush1.bf16.msra.mxu0 0
        %1545 = vmatprep.subr.bf16.mxu0 0
        %1546 = vmatpush1.bf16.msra.mxu0 0
        %1547 = vmatprep.mubr.bf16.mxu0 0
        %1548 = vmatmul.mubr.bf16.gmra.mrb[0].mxu0 %v1513
        %v1549 = vpop.f32.mrb[0].mxu0
        %v1550 = vadd.f32 0.0, %v1549
        %v1551 = vpop.f32.mrb[0].mxu0
        %v1552 = vpop.f32.mrb[0].mxu0
        %v1553 = vadd.f32 0.0, %v1552
        %v1554 = vpop.f32.mrb[0].mxu0
        %1555 = vdwg.mxu0
        %1556 = vrot.lane.b32.xlu0 %v1309, 64
        %v1557 = vpop.permute.xlu0 %1556
        %1558 = vrot.lane.b32.xlu0 %v1310, 64
        %v1559 = vpop.permute.xlu0 %1558
        %v1561 = vsel %vm1312, %v1557, 0
        %v1564 = vsel %vm1312, %v1559, 0
        %1566 = vmatprep.subr.bf16.mxu0 0
        %1567 = vmatpush1.bf16.xpose.msra.mxu0 %v1564
        %1568 = vmatprep.subr.bf16.mxu0 0
        %1569 = vmatpush1.bf16.xpose.msra.mxu0 0
        %1570 = vmatprep.subr.bf16.mxu0 0
        %1571 = vmatpush1.bf16.xpose.msra.mxu0 0
        %1572 = vmatprep.subr.bf16.mxu0 0
        %1573 = vmatpush1.bf16.xpose.msra.mxu0 0
        %1574 = vmatprep.subr.bf16.mxu0 0
        %1575 = vmatpush1.bf16.xpose.msra.mxu0 0
        %1576 = vmatprep.subr.bf16.mxu0 0
        %1577 = vmatpush1.bf16.xpose.msra.mxu0 0
        %1578 = vmatprep.subr.bf16.mxu0 0
        %1579 = vmatpush1.bf16.xpose.msra.mxu0 0
        %1580 = vmatprep.subr.bf16.mxu0 0
        %1581 = vmatpush1.bf16.xpose.msra.mxu0 0
        %1582 = vmatprep.subr.bf16.mxu0 0
        %1583 = vmatpush1.bf16.xpose.msra.mxu0 0
        %1584 = vmatprep.subr.bf16.mxu0 0
        %1585 = vmatpush1.bf16.xpose.msra.mxu0 0
        %1586 = vmatprep.subr.bf16.mxu0 0
        %1587 = vmatpush1.bf16.xpose.msra.mxu0 0
        %1588 = vmatprep.subr.bf16.mxu0 0
        %1589 = vmatpush1.bf16.xpose.msra.mxu0 0
        %1590 = vmatprep.subr.bf16.mxu0 0
        %1591 = vmatpush1.bf16.xpose.msra.mxu0 0
        %1592 = vmatprep.subr.bf16.mxu0 0
        %1593 = vmatpush1.bf16.xpose.msra.mxu0 0
        %1594 = vmatprep.subr.bf16.mxu0 0
        %1595 = vmatpush1.bf16.xpose.msra.mxu0 0
        %1596 = vmatprep.subr.bf16.mxu0 0
        %1597 = vmatpush1.bf16.xpose.msra.mxu0 0
        %1598 = vmatprep.mubr.bf16.mxu0 0
        %1599 = vmatmul.mubr.bf16.gmra.mrb[0].mxu0 %v1561
        %v1600 = vpop.f32.mrb[0].mxu0
        %v1601 = vadd.f32 0.0, %v1600
        %v1602 = vpop.f32.mrb[0].mxu0
        %v1603 = vpop.f32.mrb[0].mxu0
        %v1604 = vadd.f32 0.0, %v1603
        %v1605 = vpop.f32.mrb[0].mxu0
        %1606 = vdwg.mxu0
        %v1607 = vmul.f32 %v1601, 0.17677669
        %v1608 = vmul.f32 %v1604, 0.17677669
        %v1609 = vsel %vm1362, %v1607, -inf
        %1610 = vmax.xlane.f32.xlu0 %v1609
        %v1611 = vpop.xlane.xlu0 %1610
        %v1612 = vsel %vm1362, %v1608, -inf
        %1613 = vmax.xlane.f32.xlu0 %v1612
        %v1614 = vpop.xlane.xlu0 %1613
        %v1615 = vsub.f32 %v1607, %v1611
        %v1616 = vsub.f32 %v1608, %v1614
        %v1617 = vmul.f32 %v1615, 1.442695
        %v1618 = vpow.pop %v1617
        %v1619 = vmul.f32 %v1616, 1.442695
        %v1620 = vpow.pop %v1619
        %v1621 = vsel %vm1362, %v1618, 0.0
        %1622 = vadd.xlane.f32.xlu0 %v1621
        %v1623 = vpop.xlane.xlu0 %1622
        %v1624 = vsel %vm1362, %v1620, 0.0
        %1625 = vadd.xlane.f32.xlu0 %v1624
        %v1626 = vpop.xlane.xlu0 %1625
        %v1627 = vrcp.pop %v1623
        %v1628 = vrcp.pop %v1626
        %v1629 = vmul.f32 %v1618, %v1627
        %v1630 = vmul.f32 %v1620, %v1628
        %v1631 = vpack.c.bf16 %v1630, %v1629
        %1632 = vrot.lane.b32.xlu0 %v1311, 64
        %v1633 = vpop.permute.xlu0 %1632
        %v1636 = vsel %vm1362, %v1631, 0
        %1638 = vmatprep.subr.bf16.mxu0 0
        %1639 = vmatpush1.bf16.msra.mxu0 %v1633
        %1640 = vmatprep.subr.bf16.mxu0 0
        %1641 = vmatpush1.bf16.msra.mxu0 0
        %1642 = vmatprep.subr.bf16.mxu0 0
        %1643 = vmatpush1.bf16.msra.mxu0 0
        %1644 = vmatprep.subr.bf16.mxu0 0
        %1645 = vmatpush1.bf16.msra.mxu0 0
        %1646 = vmatprep.subr.bf16.mxu0 0
        %1647 = vmatpush1.bf16.msra.mxu0 0
        %1648 = vmatprep.subr.bf16.mxu0 0
        %1649 = vmatpush1.bf16.msra.mxu0 0
        %1650 = vmatprep.subr.bf16.mxu0 0
        %1651 = vmatpush1.bf16.msra.mxu0 0
        %1652 = vmatprep.subr.bf16.mxu0 0
        %1653 = vmatpush1.bf16.msra.mxu0 0
        %1654 = vmatprep.subr.bf16.mxu0 0
        %1655 = vmatpush1.bf16.msra.mxu0 0
        %1656 = vmatprep.subr.bf16.mxu0 0
        %1657 = vmatpush1.bf16.msra.mxu0 0
        %1658 = vmatprep.subr.bf16.mxu0 0
        %1659 = vmatpush1.bf16.msra.mxu0 0
        %1660 = vmatprep.subr.bf16.mxu0 0
        %1661 = vmatpush1.bf16.msra.mxu0 0
        %1662 = vmatprep.subr.bf16.mxu0 0
        %1663 = vmatpush1.bf16.msra.mxu0 0
        %1664 = vmatprep.subr.bf16.mxu0 0
        %1665 = vmatpush1.bf16.msra.mxu0 0
        %1666 = vmatprep.subr.bf16.mxu0 0
        %1667 = vmatpush1.bf16.msra.mxu0 0
        %1668 = vmatprep.subr.bf16.mxu0 0
        %1669 = vmatpush1.bf16.msra.mxu0 0
        %1670 = vmatprep.mubr.bf16.mxu0 0
        %1671 = vmatmul.mubr.bf16.gmra.mrb[0].mxu0 %v1636
        %v1672 = vpop.f32.mrb[0].mxu0
        %v1673 = vadd.f32 0.0, %v1672
        %v1674 = vpop.f32.mrb[0].mxu0
        %v1675 = vpop.f32.mrb[0].mxu0
        %v1676 = vadd.f32 0.0, %v1675
        %v1677 = vpop.f32.mrb[0].mxu0
        %1678 = vdwg.mxu0
        %1679 = vrot.lane.b32.xlu0 %v1309, 32
        %v1680 = vpop.permute.xlu0 %1679
        %1681 = vrot.lane.b32.xlu0 %v1310, 32
        %v1682 = vpop.permute.xlu0 %1681
        %v1684 = vsel %vm1312, %v1680, 0
        %v1687 = vsel %vm1312, %v1682, 0
        %1689 = vmatprep.subr.bf16.mxu0 0
        %1690 = vmatpush1.bf16.xpose.msra.mxu0 %v1687
        %1691 = vmatprep.subr.bf16.mxu0 0
        %1692 = vmatpush1.bf16.xpose.msra.mxu0 0
        %1693 = vmatprep.subr.bf16.mxu0 0
        %1694 = vmatpush1.bf16.xpose.msra.mxu0 0
        %1695 = vmatprep.subr.bf16.mxu0 0
        %1696 = vmatpush1.bf16.xpose.msra.mxu0 0
        %1697 = vmatprep.subr.bf16.mxu0 0
        %1698 = vmatpush1.bf16.xpose.msra.mxu0 0
        %1699 = vmatprep.subr.bf16.mxu0 0
        %1700 = vmatpush1.bf16.xpose.msra.mxu0 0
        %1701 = vmatprep.subr.bf16.mxu0 0
        %1702 = vmatpush1.bf16.xpose.msra.mxu0 0
        %1703 = vmatprep.subr.bf16.mxu0 0
        %1704 = vmatpush1.bf16.xpose.msra.mxu0 0
        %1705 = vmatprep.subr.bf16.mxu0 0
        %1706 = vmatpush1.bf16.xpose.msra.mxu0 0
        %1707 = vmatprep.subr.bf16.mxu0 0
        %1708 = vmatpush1.bf16.xpose.msra.mxu0 0
        %1709 = vmatprep.subr.bf16.mxu0 0
        %1710 = vmatpush1.bf16.xpose.msra.mxu0 0
        %1711 = vmatprep.subr.bf16.mxu0 0
        %1712 = vmatpush1.bf16.xpose.msra.mxu0 0
        %1713 = vmatprep.subr.bf16.mxu0 0
        %1714 = vmatpush1.bf16.xpose.msra.mxu0 0
        %1715 = vmatprep.subr.bf16.mxu0 0
        %1716 = vmatpush1.bf16.xpose.msra.mxu0 0
        %1717 = vmatprep.subr.bf16.mxu0 0
        %1718 = vmatpush1.bf16.xpose.msra.mxu0 0
        %1719 = vmatprep.subr.bf16.mxu0 0
        %1720 = vmatpush1.bf16.xpose.msra.mxu0 0
        %1721 = vmatprep.mubr.bf16.mxu0 0
        %1722 = vmatmul.mubr.bf16.gmra.mrb[0].mxu0 %v1684
        %v1723 = vpop.f32.mrb[0].mxu0
        %v1724 = vadd.f32 0.0, %v1723
        %v1725 = vpop.f32.mrb[0].mxu0
        %v1726 = vpop.f32.mrb[0].mxu0
        %v1727 = vadd.f32 0.0, %v1726
        %v1728 = vpop.f32.mrb[0].mxu0
        %1729 = vdwg.mxu0
        %v1730 = vmul.f32 %v1724, 0.17677669
        %v1731 = vmul.f32 %v1727, 0.17677669
        %v1732 = vsel %vm1362, %v1730, -inf
        %1733 = vmax.xlane.f32.xlu0 %v1732
        %v1734 = vpop.xlane.xlu0 %1733
        %v1735 = vsel %vm1362, %v1731, -inf
        %1736 = vmax.xlane.f32.xlu0 %v1735
        %v1737 = vpop.xlane.xlu0 %1736
        %v1738 = vsub.f32 %v1730, %v1734
        %v1739 = vsub.f32 %v1731, %v1737
        %v1740 = vmul.f32 %v1738, 1.442695
        %v1741 = vpow.pop %v1740
        %v1742 = vmul.f32 %v1739, 1.442695
        %v1743 = vpow.pop %v1742
        %v1744 = vsel %vm1362, %v1741, 0.0
        %1745 = vadd.xlane.f32.xlu0 %v1744
        %v1746 = vpop.xlane.xlu0 %1745
        %v1747 = vsel %vm1362, %v1743, 0.0
        %1748 = vadd.xlane.f32.xlu0 %v1747
        %v1749 = vpop.xlane.xlu0 %1748
        %v1750 = vrcp.pop %v1746
        %v1751 = vrcp.pop %v1749
        %v1752 = vmul.f32 %v1741, %v1750
        %v1753 = vmul.f32 %v1743, %v1751
        %v1754 = vpack.c.bf16 %v1753, %v1752
        %1755 = vrot.lane.b32.xlu0 %v1311, 32
        %v1756 = vpop.permute.xlu0 %1755
        %v1759 = vsel %vm1362, %v1754, 0
        %1761 = vmatprep.subr.bf16.mxu0 0
        %1762 = vmatpush1.bf16.msra.mxu0 %v1756
        %1763 = vmatprep.subr.bf16.mxu0 0
        %1764 = vmatpush1.bf16.msra.mxu0 0
        %1765 = vmatprep.subr.bf16.mxu0 0
        %1766 = vmatpush1.bf16.msra.mxu0 0
        %1767 = vmatprep.subr.bf16.mxu0 0
        %1768 = vmatpush1.bf16.msra.mxu0 0
        %1769 = vmatprep.subr.bf16.mxu0 0
        %1770 = vmatpush1.bf16.msra.mxu0 0
        %1771 = vmatprep.subr.bf16.mxu0 0
        %1772 = vmatpush1.bf16.msra.mxu0 0
        %1773 = vmatprep.subr.bf16.mxu0 0
        %1774 = vmatpush1.bf16.msra.mxu0 0
        %1775 = vmatprep.subr.bf16.mxu0 0
        %1776 = vmatpush1.bf16.msra.mxu0 0
        %1777 = vmatprep.subr.bf16.mxu0 0
        %1778 = vmatpush1.bf16.msra.mxu0 0
        %1779 = vmatprep.subr.bf16.mxu0 0
        %1780 = vmatpush1.bf16.msra.mxu0 0
        %1781 = vmatprep.subr.bf16.mxu0 0
        %1782 = vmatpush1.bf16.msra.mxu0 0
        %1783 = vmatprep.subr.bf16.mxu0 0
        %1784 = vmatpush1.bf16.msra.mxu0 0
        %1785 = vmatprep.subr.bf16.mxu0 0
        %1786 = vmatpush1.bf16.msra.mxu0 0
        %1787 = vmatprep.subr.bf16.mxu0 0
        %1788 = vmatpush1.bf16.msra.mxu0 0
        %1789 = vmatprep.subr.bf16.mxu0 0
        %1790 = vmatpush1.bf16.msra.mxu0 0
        %1791 = vmatprep.subr.bf16.mxu0 0
        %1792 = vmatpush1.bf16.msra.mxu0 0
        %1793 = vmatprep.mubr.bf16.mxu0 0
        %1794 = vmatmul.mubr.bf16.gmra.mrb[0].mxu0 %v1759
        %v1795 = vpop.f32.mrb[0].mxu0
        %v1796 = vadd.f32 0.0, %v1795
        %v1797 = vpop.f32.mrb[0].mxu0
        %v1798 = vpop.f32.mrb[0].mxu0
        %v1799 = vadd.f32 0.0, %v1798
        %v1800 = vpop.f32.mrb[0].mxu0
        %1801 = vdwg.mxu0
        %v1802 = vpack.c.bf16 %v1221, %v1217
        %v1803 = vpack.c.bf16 %v1264, %v1260
        %v1804 = vpack.c.bf16 %v1307, %v1303
        %v1806 = vsel %vm1312, %v1802, 0
        %v1809 = vsel %vm1312, %v1803, 0
        %1811 = vmatprep.subr.bf16.mxu0 0
        %1812 = vmatpush1.bf16.xpose.msra.mxu0 %v1809
        %1813 = vmatprep.subr.bf16.mxu0 0
        %1814 = vmatpush1.bf16.xpose.msra.mxu0 0
        %1815 = vmatprep.subr.bf16.mxu0 0
        %1816 = vmatpush1.bf16.xpose.msra.mxu0 0
        %1817 = vmatprep.subr.bf16.mxu0 0
        %1818 = vmatpush1.bf16.xpose.msra.mxu0 0
        %1819 = vmatprep.subr.bf16.mxu0 0
        %1820 = vmatpush1.bf16.xpose.msra.mxu0 0
        %1821 = vmatprep.subr.bf16.mxu0 0
        %1822 = vmatpush1.bf16.xpose.msra.mxu0 0
        %1823 = vmatprep.subr.bf16.mxu0 0
        %1824 = vmatpush1.bf16.xpose.msra.mxu0 0
        %1825 = vmatprep.subr.bf16.mxu0 0
        %1826 = vmatpush1.bf16.xpose.msra.mxu0 0
        %1827 = vmatprep.subr.bf16.mxu0 0
        %1828 = vmatpush1.bf16.xpose.msra.mxu0 0
        %1829 = vmatprep.subr.bf16.mxu0 0
        %1830 = vmatpush1.bf16.xpose.msra.mxu0 0
        %1831 = vmatprep.subr.bf16.mxu0 0
        %1832 = vmatpush1.bf16.xpose.msra.mxu0 0
        %1833 = vmatprep.subr.bf16.mxu0 0
        %1834 = vmatpush1.bf16.xpose.msra.mxu0 0
        %1835 = vmatprep.subr.bf16.mxu0 0
        %1836 = vmatpush1.bf16.xpose.msra.mxu0 0
        %1837 = vmatprep.subr.bf16.mxu0 0
        %1838 = vmatpush1.bf16.xpose.msra.mxu0 0
        %1839 = vmatprep.subr.bf16.mxu0 0
        %1840 = vmatpush1.bf16.xpose.msra.mxu0 0
        %1841 = vmatprep.subr.bf16.mxu0 0
        %1842 = vmatpush1.bf16.xpose.msra.mxu0 0
        %1843 = vmatprep.mubr.bf16.mxu0 0
        %1844 = vmatmul.mubr.bf16.gmra.mrb[0].mxu0 %v1806
        %v1845 = vpop.f32.mrb[0].mxu0
        %v1846 = vadd.f32 0.0, %v1845
        %v1847 = vpop.f32.mrb[0].mxu0
        %v1848 = vpop.f32.mrb[0].mxu0
        %v1849 = vadd.f32 0.0, %v1848
        %v1850 = vpop.f32.mrb[0].mxu0
        %1851 = vdwg.mxu0
        %v1852 = vmul.f32 %v1846, 0.17677669
        %v1853 = vmul.f32 %v1849, 0.17677669
        %v1854 = vsel %vm1362, %v1852, -inf
        %1855 = vmax.xlane.f32.xlu0 %v1854
        %v1856 = vpop.xlane.xlu0 %1855
        %v1857 = vsel %vm1362, %v1853, -inf
        %1858 = vmax.xlane.f32.xlu0 %v1857
        %v1859 = vpop.xlane.xlu0 %1858
        %v1860 = vsub.f32 %v1852, %v1856
        %v1861 = vsub.f32 %v1853, %v1859
        %v1862 = vmul.f32 %v1860, 1.442695
        %v1863 = vpow.pop %v1862
        %v1864 = vmul.f32 %v1861, 1.442695
        %v1865 = vpow.pop %v1864
        %v1866 = vsel %vm1362, %v1863, 0.0
        %1867 = vadd.xlane.f32.xlu0 %v1866
        %v1868 = vpop.xlane.xlu0 %1867
        %v1869 = vsel %vm1362, %v1865, 0.0
        %1870 = vadd.xlane.f32.xlu0 %v1869
        %v1871 = vpop.xlane.xlu0 %1870
        %v1872 = vrcp.pop %v1868
        %v1873 = vrcp.pop %v1871
        %v1874 = vmul.f32 %v1863, %v1872
        %v1875 = vmul.f32 %v1865, %v1873
        %v1876 = vpack.c.bf16 %v1875, %v1874
        %v1878 = vsel %vm1362, %v1876, 0
        %1880 = vmatprep.subr.bf16.mxu0 0
        %1881 = vmatpush1.bf16.msra.mxu0 %v1804
        %1882 = vmatprep.subr.bf16.mxu0 0
        %1883 = vmatpush1.bf16.msra.mxu0 0
        %1884 = vmatprep.subr.bf16.mxu0 0
        %1885 = vmatpush1.bf16.msra.mxu0 0
        %1886 = vmatprep.subr.bf16.mxu0 0
        %1887 = vmatpush1.bf16.msra.mxu0 0
        %1888 = vmatprep.subr.bf16.mxu0 0
        %1889 = vmatpush1.bf16.msra.mxu0 0
        %1890 = vmatprep.subr.bf16.mxu0 0
        %1891 = vmatpush1.bf16.msra.mxu0 0
        %1892 = vmatprep.subr.bf16.mxu0 0
        %1893 = vmatpush1.bf16.msra.mxu0 0
        %1894 = vmatprep.subr.bf16.mxu0 0
        %1895 = vmatpush1.bf16.msra.mxu0 0
        %1896 = vmatprep.subr.bf16.mxu0 0
        %1897 = vmatpush1.bf16.msra.mxu0 0
        %1898 = vmatprep.subr.bf16.mxu0 0
        %1899 = vmatpush1.bf16.msra.mxu0 0
        %1900 = vmatprep.subr.bf16.mxu0 0
        %1901 = vmatpush1.bf16.msra.mxu0 0
        %1902 = vmatprep.subr.bf16.mxu0 0
        %1903 = vmatpush1.bf16.msra.mxu0 0
        %1904 = vmatprep.subr.bf16.mxu0 0
        %1905 = vmatpush1.bf16.msra.mxu0 0
        %1906 = vmatprep.subr.bf16.mxu0 0
        %1907 = vmatpush1.bf16.msra.mxu0 0
        %1908 = vmatprep.subr.bf16.mxu0 0
        %1909 = vmatpush1.bf16.msra.mxu0 0
        %1910 = vmatprep.subr.bf16.mxu0 0
        %1911 = vmatpush1.bf16.msra.mxu0 0
        %1912 = vmatprep.mubr.bf16.mxu0 0
        %1913 = vmatmul.mubr.bf16.gmra.mrb[0].mxu0 %v1878
        %v1914 = vpop.f32.mrb[0].mxu0
        %v1915 = vadd.f32 0.0, %v1914
        %v1916 = vpop.f32.mrb[0].mxu0
        %v1917 = vpop.f32.mrb[0].mxu0
        %v1918 = vadd.f32 0.0, %v1917
        %v1919 = vpop.f32.mrb[0].mxu0
        %1920 = vdwg.mxu0
        %1922 = vrot.lane.b32.xlu0 %v1802, 96
        %v1923 = vpop.permute.xlu0 %1922
        %1925 = vrot.lane.b32.xlu0 %v1803, 96
        %v1926 = vpop.permute.xlu0 %1925
        %v1928 = vsel %vm1312, %v1923, 0
        %v1931 = vsel %vm1312, %v1926, 0
        %1933 = vmatprep.subr.bf16.mxu0 0
        %1934 = vmatpush1.bf16.xpose.msra.mxu0 %v1931
        %1935 = vmatprep.subr.bf16.mxu0 0
        %1936 = vmatpush1.bf16.xpose.msra.mxu0 0
        %1937 = vmatprep.subr.bf16.mxu0 0
        %1938 = vmatpush1.bf16.xpose.msra.mxu0 0
        %1939 = vmatprep.subr.bf16.mxu0 0
        %1940 = vmatpush1.bf16.xpose.msra.mxu0 0
        %1941 = vmatprep.subr.bf16.mxu0 0
        %1942 = vmatpush1.bf16.xpose.msra.mxu0 0
        %1943 = vmatprep.subr.bf16.mxu0 0
        %1944 = vmatpush1.bf16.xpose.msra.mxu0 0
        %1945 = vmatprep.subr.bf16.mxu0 0
        %1946 = vmatpush1.bf16.xpose.msra.mxu0 0
        %1947 = vmatprep.subr.bf16.mxu0 0
        %1948 = vmatpush1.bf16.xpose.msra.mxu0 0
        %1949 = vmatprep.subr.bf16.mxu0 0
        %1950 = vmatpush1.bf16.xpose.msra.mxu0 0
        %1951 = vmatprep.subr.bf16.mxu0 0
        %1952 = vmatpush1.bf16.xpose.msra.mxu0 0
        %1953 = vmatprep.subr.bf16.mxu0 0
        %1954 = vmatpush1.bf16.xpose.msra.mxu0 0
        %1955 = vmatprep.subr.bf16.mxu0 0
        %1956 = vmatpush1.bf16.xpose.msra.mxu0 0
        %1957 = vmatprep.subr.bf16.mxu0 0
        %1958 = vmatpush1.bf16.xpose.msra.mxu0 0
        %1959 = vmatprep.subr.bf16.mxu0 0
        %1960 = vmatpush1.bf16.xpose.msra.mxu0 0
        %1961 = vmatprep.subr.bf16.mxu0 0
        %1962 = vmatpush1.bf16.xpose.msra.mxu0 0
        %1963 = vmatprep.subr.bf16.mxu0 0
        %1964 = vmatpush1.bf16.xpose.msra.mxu0 0
        %1965 = vmatprep.mubr.bf16.mxu0 0
        %1966 = vmatmul.mubr.bf16.gmra.mrb[0].mxu0 %v1928
        %v1967 = vpop.f32.mrb[0].mxu0
        %v1968 = vadd.f32 0.0, %v1967
        %v1969 = vpop.f32.mrb[0].mxu0
        %v1970 = vpop.f32.mrb[0].mxu0
        %v1971 = vadd.f32 0.0, %v1970
        %v1972 = vpop.f32.mrb[0].mxu0
        %1973 = vdwg.mxu0
        %v1974 = vmul.f32 %v1968, 0.17677669
        %v1975 = vmul.f32 %v1971, 0.17677669
        %v1976 = vsel %vm1362, %v1974, -inf
        %1977 = vmax.xlane.f32.xlu0 %v1976
        %v1978 = vpop.xlane.xlu0 %1977
        %v1979 = vsel %vm1362, %v1975, -inf
        %1980 = vmax.xlane.f32.xlu0 %v1979
        %v1981 = vpop.xlane.xlu0 %1980
        %v1982 = vsub.f32 %v1974, %v1978
        %v1983 = vsub.f32 %v1975, %v1981
        %v1984 = vmul.f32 %v1982, 1.442695
        %v1985 = vpow.pop %v1984
        %v1986 = vmul.f32 %v1983, 1.442695
        %v1987 = vpow.pop %v1986
        %v1988 = vsel %vm1362, %v1985, 0.0
        %1989 = vadd.xlane.f32.xlu0 %v1988
        %v1990 = vpop.xlane.xlu0 %1989
        %v1991 = vsel %vm1362, %v1987, 0.0
        %1992 = vadd.xlane.f32.xlu0 %v1991
        %v1993 = vpop.xlane.xlu0 %1992
        %v1994 = vrcp.pop %v1990
        %v1995 = vrcp.pop %v1993
        %v1996 = vmul.f32 %v1985, %v1994
        %v1997 = vmul.f32 %v1987, %v1995
        %v1998 = vpack.c.bf16 %v1997, %v1996
        %2000 = vrot.lane.b32.xlu0 %v1804, 96
        %v2001 = vpop.permute.xlu0 %2000
        %v2004 = vsel %vm1362, %v1998, 0
        %2006 = vmatprep.subr.bf16.mxu0 0
        %2007 = vmatpush1.bf16.msra.mxu0 %v2001
        %2008 = vmatprep.subr.bf16.mxu0 0
        %2009 = vmatpush1.bf16.msra.mxu0 0
        %2010 = vmatprep.subr.bf16.mxu0 0
        %2011 = vmatpush1.bf16.msra.mxu0 0
        %2012 = vmatprep.subr.bf16.mxu0 0
        %2013 = vmatpush1.bf16.msra.mxu0 0
        %2014 = vmatprep.subr.bf16.mxu0 0
        %2015 = vmatpush1.bf16.msra.mxu0 0
        %2016 = vmatprep.subr.bf16.mxu0 0
        %2017 = vmatpush1.bf16.msra.mxu0 0
        %2018 = vmatprep.subr.bf16.mxu0 0
        %2019 = vmatpush1.bf16.msra.mxu0 0
        %2020 = vmatprep.subr.bf16.mxu0 0
        %2021 = vmatpush1.bf16.msra.mxu0 0
        %2022 = vmatprep.subr.bf16.mxu0 0
        %2023 = vmatpush1.bf16.msra.mxu0 0
        %2024 = vmatprep.subr.bf16.mxu0 0
        %2025 = vmatpush1.bf16.msra.mxu0 0
        %2026 = vmatprep.subr.bf16.mxu0 0
        %2027 = vmatpush1.bf16.msra.mxu0 0
        %2028 = vmatprep.subr.bf16.mxu0 0
        %2029 = vmatpush1.bf16.msra.mxu0 0
        %2030 = vmatprep.subr.bf16.mxu0 0
        %2031 = vmatpush1.bf16.msra.mxu0 0
        %2032 = vmatprep.subr.bf16.mxu0 0
        %2033 = vmatpush1.bf16.msra.mxu0 0
        %2034 = vmatprep.subr.bf16.mxu0 0
        %2035 = vmatpush1.bf16.msra.mxu0 0
        %2036 = vmatprep.subr.bf16.mxu0 0
        %2037 = vmatpush1.bf16.msra.mxu0 0
        %2038 = vmatprep.mubr.bf16.mxu0 0
        %2039 = vmatmul.mubr.bf16.gmra.mrb[0].mxu0 %v2004
        %v2040 = vpop.f32.mrb[0].mxu0
        %v2041 = vadd.f32 0.0, %v2040
        %v2042 = vpop.f32.mrb[0].mxu0
        %v2043 = vpop.f32.mrb[0].mxu0
        %v2044 = vadd.f32 0.0, %v2043
        %v2045 = vpop.f32.mrb[0].mxu0
        %2046 = vdwg.mxu0
        %2047 = vrot.lane.b32.xlu0 %v1802, 64
        %v2048 = vpop.permute.xlu0 %2047
        %2049 = vrot.lane.b32.xlu0 %v1803, 64
        %v2050 = vpop.permute.xlu0 %2049
        %v2052 = vsel %vm1312, %v2048, 0
        %v2055 = vsel %vm1312, %v2050, 0
        %2057 = vmatprep.subr.bf16.mxu0 0
        %2058 = vmatpush1.bf16.xpose.msra.mxu0 %v2055
        %2059 = vmatprep.subr.bf16.mxu0 0
        %2060 = vmatpush1.bf16.xpose.msra.mxu0 0
        %2061 = vmatprep.subr.bf16.mxu0 0
        %2062 = vmatpush1.bf16.xpose.msra.mxu0 0
        %2063 = vmatprep.subr.bf16.mxu0 0
        %2064 = vmatpush1.bf16.xpose.msra.mxu0 0
        %2065 = vmatprep.subr.bf16.mxu0 0
        %2066 = vmatpush1.bf16.xpose.msra.mxu0 0
        %2067 = vmatprep.subr.bf16.mxu0 0
        %2068 = vmatpush1.bf16.xpose.msra.mxu0 0
        %2069 = vmatprep.subr.bf16.mxu0 0
        %2070 = vmatpush1.bf16.xpose.msra.mxu0 0
        %2071 = vmatprep.subr.bf16.mxu0 0
        %2072 = vmatpush1.bf16.xpose.msra.mxu0 0
        %2073 = vmatprep.subr.bf16.mxu0 0
        %2074 = vmatpush1.bf16.xpose.msra.mxu0 0
        %2075 = vmatprep.subr.bf16.mxu0 0
        %2076 = vmatpush1.bf16.xpose.msra.mxu0 0
        %2077 = vmatprep.subr.bf16.mxu0 0
        %2078 = vmatpush1.bf16.xpose.msra.mxu0 0
        %2079 = vmatprep.subr.bf16.mxu0 0
        %2080 = vmatpush1.bf16.xpose.msra.mxu0 0
        %2081 = vmatprep.subr.bf16.mxu0 0
        %2082 = vmatpush1.bf16.xpose.msra.mxu0 0
        %2083 = vmatprep.subr.bf16.mxu0 0
        %2084 = vmatpush1.bf16.xpose.msra.mxu0 0
        %2085 = vmatprep.subr.bf16.mxu0 0
        %2086 = vmatpush1.bf16.xpose.msra.mxu0 0
        %2087 = vmatprep.subr.bf16.mxu0 0
        %2088 = vmatpush1.bf16.xpose.msra.mxu0 0
        %2089 = vmatprep.mubr.bf16.mxu0 0
        %2090 = vmatmul.mubr.bf16.gmra.mrb[0].mxu0 %v2052
        %v2091 = vpop.f32.mrb[0].mxu0
        %v2092 = vadd.f32 0.0, %v2091
        %v2093 = vpop.f32.mrb[0].mxu0
        %v2094 = vpop.f32.mrb[0].mxu0
        %v2095 = vadd.f32 0.0, %v2094
        %v2096 = vpop.f32.mrb[0].mxu0
        %2097 = vdwg.mxu0
        %v2098 = vmul.f32 %v2092, 0.17677669
        %v2099 = vmul.f32 %v2095, 0.17677669
        %v2100 = vsel %vm1362, %v2098, -inf
        %2101 = vmax.xlane.f32.xlu0 %v2100
        %v2102 = vpop.xlane.xlu0 %2101
        %v2103 = vsel %vm1362, %v2099, -inf
        %2104 = vmax.xlane.f32.xlu0 %v2103
        %v2105 = vpop.xlane.xlu0 %2104
        %v2106 = vsub.f32 %v2098, %v2102
        %v2107 = vsub.f32 %v2099, %v2105
        %v2108 = vmul.f32 %v2106, 1.442695
        %v2109 = vpow.pop %v2108
        %v2110 = vmul.f32 %v2107, 1.442695
        %v2111 = vpow.pop %v2110
        %v2112 = vsel %vm1362, %v2109, 0.0
        %2113 = vadd.xlane.f32.xlu0 %v2112
        %v2114 = vpop.xlane.xlu0 %2113
        %v2115 = vsel %vm1362, %v2111, 0.0
        %2116 = vadd.xlane.f32.xlu0 %v2115
        %v2117 = vpop.xlane.xlu0 %2116
        %v2118 = vrcp.pop %v2114
        %v2119 = vrcp.pop %v2117
        %v2120 = vmul.f32 %v2109, %v2118
        %v2121 = vmul.f32 %v2111, %v2119
        %v2122 = vpack.c.bf16 %v2121, %v2120
        %2123 = vrot.lane.b32.xlu0 %v1804, 64
        %v2124 = vpop.permute.xlu0 %2123
        %v2127 = vsel %vm1362, %v2122, 0
        %2129 = vmatprep.subr.bf16.mxu0 0
        %2130 = vmatpush1.bf16.msra.mxu0 %v2124
        %2131 = vmatprep.subr.bf16.mxu0 0
        %2132 = vmatpush1.bf16.msra.mxu0 0
        %2133 = vmatprep.subr.bf16.mxu0 0
        %2134 = vmatpush1.bf16.msra.mxu0 0
        %2135 = vmatprep.subr.bf16.mxu0 0
        %2136 = vmatpush1.bf16.msra.mxu0 0
        %2137 = vmatprep.subr.bf16.mxu0 0
        %2138 = vmatpush1.bf16.msra.mxu0 0
        %2139 = vmatprep.subr.bf16.mxu0 0
        %2140 = vmatpush1.bf16.msra.mxu0 0
        %2141 = vmatprep.subr.bf16.mxu0 0
        %2142 = vmatpush1.bf16.msra.mxu0 0
        %2143 = vmatprep.subr.bf16.mxu0 0
        %2144 = vmatpush1.bf16.msra.mxu0 0
        %2145 = vmatprep.subr.bf16.mxu0 0
        %2146 = vmatpush1.bf16.msra.mxu0 0
        %2147 = vmatprep.subr.bf16.mxu0 0
        %2148 = vmatpush1.bf16.msra.mxu0 0
        %2149 = vmatprep.subr.bf16.mxu0 0
        %2150 = vmatpush1.bf16.msra.mxu0 0
        %2151 = vmatprep.subr.bf16.mxu0 0
        %2152 = vmatpush1.bf16.msra.mxu0 0
        %2153 = vmatprep.subr.bf16.mxu0 0
        %2154 = vmatpush1.bf16.msra.mxu0 0
        %2155 = vmatprep.subr.bf16.mxu0 0
        %2156 = vmatpush1.bf16.msra.mxu0 0
        %2157 = vmatprep.subr.bf16.mxu0 0
        %2158 = vmatpush1.bf16.msra.mxu0 0
        %2159 = vmatprep.subr.bf16.mxu0 0
        %2160 = vmatpush1.bf16.msra.mxu0 0
        %2161 = vmatprep.mubr.bf16.mxu0 0
        %2162 = vmatmul.mubr.bf16.gmra.mrb[0].mxu0 %v2127
        %v2163 = vpop.f32.mrb[0].mxu0
        %v2164 = vadd.f32 0.0, %v2163
        %v2165 = vpop.f32.mrb[0].mxu0
        %v2166 = vpop.f32.mrb[0].mxu0
        %v2167 = vadd.f32 0.0, %v2166
        %v2168 = vpop.f32.mrb[0].mxu0
        %2169 = vdwg.mxu0
        %2170 = vrot.lane.b32.xlu0 %v1802, 32
        %v2171 = vpop.permute.xlu0 %2170
        %2172 = vrot.lane.b32.xlu0 %v1803, 32
        %v2173 = vpop.permute.xlu0 %2172
        %v2175 = vsel %vm1312, %v2171, 0
        %v2178 = vsel %vm1312, %v2173, 0
        %2180 = vmatprep.subr.bf16.mxu0 0
        %2181 = vmatpush1.bf16.xpose.msra.mxu0 %v2178
        %2182 = vmatprep.subr.bf16.mxu0 0
        %2183 = vmatpush1.bf16.xpose.msra.mxu0 0
        %2184 = vmatprep.subr.bf16.mxu0 0
        %2185 = vmatpush1.bf16.xpose.msra.mxu0 0
        %2186 = vmatprep.subr.bf16.mxu0 0
        %2187 = vmatpush1.bf16.xpose.msra.mxu0 0
        %2188 = vmatprep.subr.bf16.mxu0 0
        %2189 = vmatpush1.bf16.xpose.msra.mxu0 0
        %2190 = vmatprep.subr.bf16.mxu0 0
        %2191 = vmatpush1.bf16.xpose.msra.mxu0 0
        %2192 = vmatprep.subr.bf16.mxu0 0
        %2193 = vmatpush1.bf16.xpose.msra.mxu0 0
        %2194 = vmatprep.subr.bf16.mxu0 0
        %2195 = vmatpush1.bf16.xpose.msra.mxu0 0
        %2196 = vmatprep.subr.bf16.mxu0 0
        %2197 = vmatpush1.bf16.xpose.msra.mxu0 0
        %2198 = vmatprep.subr.bf16.mxu0 0
        %2199 = vmatpush1.bf16.xpose.msra.mxu0 0
        %2200 = vmatprep.subr.bf16.mxu0 0
        %2201 = vmatpush1.bf16.xpose.msra.mxu0 0
        %2202 = vmatprep.subr.bf16.mxu0 0
        %2203 = vmatpush1.bf16.xpose.msra.mxu0 0
        %2204 = vmatprep.subr.bf16.mxu0 0
        %2205 = vmatpush1.bf16.xpose.msra.mxu0 0
        %2206 = vmatprep.subr.bf16.mxu0 0
        %2207 = vmatpush1.bf16.xpose.msra.mxu0 0
        %2208 = vmatprep.subr.bf16.mxu0 0
        %2209 = vmatpush1.bf16.xpose.msra.mxu0 0
        %2210 = vmatprep.subr.bf16.mxu0 0
        %2211 = vmatpush1.bf16.xpose.msra.mxu0 0
        %2212 = vmatprep.mubr.bf16.mxu0 0
        %2213 = vmatmul.mubr.bf16.gmra.mrb[0].mxu0 %v2175
        %v2214 = vpop.f32.mrb[0].mxu0
        %v2215 = vadd.f32 0.0, %v2214
        %v2216 = vpop.f32.mrb[0].mxu0
        %v2217 = vpop.f32.mrb[0].mxu0
        %v2218 = vadd.f32 0.0, %v2217
        %v2219 = vpop.f32.mrb[0].mxu0
        %2220 = vdwg.mxu0
        %v2221 = vmul.f32 %v2215, 0.17677669
        %v2222 = vmul.f32 %v2218, 0.17677669
        %v2223 = vsel %vm1362, %v2221, -inf
        %2224 = vmax.xlane.f32.xlu0 %v2223
        %v2225 = vpop.xlane.xlu0 %2224
        %v2226 = vsel %vm1362, %v2222, -inf
        %2227 = vmax.xlane.f32.xlu0 %v2226
        %v2228 = vpop.xlane.xlu0 %2227
        %v2229 = vsub.f32 %v2221, %v2225
        %v2230 = vsub.f32 %v2222, %v2228
        %v2231 = vmul.f32 %v2229, 1.442695
        %v2232 = vpow.pop %v2231
        %v2233 = vmul.f32 %v2230, 1.442695
        %v2234 = vpow.pop %v2233
        %v2235 = vsel %vm1362, %v2232, 0.0
        %2236 = vadd.xlane.f32.xlu0 %v2235
        %v2237 = vpop.xlane.xlu0 %2236
        %v2238 = vsel %vm1362, %v2234, 0.0
        %2239 = vadd.xlane.f32.xlu0 %v2238
        %v2240 = vpop.xlane.xlu0 %2239
        %v2241 = vrcp.pop %v2237
        %v2242 = vrcp.pop %v2240
        %v2243 = vmul.f32 %v2232, %v2241
        %v2244 = vmul.f32 %v2234, %v2242
        %v2245 = vpack.c.bf16 %v2244, %v2243
        %2246 = vrot.lane.b32.xlu0 %v1804, 32
        %v2247 = vpop.permute.xlu0 %2246
        %v2250 = vsel %vm1362, %v2245, 0
        %2252 = vmatprep.subr.bf16.mxu0 0
        %2253 = vmatpush1.bf16.msra.mxu0 %v2247
        %2254 = vmatprep.subr.bf16.mxu0 0
        %2255 = vmatpush1.bf16.msra.mxu0 0
        %2256 = vmatprep.subr.bf16.mxu0 0
        %2257 = vmatpush1.bf16.msra.mxu0 0
        %2258 = vmatprep.subr.bf16.mxu0 0
        %2259 = vmatpush1.bf16.msra.mxu0 0
        %2260 = vmatprep.subr.bf16.mxu0 0
        %2261 = vmatpush1.bf16.msra.mxu0 0
        %2262 = vmatprep.subr.bf16.mxu0 0
        %2263 = vmatpush1.bf16.msra.mxu0 0
        %2264 = vmatprep.subr.bf16.mxu0 0
        %2265 = vmatpush1.bf16.msra.mxu0 0
        %2266 = vmatprep.subr.bf16.mxu0 0
        %2267 = vmatpush1.bf16.msra.mxu0 0
        %2268 = vmatprep.subr.bf16.mxu0 0
        %2269 = vmatpush1.bf16.msra.mxu0 0
        %2270 = vmatprep.subr.bf16.mxu0 0
        %2271 = vmatpush1.bf16.msra.mxu0 0
        %2272 = vmatprep.subr.bf16.mxu0 0
        %2273 = vmatpush1.bf16.msra.mxu0 0
        %2274 = vmatprep.subr.bf16.mxu0 0
        %2275 = vmatpush1.bf16.msra.mxu0 0
        %2276 = vmatprep.subr.bf16.mxu0 0
        %2277 = vmatpush1.bf16.msra.mxu0 0
        %2278 = vmatprep.subr.bf16.mxu0 0
        %2279 = vmatpush1.bf16.msra.mxu0 0
        %2280 = vmatprep.subr.bf16.mxu0 0
        %2281 = vmatpush1.bf16.msra.mxu0 0
        %2282 = vmatprep.subr.bf16.mxu0 0
        %2283 = vmatpush1.bf16.msra.mxu0 0
        %2284 = vmatprep.mubr.bf16.mxu0 0
        %2285 = vmatmul.mubr.bf16.gmra.mrb[0].mxu0 %v2250
        %v2286 = vpop.f32.mrb[0].mxu0
        %v2287 = vadd.f32 0.0, %v2286
        %v2288 = vpop.f32.mrb[0].mxu0
        %v2289 = vpop.f32.mrb[0].mxu0
        %v2290 = vadd.f32 0.0, %v2289
        %v2291 = vpop.f32.mrb[0].mxu0
        %2292 = vdwg.mxu0
        %2295 = vrot.lane.b32.xlu0 %v1550, 32
        %v2296 = vpop.permute.xlu0 %2295
        %2297 = vrot.lane.b32.xlu0 %v1553, 32
        %v2298 = vpop.permute.xlu0 %2297
        %2303 = vrot.lane.b32.xlu0 %v1673, 64
        %v2304 = vpop.permute.xlu0 %2303
        %2305 = vrot.lane.b32.xlu0 %v1676, 64
        %v2306 = vpop.permute.xlu0 %2305
        %2311 = vrot.lane.b32.xlu0 %v1796, 96
        %v2312 = vpop.permute.xlu0 %2311
        %2313 = vrot.lane.b32.xlu0 %v1799, 96
        %v2314 = vpop.permute.xlu0 %2313
        %2319 = vrot.lane.b32.xlu0 %v2041, 32
        %v2320 = vpop.permute.xlu0 %2319
        %2321 = vrot.lane.b32.xlu0 %v2044, 32
        %v2322 = vpop.permute.xlu0 %2321
        %2327 = vrot.lane.b32.xlu0 %v2164, 64
        %v2328 = vpop.permute.xlu0 %2327
        %2329 = vrot.lane.b32.xlu0 %v2167, 64
        %v2330 = vpop.permute.xlu0 %2329
        %2335 = vrot.lane.b32.xlu0 %v2287, 96
        %v2336 = vpop.permute.xlu0 %2335
        %2337 = vrot.lane.b32.xlu0 %v2290, 96
        %v2338 = vpop.permute.xlu0 %2337
        %v2341 = vsel %vm1312, %v1424, %v2296
        %v2342 = vsel %vm1312, %v1427, %v2298
        %vm2343 = vcmask 523264
        %v2344 = vsel %vm2343, %v2341, %v2304
        %v2345 = vsel %vm2343, %v2342, %v2306
        %vm2346 = vcmask 785408
        %v2347 = vsel %vm2346, %v2344, %v2312
        %v2348 = vsel %vm2346, %v2345, %v2314
        %v2349 = vsel %vm1312, %v1915, %v2320
        %v2350 = vsel %vm1312, %v1918, %v2322
        %v2351 = vsel %vm2343, %v2349, %v2328
        %v2352 = vsel %vm2343, %v2350, %v2330
        %v2353 = vsel %vm2346, %v2351, %v2336
        %v2354 = vsel %vm2346, %v2352, %v2338
        %v2355 = vpack.c.bf16 %v2348, %v2347
        %v2356 = vpack.c.bf16 %v2354, %v2353
        %v2357 = vld [vmem:[#allocation4] sm:$0xff]
        %v2358 = vld [vmem:[#allocation4 + $0x8] sm:$0xff]
        %v2359 = vld [vmem:[#allocation4 + $0x10] sm:$0xff]
        %v2360 = vld [vmem:[#allocation4 + $0x18] sm:$0xff]
        %v2361 = vld [vmem:[#allocation4 + $0x20] sm:$0xff]
        %v2362 = vld [vmem:[#allocation4 + $0x28] sm:$0xff]
        %v2363 = vld [vmem:[#allocation4 + $0x30] sm:$0xff]
        %v2364 = vld [vmem:[#allocation4 + $0x38] sm:$0xff]
        %v2365 = vld [vmem:[#allocation4 + $0x40] sm:$0xff]
        %v2366 = vld [vmem:[#allocation4 + $0x48] sm:$0xff]
        %v2367 = vld [vmem:[#allocation4 + $0x50] sm:$0xff]
        %v2368 = vld [vmem:[#allocation4 + $0x58] sm:$0xff]
        %v2369 = vld [vmem:[#allocation4 + $0x60] sm:$0xff]
        %v2370 = vld [vmem:[#allocation4 + $0x68] sm:$0xff]
        %v2371 = vld [vmem:[#allocation4 + $0x70] sm:$0xff]
        %v2372 = vld [vmem:[#allocation4 + $0x78] sm:$0xff]
        %v2373 = vld [vmem:[#allocation4 + $0x80] sm:$0xff]
        %v2374 = vld [vmem:[#allocation4 + $0x88] sm:$0xff]
        %v2375 = vld [vmem:[#allocation4 + $0x90] sm:$0xff]
        %v2376 = vld [vmem:[#allocation4 + $0x98] sm:$0xff]
        %v2377 = vld [vmem:[#allocation4 + $0xa0] sm:$0xff]
        %v2378 = vld [vmem:[#allocation4 + $0xa8] sm:$0xff]
        %v2379 = vld [vmem:[#allocation4 + $0xb0] sm:$0xff]
        %v2380 = vld [vmem:[#allocation4 + $0xb8] sm:$0xff]
        %v2381 = vld [vmem:[#allocation4 + $0xc0] sm:$0xff]
        %v2382 = vld [vmem:[#allocation4 + $0xc8] sm:$0xff]
        %v2383 = vld [vmem:[#allocation4 + $0xd0] sm:$0xff]
        %v2384 = vld [vmem:[#allocation4 + $0xd8] sm:$0xff]
        %v2385 = vld [vmem:[#allocation4 + $0xe0] sm:$0xff]
        %v2386 = vld [vmem:[#allocation4 + $0xe8] sm:$0xff]
        %v2387 = vld [vmem:[#allocation4 + $0xf0] sm:$0xff]
        %v2388 = vld [vmem:[#allocation4 + $0xf8] sm:$0xff]
        %v2389 = vld [vmem:[%s6] sm:$0x3]
        %v2391 = vlaneseq
        %v2392 = vshrl.u32 %v2391, 7
        %v2393 = vsub.s32 0, %v2392
        %v2394 = vrot.slane %v2389, %v2393
        %v2395 = vlaneseq
        %v2396 = vshrl.u32 %v2395, 7
        %v2397 = vsub.s32 1, %v2396
        %v2398 = vrot.slane %v2389, %v2397
        %v2433 = vunpack.c.l.b16 %v2357
        %v2434 = vunpack.c.h.b16 %v2357
        %v2435 = vunpack.c.l.b16 %v2358
        %v2436 = vunpack.c.h.b16 %v2358
        %v2437 = vunpack.c.l.b16 %v2359
        %v2438 = vunpack.c.h.b16 %v2359
        %v2439 = vunpack.c.l.b16 %v2360
        %v2440 = vunpack.c.h.b16 %v2360
        %v2441 = vunpack.c.l.b16 %v2361
        %v2442 = vunpack.c.h.b16 %v2361
        %v2443 = vunpack.c.l.b16 %v2362
        %v2444 = vunpack.c.h.b16 %v2362
        %v2445 = vunpack.c.l.b16 %v2363
        %v2446 = vunpack.c.h.b16 %v2363
        %v2447 = vunpack.c.l.b16 %v2364
        %v2448 = vunpack.c.h.b16 %v2364
        %v2449 = vunpack.c.l.b16 %v2365
        %v2450 = vunpack.c.h.b16 %v2365
        %v2451 = vunpack.c.l.b16 %v2366
        %v2452 = vunpack.c.h.b16 %v2366
        %v2453 = vunpack.c.l.b16 %v2367
        %v2454 = vunpack.c.h.b16 %v2367
        %v2455 = vunpack.c.l.b16 %v2368
        %v2456 = vunpack.c.h.b16 %v2368
        %v2457 = vunpack.c.l.b16 %v2369
        %v2458 = vunpack.c.h.b16 %v2369
        %v2459 = vunpack.c.l.b16 %v2370
        %v2460 = vunpack.c.h.b16 %v2370
        %v2461 = vunpack.c.l.b16 %v2371
        %v2462 = vunpack.c.h.b16 %v2371
        %v2463 = vunpack.c.l.b16 %v2372
        %v2464 = vunpack.c.h.b16 %v2372
        %v2465 = vunpack.c.l.b16 %v2373
        %v2466 = vunpack.c.h.b16 %v2373
        %v2467 = vunpack.c.l.b16 %v2374
        %v2468 = vunpack.c.h.b16 %v2374
        %v2469 = vunpack.c.l.b16 %v2375
        %v2470 = vunpack.c.h.b16 %v2375
        %v2471 = vunpack.c.l.b16 %v2376
        %v2472 = vunpack.c.h.b16 %v2376
        %v2473 = vunpack.c.l.b16 %v2377
        %v2474 = vunpack.c.h.b16 %v2377
        %v2475 = vunpack.c.l.b16 %v2378
        %v2476 = vunpack.c.h.b16 %v2378
        %v2477 = vunpack.c.l.b16 %v2379
        %v2478 = vunpack.c.h.b16 %v2379
        %v2479 = vunpack.c.l.b16 %v2380
        %v2480 = vunpack.c.h.b16 %v2380
        %v2481 = vunpack.c.l.b16 %v2381
        %v2482 = vunpack.c.h.b16 %v2381
        %v2483 = vunpack.c.l.b16 %v2382
        %v2484 = vunpack.c.h.b16 %v2382
        %v2485 = vunpack.c.l.b16 %v2383
        %v2486 = vunpack.c.h.b16 %v2383
        %v2487 = vunpack.c.l.b16 %v2384
        %v2488 = vunpack.c.h.b16 %v2384
        %v2489 = vunpack.c.l.b16 %v2385
        %v2490 = vunpack.c.h.b16 %v2385
        %v2491 = vunpack.c.l.b16 %v2386
        %v2492 = vunpack.c.h.b16 %v2386
        %v2493 = vunpack.c.l.b16 %v2387
        %v2494 = vunpack.c.h.b16 %v2387
        %v2495 = vunpack.c.l.b16 %v2388
        %v2496 = vunpack.c.h.b16 %v2388
        %v2497 = vpack.c.b16 %v2435, %v2433
        %v2498 = vpack.c.b16 %v2436, %v2434
        %v2499 = vpack.c.b16 %v2439, %v2437
        %v2500 = vpack.c.b16 %v2440, %v2438
        %v2501 = vpack.c.b16 %v2443, %v2441
        %v2502 = vpack.c.b16 %v2444, %v2442
        %v2503 = vpack.c.b16 %v2447, %v2445
        %v2504 = vpack.c.b16 %v2448, %v2446
        %v2505 = vpack.c.b16 %v2451, %v2449
        %v2506 = vpack.c.b16 %v2452, %v2450
        %v2507 = vpack.c.b16 %v2455, %v2453
        %v2508 = vpack.c.b16 %v2456, %v2454
        %v2509 = vpack.c.b16 %v2459, %v2457
        %v2510 = vpack.c.b16 %v2460, %v2458
        %v2511 = vpack.c.b16 %v2463, %v2461
        %v2512 = vpack.c.b16 %v2464, %v2462
        %v2513 = vpack.c.b16 %v2467, %v2465
        %v2514 = vpack.c.b16 %v2468, %v2466
        %v2515 = vpack.c.b16 %v2471, %v2469
        %v2516 = vpack.c.b16 %v2472, %v2470
        %v2517 = vpack.c.b16 %v2475, %v2473
        %v2518 = vpack.c.b16 %v2476, %v2474
        %v2519 = vpack.c.b16 %v2479, %v2477
        %v2520 = vpack.c.b16 %v2480, %v2478
        %v2521 = vpack.c.b16 %v2483, %v2481
        %v2522 = vpack.c.b16 %v2484, %v2482
        %v2523 = vpack.c.b16 %v2487, %v2485
        %v2524 = vpack.c.b16 %v2488, %v2486
        %v2525 = vpack.c.b16 %v2491, %v2489
        %v2526 = vpack.c.b16 %v2492, %v2490
        %v2527 = vpack.c.b16 %v2495, %v2493
        %v2528 = vpack.c.b16 %v2496, %v2494
        %2561 = vmatprep.subr.bf16.mxu0 %v2498
        %2562 = vmatpush1.bf16.msra.mxu0 %v2497
        %2563 = vmatprep.subr.bf16.mxu0 %v2500
        %2564 = vmatpush1.bf16.msra.mxu0 %v2499
        %2565 = vmatprep.subr.bf16.mxu0 %v2502
        %2566 = vmatpush1.bf16.msra.mxu0 %v2501
        %2567 = vmatprep.subr.bf16.mxu0 %v2504
        %2568 = vmatpush1.bf16.msra.mxu0 %v2503
        %2569 = vmatprep.subr.bf16.mxu0 %v2506
        %2570 = vmatpush1.bf16.msra.mxu0 %v2505
        %2571 = vmatprep.subr.bf16.mxu0 %v2508
        %2572 = vmatpush1.bf16.msra.mxu0 %v2507
        %2573 = vmatprep.subr.bf16.mxu0 %v2510
        %2574 = vmatpush1.bf16.msra.mxu0 %v2509
        %2575 = vmatprep.subr.bf16.mxu0 %v2512
        %2576 = vmatpush1.bf16.msra.mxu0 %v2511
        %2577 = vmatprep.subr.bf16.mxu0 %v2514
        %2578 = vmatpush1.bf16.msra.mxu0 %v2513
        %2579 = vmatprep.subr.bf16.mxu0 %v2516
        %2580 = vmatpush1.bf16.msra.mxu0 %v2515
        %2581 = vmatprep.subr.bf16.mxu0 %v2518
        %2582 = vmatpush1.bf16.msra.mxu0 %v2517
        %2583 = vmatprep.subr.bf16.mxu0 %v2520
        %2584 = vmatpush1.bf16.msra.mxu0 %v2519
        %2585 = vmatprep.subr.bf16.mxu0 %v2522
        %2586 = vmatpush1.bf16.msra.mxu0 %v2521
        %2587 = vmatprep.subr.bf16.mxu0 %v2524
        %2588 = vmatpush1.bf16.msra.mxu0 %v2523
        %2589 = vmatprep.subr.bf16.mxu0 %v2526
        %2590 = vmatpush1.bf16.msra.mxu0 %v2525
        %2591 = vmatprep.subr.bf16.mxu0 %v2528
        %2592 = vmatpush1.bf16.msra.mxu0 %v2527
        %2593 = vmatprep.mubr.bf16.mxu0 %v2356
        %2594 = vmatmul.mubr.bf16.gmra.mrb[0].mxu0 %v2355
        %v2595 = vpop.f32.mrb[0].mxu0
        %v2596 = vadd.f32 %v2394, %v2595
        %v2597 = vpop.f32.mrb[0].mxu0
        %v2598 = vadd.f32 %v2398, %v2597
        %v2599 = vpop.f32.mrb[0].mxu0
        %v2600 = vadd.f32 %v2394, %v2599
        %v2601 = vpop.f32.mrb[0].mxu0
        %v2602 = vadd.f32 %v2398, %v2601
        %2603 = vdwg.mxu0
        %v2604 = vadd.f32 %v2596, %v501
        %v2605 = vadd.f32 %v2598, %v502
        %v2606 = vadd.f32 %v2600, %v503
        %v2607 = vadd.f32 %v2602, %v504
        %v2608 = vld [vmem:[%s7] sm:$0x3]
        %v2609 = vld [vmem:[%s8] sm:$0x3]
        %v2610 = vadd.f32 %v2604, %v2605
        %2611 = vadd.xlane.f32.xlu0 %v2610
        %v2612 = vpop.xlane.xlu0 %2611
        %v2613 = vadd.f32 %v2606, %v2607
        %2614 = vadd.xlane.f32.xlu0 %v2613
        %v2615 = vpop.xlane.xlu0 %2614
        %v2616 = vmul.f32 %v2612, %v513
        %v2617 = vmul.f32 %v2615, %v513
        %v2618 = vsub.f32 %v2604, %v2616
        %v2619 = vsub.f32 %v2605, %v2616
        %v2620 = vsub.f32 %v2606, %v2617
        %v2621 = vsub.f32 %v2607, %v2617
        %v2622 = vmul.f32 %v2618, %v2618
        %v2623 = vmul.f32 %v2619, %v2619
        %v2624 = vmul.f32 %v2620, %v2620
        %v2625 = vmul.f32 %v2621, %v2621
        %v2626 = vadd.f32 %v2622, %v2623
        %2627 = vadd.xlane.f32.xlu0 %v2626
        %v2628 = vpop.xlane.xlu0 %2627
        %v2629 = vadd.f32 %v2624, %v2625
        %2630 = vadd.xlane.f32.xlu0 %v2629
        %v2631 = vpop.xlane.xlu0 %2630
        %v2632 = vmul.f32 %v2628, %v513
        %v2633 = vmul.f32 %v2631, %v513
        %v2634 = vadd.f32 %v2632, 1e-05
        %v2635 = vadd.f32 %v2633, 1e-05
        %v2636 = vrsqrt.pop %v2634
        %v2637 = vrsqrt.pop %v2635
        %v2638 = vmul.f32 %v2618, %v2636
        %v2639 = vmul.f32 %v2619, %v2636
        %v2640 = vmul.f32 %v2620, %v2637
        %v2641 = vmul.f32 %v2621, %v2637
        %v2643 = vlaneseq
        %v2644 = vshrl.u32 %v2643, 7
        %v2645 = vsub.s32 0, %v2644
        %v2646 = vrot.slane %v2608, %v2645
        %v2647 = vlaneseq
        %v2648 = vshrl.u32 %v2647, 7
        %v2649 = vsub.s32 1, %v2648
        %v2650 = vrot.slane %v2608, %v2649
        %v2653 = vmul.f32 %v2638, %v2646
        %v2654 = vmul.f32 %v2639, %v2650
        %v2655 = vmul.f32 %v2640, %v2646
        %v2656 = vmul.f32 %v2641, %v2650
        %v2658 = vlaneseq
        %v2659 = vshrl.u32 %v2658, 7
        %v2660 = vsub.s32 0, %v2659
        %v2661 = vrot.slane %v2609, %v2660
        %v2662 = vlaneseq
        %v2663 = vshrl.u32 %v2662, 7
        %v2664 = vsub.s32 1, %v2663
        %v2665 = vrot.slane %v2609, %v2664
        %v2668 = vadd.f32 %v2653, %v2661
        %v2669 = vadd.f32 %v2654, %v2665
        %v2670 = vadd.f32 %v2655, %v2661
        %v2671 = vadd.f32 %v2656, %v2665
        %v2672 = vpack.c.bf16 %v2670, %v2668
        %v2673 = vpack.c.bf16 %v2671, %v2669
        %v2674 = vld [vmem:[#allocation6] sm:$0xff]
        %v2675 = vld [vmem:[#allocation6 + $0x8] sm:$0xff]
        %v2676 = vld [vmem:[#allocation6 + $0x10] sm:$0xff]
        %v2677 = vld [vmem:[#allocation6 + $0x18] sm:$0xff]
        %v2678 = vld [vmem:[#allocation6 + $0x20] sm:$0xff]
        %v2679 = vld [vmem:[#allocation6 + $0x28] sm:$0xff]
        %v2680 = vld [vmem:[#allocation6 + $0x30] sm:$0xff]
        %v2681 = vld [vmem:[#allocation6 + $0x38] sm:$0xff]
        %v2682 = vld [vmem:[#allocation6 + $0x40] sm:$0xff]
        %v2683 = vld [vmem:[#allocation6 + $0x48] sm:$0xff]
        %v2684 = vld [vmem:[#allocation6 + $0x50] sm:$0xff]
        %v2685 = vld [vmem:[#allocation6 + $0x58] sm:$0xff]
        %v2686 = vld [vmem:[#allocation6 + $0x60] sm:$0xff]
        %v2687 = vld [vmem:[#allocation6 + $0x68] sm:$0xff]
        %v2688 = vld [vmem:[#allocation6 + $0x70] sm:$0xff]
        %v2689 = vld [vmem:[#allocation6 + $0x78] sm:$0xff]
        %v2690 = vld [vmem:[#allocation6 + $0x80] sm:$0xff]
        %v2691 = vld [vmem:[#allocation6 + $0x88] sm:$0xff]
        %v2692 = vld [vmem:[#allocation6 + $0x90] sm:$0xff]
        %v2693 = vld [vmem:[#allocation6 + $0x98] sm:$0xff]
        %v2694 = vld [vmem:[#allocation6 + $0xa0] sm:$0xff]
        %v2695 = vld [vmem:[#allocation6 + $0xa8] sm:$0xff]
        %v2696 = vld [vmem:[#allocation6 + $0xb0] sm:$0xff]
        %v2697 = vld [vmem:[#allocation6 + $0xb8] sm:$0xff]
        %v2698 = vld [vmem:[#allocation6 + $0xc0] sm:$0xff]
        %v2699 = vld [vmem:[#allocation6 + $0xc8] sm:$0xff]
        %v2700 = vld [vmem:[#allocation6 + $0xd0] sm:$0xff]
        %v2701 = vld [vmem:[#allocation6 + $0xd8] sm:$0xff]
        %v2702 = vld [vmem:[#allocation6 + $0xe0] sm:$0xff]
        %v2703 = vld [vmem:[#allocation6 + $0xe8] sm:$0xff]
        %v2704 = vld [vmem:[#allocation6 + $0xf0] sm:$0xff]
        %v2705 = vld [vmem:[#allocation6 + $0xf8] sm:$0xff]
        %v2706 = vld [vmem:[#allocation6 + $0x100] sm:$0xff]
        %v2707 = vld [vmem:[#allocation6 + $0x108] sm:$0xff]
        %v2708 = vld [vmem:[#allocation6 + $0x110] sm:$0xff]
        %v2709 = vld [vmem:[#allocation6 + $0x118] sm:$0xff]
        %v2710 = vld [vmem:[#allocation6 + $0x120] sm:$0xff]
        %v2711 = vld [vmem:[#allocation6 + $0x128] sm:$0xff]
        %v2712 = vld [vmem:[#allocation6 + $0x130] sm:$0xff]
        %v2713 = vld [vmem:[#allocation6 + $0x138] sm:$0xff]
        %v2714 = vld [vmem:[#allocation6 + $0x140] sm:$0xff]
        %v2715 = vld [vmem:[#allocation6 + $0x148] sm:$0xff]
        %v2716 = vld [vmem:[#allocation6 + $0x150] sm:$0xff]
        %v2717 = vld [vmem:[#allocation6 + $0x158] sm:$0xff]
        %v2718 = vld [vmem:[#allocation6 + $0x160] sm:$0xff]
        %v2719 = vld [vmem:[#allocation6 + $0x168] sm:$0xff]
        %v2720 = vld [vmem:[#allocation6 + $0x170] sm:$0xff]
        %v2721 = vld [vmem:[#allocation6 + $0x178] sm:$0xff]
        %v2722 = vld [vmem:[#allocation6 + $0x180] sm:$0xff]
        %v2723 = vld [vmem:[#allocation6 + $0x188] sm:$0xff]
        %v2724 = vld [vmem:[#allocation6 + $0x190] sm:$0xff]
        %v2725 = vld [vmem:[#allocation6 + $0x198] sm:$0xff]
        %v2726 = vld [vmem:[#allocation6 + $0x1a0] sm:$0xff]
        %v2727 = vld [vmem:[#allocation6 + $0x1a8] sm:$0xff]
        %v2728 = vld [vmem:[#allocation6 + $0x1b0] sm:$0xff]
        %v2729 = vld [vmem:[#allocation6 + $0x1b8] sm:$0xff]
        %v2730 = vld [vmem:[#allocation6 + $0x1c0] sm:$0xff]
        %v2731 = vld [vmem:[#allocation6 + $0x1c8] sm:$0xff]
        %v2732 = vld [vmem:[#allocation6 + $0x1d0] sm:$0xff]
        %v2733 = vld [vmem:[#allocation6 + $0x1d8] sm:$0xff]
        %v2734 = vld [vmem:[#allocation6 + $0x1e0] sm:$0xff]
        %v2735 = vld [vmem:[#allocation6 + $0x1e8] sm:$0xff]
        %v2736 = vld [vmem:[#allocation6 + $0x1f0] sm:$0xff]
        %v2737 = vld [vmem:[#allocation6 + $0x1f8] sm:$0xff]
        %v2738 = vld [vmem:[#allocation6 + $0x200] sm:$0xff]
        %v2739 = vld [vmem:[#allocation6 + $0x208] sm:$0xff]
        %v2740 = vld [vmem:[#allocation6 + $0x210] sm:$0xff]
        %v2741 = vld [vmem:[#allocation6 + $0x218] sm:$0xff]
        %v2742 = vld [vmem:[#allocation6 + $0x220] sm:$0xff]
        %v2743 = vld [vmem:[#allocation6 + $0x228] sm:$0xff]
        %v2744 = vld [vmem:[#allocation6 + $0x230] sm:$0xff]
        %v2745 = vld [vmem:[#allocation6 + $0x238] sm:$0xff]
        %v2746 = vld [vmem:[#allocation6 + $0x240] sm:$0xff]
        %v2747 = vld [vmem:[#allocation6 + $0x248] sm:$0xff]
        %v2748 = vld [vmem:[#allocation6 + $0x250] sm:$0xff]
        %v2749 = vld [vmem:[#allocation6 + $0x258] sm:$0xff]
        %v2750 = vld [vmem:[#allocation6 + $0x260] sm:$0xff]
        %v2751 = vld [vmem:[#allocation6 + $0x268] sm:$0xff]
        %v2752 = vld [vmem:[#allocation6 + $0x270] sm:$0xff]
        %v2753 = vld [vmem:[#allocation6 + $0x278] sm:$0xff]
        %v2754 = vld [vmem:[#allocation6 + $0x280] sm:$0xff]
        %v2755 = vld [vmem:[#allocation6 + $0x288] sm:$0xff]
        %v2756 = vld [vmem:[#allocation6 + $0x290] sm:$0xff]
        %v2757 = vld [vmem:[#allocation6 + $0x298] sm:$0xff]
        %v2758 = vld [vmem:[#allocation6 + $0x2a0] sm:$0xff]
        %v2759 = vld [vmem:[#allocation6 + $0x2a8] sm:$0xff]
        %v2760 = vld [vmem:[#allocation6 + $0x2b0] sm:$0xff]
        %v2761 = vld [vmem:[#allocation6 + $0x2b8] sm:$0xff]
        %v2762 = vld [vmem:[#allocation6 + $0x2c0] sm:$0xff]
        %v2763 = vld [vmem:[#allocation6 + $0x2c8] sm:$0xff]
        %v2764 = vld [vmem:[#allocation6 + $0x2d0] sm:$0xff]
        %v2765 = vld [vmem:[#allocation6 + $0x2d8] sm:$0xff]
        %v2766 = vld [vmem:[#allocation6 + $0x2e0] sm:$0xff]
        %v2767 = vld [vmem:[#allocation6 + $0x2e8] sm:$0xff]
        %v2768 = vld [vmem:[#allocation6 + $0x2f0] sm:$0xff]
        %v2769 = vld [vmem:[#allocation6 + $0x2f8] sm:$0xff]
        %v2770 = vld [vmem:[#allocation6 + $0x300] sm:$0xff]
        %v2771 = vld [vmem:[#allocation6 + $0x308] sm:$0xff]
        %v2772 = vld [vmem:[#allocation6 + $0x310] sm:$0xff]
        %v2773 = vld [vmem:[#allocation6 + $0x318] sm:$0xff]
        %v2774 = vld [vmem:[#allocation6 + $0x320] sm:$0xff]
        %v2775 = vld [vmem:[#allocation6 + $0x328] sm:$0xff]
        %v2776 = vld [vmem:[#allocation6 + $0x330] sm:$0xff]
        %v2777 = vld [vmem:[#allocation6 + $0x338] sm:$0xff]
        %v2778 = vld [vmem:[#allocation6 + $0x340] sm:$0xff]
        %v2779 = vld [vmem:[#allocation6 + $0x348] sm:$0xff]
        %v2780 = vld [vmem:[#allocation6 + $0x350] sm:$0xff]
        %v2781 = vld [vmem:[#allocation6 + $0x358] sm:$0xff]
        %v2782 = vld [vmem:[#allocation6 + $0x360] sm:$0xff]
        %v2783 = vld [vmem:[#allocation6 + $0x368] sm:$0xff]
        %v2784 = vld [vmem:[#allocation6 + $0x370] sm:$0xff]
        %v2785 = vld [vmem:[#allocation6 + $0x378] sm:$0xff]
        %v2786 = vld [vmem:[#allocation6 + $0x380] sm:$0xff]
        %v2787 = vld [vmem:[#allocation6 + $0x388] sm:$0xff]
        %v2788 = vld [vmem:[#allocation6 + $0x390] sm:$0xff]
        %v2789 = vld [vmem:[#allocation6 + $0x398] sm:$0xff]
        %v2790 = vld [vmem:[#allocation6 + $0x3a0] sm:$0xff]
        %v2791 = vld [vmem:[#allocation6 + $0x3a8] sm:$0xff]
        %v2792 = vld [vmem:[#allocation6 + $0x3b0] sm:$0xff]
        %v2793 = vld [vmem:[#allocation6 + $0x3b8] sm:$0xff]
        %v2794 = vld [vmem:[#allocation6 + $0x3c0] sm:$0xff]
        %v2795 = vld [vmem:[#allocation6 + $0x3c8] sm:$0xff]
        %v2796 = vld [vmem:[#allocation6 + $0x3d0] sm:$0xff]
        %v2797 = vld [vmem:[#allocation6 + $0x3d8] sm:$0xff]
        %v2798 = vld [vmem:[#allocation6 + $0x3e0] sm:$0xff]
        %v2799 = vld [vmem:[#allocation6 + $0x3e8] sm:$0xff]
        %v2800 = vld [vmem:[#allocation6 + $0x3f0] sm:$0xff]
        %v2801 = vld [vmem:[#allocation6 + $0x3f8] sm:$0xff]
        %v2802 = vld [vmem:[%s10] sm:$0xff]
        %v2804 = vlaneseq
        %v2805 = vshrl.u32 %v2804, 7
        %v2806 = vsub.s32 0, %v2805
        %v2807 = vrot.slane %v2802, %v2806
        %v2808 = vlaneseq
        %v2809 = vshrl.u32 %v2808, 7
        %v2810 = vsub.s32 1, %v2809
        %v2811 = vrot.slane %v2802, %v2810
        %v2812 = vlaneseq
        %v2813 = vshrl.u32 %v2812, 7
        %v2814 = vsub.s32 2, %v2813
        %v2815 = vrot.slane %v2802, %v2814
        %v2816 = vlaneseq
        %v2817 = vshrl.u32 %v2816, 7
        %v2818 = vsub.s32 3, %v2817
        %v2819 = vrot.slane %v2802, %v2818
        %v2820 = vlaneseq
        %v2821 = vshrl.u32 %v2820, 7
        %v2822 = vsub.s32 4, %v2821
        %v2823 = vrot.slane %v2802, %v2822
        %v2824 = vlaneseq
        %v2825 = vshrl.u32 %v2824, 7
        %v2826 = vsub.s32 5, %v2825
        %v2827 = vrot.slane %v2802, %v2826
        %v2828 = vlaneseq
        %v2829 = vshrl.u32 %v2828, 7
        %v2830 = vsub.s32 6, %v2829
        %v2831 = vrot.slane %v2802, %v2830
        %v2832 = vlaneseq
        %v2833 = vshrl.u32 %v2832, 7
        %v2834 = vsub.s32 7, %v2833
        %v2835 = vrot.slane %v2802, %v2834
        %v2972 = vunpack.c.l.b16 %v2674
        %v2973 = vunpack.c.h.b16 %v2674
        %v2974 = vunpack.c.l.b16 %v2675
        %v2975 = vunpack.c.h.b16 %v2675
        %v2976 = vunpack.c.l.b16 %v2676
        %v2977 = vunpack.c.h.b16 %v2676
        %v2978 = vunpack.c.l.b16 %v2677
        %v2979 = vunpack.c.h.b16 %v2677
        %v2980 = vunpack.c.l.b16 %v2678
        %v2981 = vunpack.c.h.b16 %v2678
        %v2982 = vunpack.c.l.b16 %v2679
        %v2983 = vunpack.c.h.b16 %v2679
        %v2984 = vunpack.c.l.b16 %v2680
        %v2985 = vunpack.c.h.b16 %v2680
        %v2986 = vunpack.c.l.b16 %v2681
        %v2987 = vunpack.c.h.b16 %v2681
        %v2988 = vunpack.c.l.b16 %v2682
        %v2989 = vunpack.c.h.b16 %v2682
        %v2990 = vunpack.c.l.b16 %v2683
        %v2991 = vunpack.c.h.b16 %v2683
        %v2992 = vunpack.c.l.b16 %v2684
        %v2993 = vunpack.c.h.b16 %v2684
        %v2994 = vunpack.c.l.b16 %v2685
        %v2995 = vunpack.c.h.b16 %v2685
        %v2996 = vunpack.c.l.b16 %v2686
        %v2997 = vunpack.c.h.b16 %v2686
        %v2998 = vunpack.c.l.b16 %v2687
        %v2999 = vunpack.c.h.b16 %v2687
        %v3000 = vunpack.c.l.b16 %v2688
        %v3001 = vunpack.c.h.b16 %v2688
        %v3002 = vunpack.c.l.b16 %v2689
        %v3003 = vunpack.c.h.b16 %v2689
        %v3004 = vunpack.c.l.b16 %v2690
        %v3005 = vunpack.c.h.b16 %v2690
        %v3006 = vunpack.c.l.b16 %v2691
        %v3007 = vunpack.c.h.b16 %v2691
        %v3008 = vunpack.c.l.b16 %v2692
        %v3009 = vunpack.c.h.b16 %v2692
        %v3010 = vunpack.c.l.b16 %v2693
        %v3011 = vunpack.c.h.b16 %v2693
        %v3012 = vunpack.c.l.b16 %v2694
        %v3013 = vunpack.c.h.b16 %v2694
        %v3014 = vunpack.c.l.b16 %v2695
        %v3015 = vunpack.c.h.b16 %v2695
        %v3016 = vunpack.c.l.b16 %v2696
        %v3017 = vunpack.c.h.b16 %v2696
        %v3018 = vunpack.c.l.b16 %v2697
        %v3019 = vunpack.c.h.b16 %v2697
        %v3020 = vunpack.c.l.b16 %v2698
        %v3021 = vunpack.c.h.b16 %v2698
        %v3022 = vunpack.c.l.b16 %v2699
        %v3023 = vunpack.c.h.b16 %v2699
        %v3024 = vunpack.c.l.b16 %v2700
        %v3025 = vunpack.c.h.b16 %v2700
        %v3026 = vunpack.c.l.b16 %v2701
        %v3027 = vunpack.c.h.b16 %v2701
        %v3028 = vunpack.c.l.b16 %v2702
        %v3029 = vunpack.c.h.b16 %v2702
        %v3030 = vunpack.c.l.b16 %v2703
        %v3031 = vunpack.c.h.b16 %v2703
        %v3032 = vunpack.c.l.b16 %v2704
        %v3033 = vunpack.c.h.b16 %v2704
        %v3034 = vunpack.c.l.b16 %v2705
        %v3035 = vunpack.c.h.b16 %v2705
        %v3036 = vunpack.c.l.b16 %v2706
        %v3037 = vunpack.c.h.b16 %v2706
        %v3038 = vunpack.c.l.b16 %v2707
        %v3039 = vunpack.c.h.b16 %v2707
        %v3040 = vunpack.c.l.b16 %v2708
        %v3041 = vunpack.c.h.b16 %v2708
        %v3042 = vunpack.c.l.b16 %v2709
        %v3043 = vunpack.c.h.b16 %v2709
        %v3044 = vunpack.c.l.b16 %v2710
        %v3045 = vunpack.c.h.b16 %v2710
        %v3046 = vunpack.c.l.b16 %v2711
        %v3047 = vunpack.c.h.b16 %v2711
        %v3048 = vunpack.c.l.b16 %v2712
        %v3049 = vunpack.c.h.b16 %v2712
        %v3050 = vunpack.c.l.b16 %v2713
        %v3051 = vunpack.c.h.b16 %v2713
        %v3052 = vunpack.c.l.b16 %v2714
        %v3053 = vunpack.c.h.b16 %v2714
        %v3054 = vunpack.c.l.b16 %v2715
        %v3055 = vunpack.c.h.b16 %v2715
        %v3056 = vunpack.c.l.b16 %v2716
        %v3057 = vunpack.c.h.b16 %v2716
        %v3058 = vunpack.c.l.b16 %v2717
        %v3059 = vunpack.c.h.b16 %v2717
        %v3060 = vunpack.c.l.b16 %v2718
        %v3061 = vunpack.c.h.b16 %v2718
        %v3062 = vunpack.c.l.b16 %v2719
        %v3063 = vunpack.c.h.b16 %v2719
        %v3064 = vunpack.c.l.b16 %v2720
        %v3065 = vunpack.c.h.b16 %v2720
        %v3066 = vunpack.c.l.b16 %v2721
        %v3067 = vunpack.c.h.b16 %v2721
        %v3068 = vunpack.c.l.b16 %v2722
        %v3069 = vunpack.c.h.b16 %v2722
        %v3070 = vunpack.c.l.b16 %v2723
        %v3071 = vunpack.c.h.b16 %v2723
        %v3072 = vunpack.c.l.b16 %v2724
        %v3073 = vunpack.c.h.b16 %v2724
        %v3074 = vunpack.c.l.b16 %v2725
        %v3075 = vunpack.c.h.b16 %v2725
        %v3076 = vunpack.c.l.b16 %v2726
        %v3077 = vunpack.c.h.b16 %v2726
        %v3078 = vunpack.c.l.b16 %v2727
        %v3079 = vunpack.c.h.b16 %v2727
        %v3080 = vunpack.c.l.b16 %v2728
        %v3081 = vunpack.c.h.b16 %v2728
        %v3082 = vunpack.c.l.b16 %v2729
        %v3083 = vunpack.c.h.b16 %v2729
        %v3084 = vunpack.c.l.b16 %v2730
        %v3085 = vunpack.c.h.b16 %v2730
        %v3086 = vunpack.c.l.b16 %v2731
        %v3087 = vunpack.c.h.b16 %v2731
        %v3088 = vunpack.c.l.b16 %v2732
        %v3089 = vunpack.c.h.b16 %v2732
        %v3090 = vunpack.c.l.b16 %v2733
        %v3091 = vunpack.c.h.b16 %v2733
        %v3092 = vunpack.c.l.b16 %v2734
        %v3093 = vunpack.c.h.b16 %v2734
        %v3094 = vunpack.c.l.b16 %v2735
        %v3095 = vunpack.c.h.b16 %v2735
        %v3096 = vunpack.c.l.b16 %v2736
        %v3097 = vunpack.c.h.b16 %v2736
        %v3098 = vunpack.c.l.b16 %v2737
        %v3099 = vunpack.c.h.b16 %v2737
        %v3100 = vunpack.c.l.b16 %v2738
        %v3101 = vunpack.c.h.b16 %v2738
        %v3102 = vunpack.c.l.b16 %v2739
        %v3103 = vunpack.c.h.b16 %v2739
        %v3104 = vunpack.c.l.b16 %v2740
        %v3105 = vunpack.c.h.b16 %v2740
        %v3106 = vunpack.c.l.b16 %v2741
        %v3107 = vunpack.c.h.b16 %v2741
        %v3108 = vunpack.c.l.b16 %v2742
        %v3109 = vunpack.c.h.b16 %v2742
        %v3110 = vunpack.c.l.b16 %v2743
        %v3111 = vunpack.c.h.b16 %v2743
        %v3112 = vunpack.c.l.b16 %v2744
        %v3113 = vunpack.c.h.b16 %v2744
        %v3114 = vunpack.c.l.b16 %v2745
        %v3115 = vunpack.c.h.b16 %v2745
        %v3116 = vunpack.c.l.b16 %v2746
        %v3117 = vunpack.c.h.b16 %v2746
        %v3118 = vunpack.c.l.b16 %v2747
        %v3119 = vunpack.c.h.b16 %v2747
        %v3120 = vunpack.c.l.b16 %v2748
        %v3121 = vunpack.c.h.b16 %v2748
        %v3122 = vunpack.c.l.b16 %v2749
        %v3123 = vunpack.c.h.b16 %v2749
        %v3124 = vunpack.c.l.b16 %v2750
        %v3125 = vunpack.c.h.b16 %v2750
        %v3126 = vunpack.c.l.b16 %v2751
        %v3127 = vunpack.c.h.b16 %v2751
        %v3128 = vunpack.c.l.b16 %v2752
        %v3129 = vunpack.c.h.b16 %v2752
        %v3130 = vunpack.c.l.b16 %v2753
        %v3131 = vunpack.c.h.b16 %v2753
        %v3132 = vunpack.c.l.b16 %v2754
        %v3133 = vunpack.c.h.b16 %v2754
        %v3134 = vunpack.c.l.b16 %v2755
        %v3135 = vunpack.c.h.b16 %v2755
        %v3136 = vunpack.c.l.b16 %v2756
        %v3137 = vunpack.c.h.b16 %v2756
        %v3138 = vunpack.c.l.b16 %v2757
        %v3139 = vunpack.c.h.b16 %v2757
        %v3140 = vunpack.c.l.b16 %v2758
        %v3141 = vunpack.c.h.b16 %v2758
        %v3142 = vunpack.c.l.b16 %v2759
        %v3143 = vunpack.c.h.b16 %v2759
        %v3144 = vunpack.c.l.b16 %v2760
        %v3145 = vunpack.c.h.b16 %v2760
        %v3146 = vunpack.c.l.b16 %v2761
        %v3147 = vunpack.c.h.b16 %v2761
        %v3148 = vunpack.c.l.b16 %v2762
        %v3149 = vunpack.c.h.b16 %v2762
        %v3150 = vunpack.c.l.b16 %v2763
        %v3151 = vunpack.c.h.b16 %v2763
        %v3152 = vunpack.c.l.b16 %v2764
        %v3153 = vunpack.c.h.b16 %v2764
        %v3154 = vunpack.c.l.b16 %v2765
        %v3155 = vunpack.c.h.b16 %v2765
        %v3156 = vunpack.c.l.b16 %v2766
        %v3157 = vunpack.c.h.b16 %v2766
        %v3158 = vunpack.c.l.b16 %v2767
        %v3159 = vunpack.c.h.b16 %v2767
        %v3160 = vunpack.c.l.b16 %v2768
        %v3161 = vunpack.c.h.b16 %v2768
        %v3162 = vunpack.c.l.b16 %v2769
        %v3163 = vunpack.c.h.b16 %v2769
        %v3164 = vunpack.c.l.b16 %v2770
        %v3165 = vunpack.c.h.b16 %v2770
        %v3166 = vunpack.c.l.b16 %v2771
        %v3167 = vunpack.c.h.b16 %v2771
        %v3168 = vunpack.c.l.b16 %v2772
        %v3169 = vunpack.c.h.b16 %v2772
        %v3170 = vunpack.c.l.b16 %v2773
        %v3171 = vunpack.c.h.b16 %v2773
        %v3172 = vunpack.c.l.b16 %v2774
        %v3173 = vunpack.c.h.b16 %v2774
        %v3174 = vunpack.c.l.b16 %v2775
        %v3175 = vunpack.c.h.b16 %v2775
        %v3176 = vunpack.c.l.b16 %v2776
        %v3177 = vunpack.c.h.b16 %v2776
        %v3178 = vunpack.c.l.b16 %v2777
        %v3179 = vunpack.c.h.b16 %v2777
        %v3180 = vunpack.c.l.b16 %v2778
        %v3181 = vunpack.c.h.b16 %v2778
        %v3182 = vunpack.c.l.b16 %v2779
        %v3183 = vunpack.c.h.b16 %v2779
        %v3184 = vunpack.c.l.b16 %v2780
        %v3185 = vunpack.c.h.b16 %v2780
        %v3186 = vunpack.c.l.b16 %v2781
        %v3187 = vunpack.c.h.b16 %v2781
        %v3188 = vunpack.c.l.b16 %v2782
        %v3189 = vunpack.c.h.b16 %v2782
        %v3190 = vunpack.c.l.b16 %v2783
        %v3191 = vunpack.c.h.b16 %v2783
        %v3192 = vunpack.c.l.b16 %v2784
        %v3193 = vunpack.c.h.b16 %v2784
        %v3194 = vunpack.c.l.b16 %v2785
        %v3195 = vunpack.c.h.b16 %v2785
        %v3196 = vunpack.c.l.b16 %v2786
        %v3197 = vunpack.c.h.b16 %v2786
        %v3198 = vunpack.c.l.b16 %v2787
        %v3199 = vunpack.c.h.b16 %v2787
        %v3200 = vunpack.c.l.b16 %v2788
        %v3201 = vunpack.c.h.b16 %v2788
        %v3202 = vunpack.c.l.b16 %v2789
        %v3203 = vunpack.c.h.b16 %v2789
        %v3204 = vunpack.c.l.b16 %v2790
        %v3205 = vunpack.c.h.b16 %v2790
        %v3206 = vunpack.c.l.b16 %v2791
        %v3207 = vunpack.c.h.b16 %v2791
        %v3208 = vunpack.c.l.b16 %v2792
        %v3209 = vunpack.c.h.b16 %v2792
        %v3210 = vunpack.c.l.b16 %v2793
        %v3211 = vunpack.c.h.b16 %v2793
        %v3212 = vunpack.c.l.b16 %v2794
        %v3213 = vunpack.c.h.b16 %v2794
        %v3214 = vunpack.c.l.b16 %v2795
        %v3215 = vunpack.c.h.b16 %v2795
        %v3216 = vunpack.c.l.b16 %v2796
        %v3217 = vunpack.c.h.b16 %v2796
        %v3218 = vunpack.c.l.b16 %v2797
        %v3219 = vunpack.c.h.b16 %v2797
        %v3220 = vunpack.c.l.b16 %v2798
        %v3221 = vunpack.c.h.b16 %v2798
        %v3222 = vunpack.c.l.b16 %v2799
        %v3223 = vunpack.c.h.b16 %v2799
        %v3224 = vunpack.c.l.b16 %v2800
        %v3225 = vunpack.c.h.b16 %v2800
        %v3226 = vunpack.c.l.b16 %v2801
        %v3227 = vunpack.c.h.b16 %v2801
        %v3228 = vpack.c.b16 %v2980, %v2972
        %v3229 = vpack.c.b16 %v2981, %v2973
        %v3230 = vpack.c.b16 %v2982, %v2974
        %v3231 = vpack.c.b16 %v2983, %v2975
        %v3232 = vpack.c.b16 %v2984, %v2976
        %v3233 = vpack.c.b16 %v2985, %v2977
        %v3234 = vpack.c.b16 %v2986, %v2978
        %v3235 = vpack.c.b16 %v2987, %v2979
        %v3236 = vpack.c.b16 %v2996, %v2988
        %v3237 = vpack.c.b16 %v2997, %v2989
        %v3238 = vpack.c.b16 %v2998, %v2990
        %v3239 = vpack.c.b16 %v2999, %v2991
        %v3240 = vpack.c.b16 %v3000, %v2992
        %v3241 = vpack.c.b16 %v3001, %v2993
        %v3242 = vpack.c.b16 %v3002, %v2994
        %v3243 = vpack.c.b16 %v3003, %v2995
        %v3244 = vpack.c.b16 %v3012, %v3004
        %v3245 = vpack.c.b16 %v3013, %v3005
        %v3246 = vpack.c.b16 %v3014, %v3006
        %v3247 = vpack.c.b16 %v3015, %v3007
        %v3248 = vpack.c.b16 %v3016, %v3008
        %v3249 = vpack.c.b16 %v3017, %v3009
        %v3250 = vpack.c.b16 %v3018, %v3010
        %v3251 = vpack.c.b16 %v3019, %v3011
        %v3252 = vpack.c.b16 %v3028, %v3020
        %v3253 = vpack.c.b16 %v3029, %v3021
        %v3254 = vpack.c.b16 %v3030, %v3022
        %v3255 = vpack.c.b16 %v3031, %v3023
        %v3256 = vpack.c.b16 %v3032, %v3024
        %v3257 = vpack.c.b16 %v3033, %v3025
        %v3258 = vpack.c.b16 %v3034, %v3026
        %v3259 = vpack.c.b16 %v3035, %v3027
        %v3260 = vpack.c.b16 %v3044, %v3036
        %v3261 = vpack.c.b16 %v3045, %v3037
        %v3262 = vpack.c.b16 %v3046, %v3038
        %v3263 = vpack.c.b16 %v3047, %v3039
        %v3264 = vpack.c.b16 %v3048, %v3040
        %v3265 = vpack.c.b16 %v3049, %v3041
        %v3266 = vpack.c.b16 %v3050, %v3042
        %v3267 = vpack.c.b16 %v3051, %v3043
        %v3268 = vpack.c.b16 %v3060, %v3052
        %v3269 = vpack.c.b16 %v3061, %v3053
        %v3270 = vpack.c.b16 %v3062, %v3054
        %v3271 = vpack.c.b16 %v3063, %v3055
        %v3272 = vpack.c.b16 %v3064, %v3056
        %v3273 = vpack.c.b16 %v3065, %v3057
        %v3274 = vpack.c.b16 %v3066, %v3058
        %v3275 = vpack.c.b16 %v3067, %v3059
        %v3276 = vpack.c.b16 %v3076, %v3068
        %v3277 = vpack.c.b16 %v3077, %v3069
        %v3278 = vpack.c.b16 %v3078, %v3070
        %v3279 = vpack.c.b16 %v3079, %v3071
        %v3280 = vpack.c.b16 %v3080, %v3072
        %v3281 = vpack.c.b16 %v3081, %v3073
        %v3282 = vpack.c.b16 %v3082, %v3074
        %v3283 = vpack.c.b16 %v3083, %v3075
        %v3284 = vpack.c.b16 %v3092, %v3084
        %v3285 = vpack.c.b16 %v3093, %v3085
        %v3286 = vpack.c.b16 %v3094, %v3086
        %v3287 = vpack.c.b16 %v3095, %v3087
        %v3288 = vpack.c.b16 %v3096, %v3088
        %v3289 = vpack.c.b16 %v3097, %v3089
        %v3290 = vpack.c.b16 %v3098, %v3090
        %v3291 = vpack.c.b16 %v3099, %v3091
        %v3292 = vpack.c.b16 %v3108, %v3100
        %v3293 = vpack.c.b16 %v3109, %v3101
        %v3294 = vpack.c.b16 %v3110, %v3102
        %v3295 = vpack.c.b16 %v3111, %v3103
        %v3296 = vpack.c.b16 %v3112, %v3104
        %v3297 = vpack.c.b16 %v3113, %v3105
        %v3298 = vpack.c.b16 %v3114, %v3106
        %v3299 = vpack.c.b16 %v3115, %v3107
        %v3300 = vpack.c.b16 %v3124, %v3116
        %v3301 = vpack.c.b16 %v3125, %v3117
        %v3302 = vpack.c.b16 %v3126, %v3118
        %v3303 = vpack.c.b16 %v3127, %v3119
        %v3304 = vpack.c.b16 %v3128, %v3120
        %v3305 = vpack.c.b16 %v3129, %v3121
        %v3306 = vpack.c.b16 %v3130, %v3122
        %v3307 = vpack.c.b16 %v3131, %v3123
        %v3308 = vpack.c.b16 %v3140, %v3132
        %v3309 = vpack.c.b16 %v3141, %v3133
        %v3310 = vpack.c.b16 %v3142, %v3134
        %v3311 = vpack.c.b16 %v3143, %v3135
        %v3312 = vpack.c.b16 %v3144, %v3136
        %v3313 = vpack.c.b16 %v3145, %v3137
        %v3314 = vpack.c.b16 %v3146, %v3138
        %v3315 = vpack.c.b16 %v3147, %v3139
        %v3316 = vpack.c.b16 %v3156, %v3148
        %v3317 = vpack.c.b16 %v3157, %v3149
        %v3318 = vpack.c.b16 %v3158, %v3150
        %v3319 = vpack.c.b16 %v3159, %v3151
        %v3320 = vpack.c.b16 %v3160, %v3152
        %v3321 = vpack.c.b16 %v3161, %v3153
        %v3322 = vpack.c.b16 %v3162, %v3154
        %v3323 = vpack.c.b16 %v3163, %v3155
        %v3324 = vpack.c.b16 %v3172, %v3164
        %v3325 = vpack.c.b16 %v3173, %v3165
        %v3326 = vpack.c.b16 %v3174, %v3166
        %v3327 = vpack.c.b16 %v3175, %v3167
        %v3328 = vpack.c.b16 %v3176, %v3168
        %v3329 = vpack.c.b16 %v3177, %v3169
        %v3330 = vpack.c.b16 %v3178, %v3170
        %v3331 = vpack.c.b16 %v3179, %v3171
        %v3332 = vpack.c.b16 %v3188, %v3180
        %v3333 = vpack.c.b16 %v3189, %v3181
        %v3334 = vpack.c.b16 %v3190, %v3182
        %v3335 = vpack.c.b16 %v3191, %v3183
        %v3336 = vpack.c.b16 %v3192, %v3184
        %v3337 = vpack.c.b16 %v3193, %v3185
        %v3338 = vpack.c.b16 %v3194, %v3186
        %v3339 = vpack.c.b16 %v3195, %v3187
        %v3340 = vpack.c.b16 %v3204, %v3196
        %v3341 = vpack.c.b16 %v3205, %v3197
        %v3342 = vpack.c.b16 %v3206, %v3198
        %v3343 = vpack.c.b16 %v3207, %v3199
        %v3344 = vpack.c.b16 %v3208, %v3200
        %v3345 = vpack.c.b16 %v3209, %v3201
        %v3346 = vpack.c.b16 %v3210, %v3202
        %v3347 = vpack.c.b16 %v3211, %v3203
        %v3348 = vpack.c.b16 %v3220, %v3212
        %v3349 = vpack.c.b16 %v3221, %v3213
        %v3350 = vpack.c.b16 %v3222, %v3214
        %v3351 = vpack.c.b16 %v3223, %v3215
        %v3352 = vpack.c.b16 %v3224, %v3216
        %v3353 = vpack.c.b16 %v3225, %v3217
        %v3354 = vpack.c.b16 %v3226, %v3218
        %v3355 = vpack.c.b16 %v3227, %v3219
        %3484 = vmatprep.subr.bf16.mxu0 %v3229
        %3485 = vmatpush1.bf16.msra.mxu0 %v3228
        %3486 = vmatprep.subr.bf16.mxu0 %v3237
        %3487 = vmatpush1.bf16.msra.mxu0 %v3236
        %3488 = vmatprep.subr.bf16.mxu0 %v3245
        %3489 = vmatpush1.bf16.msra.mxu0 %v3244
        %3490 = vmatprep.subr.bf16.mxu0 %v3253
        %3491 = vmatpush1.bf16.msra.mxu0 %v3252
        %3492 = vmatprep.subr.bf16.mxu0 %v3261
        %3493 = vmatpush1.bf16.msra.mxu0 %v3260
        %3494 = vmatprep.subr.bf16.mxu0 %v3269
        %3495 = vmatpush1.bf16.msra.mxu0 %v3268
        %3496 = vmatprep.subr.bf16.mxu0 %v3277
        %3497 = vmatpush1.bf16.msra.mxu0 %v3276
        %3498 = vmatprep.subr.bf16.mxu0 %v3285
        %3499 = vmatpush1.bf16.msra.mxu0 %v3284
        %3500 = vmatprep.subr.bf16.mxu0 %v3293
        %3501 = vmatpush1.bf16.msra.mxu0 %v3292
        %3502 = vmatprep.subr.bf16.mxu0 %v3301
        %3503 = vmatpush1.bf16.msra.mxu0 %v3300
        %3504 = vmatprep.subr.bf16.mxu0 %v3309
        %3505 = vmatpush1.bf16.msra.mxu0 %v3308
        %3506 = vmatprep.subr.bf16.mxu0 %v3317
        %3507 = vmatpush1.bf16.msra.mxu0 %v3316
        %3508 = vmatprep.subr.bf16.mxu0 %v3325
        %3509 = vmatpush1.bf16.msra.mxu0 %v3324
        %3510 = vmatprep.subr.bf16.mxu0 %v3333
        %3511 = vmatpush1.bf16.msra.mxu0 %v3332
        %3512 = vmatprep.subr.bf16.mxu0 %v3341
        %3513 = vmatpush1.bf16.msra.mxu0 %v3340
        %3514 = vmatprep.subr.bf16.mxu0 %v3349
        %3515 = vmatpush1.bf16.msra.mxu0 %v3348
        %3516 = vmatprep.mubr.bf16.mxu0 %v2673
        %3517 = vmatmul.mubr.bf16.gmra.mrb[0].mxu0 %v2672
        %v3518 = vpop.f32.mrb[0].mxu0
        %v3519 = vadd.f32 %v2807, %v3518
        %v3520 = vpop.f32.mrb[0].mxu0
        %v3521 = vadd.f32 %v2811, %v3520
        %v3522 = vpop.f32.mrb[0].mxu0
        %v3523 = vadd.f32 %v2807, %v3522
        %v3524 = vpop.f32.mrb[0].mxu0
        %v3525 = vadd.f32 %v2811, %v3524
        %3526 = vdwg.mxu0
        %3527 = vmatprep.subr.bf16.mxu0 %v3231
        %3528 = vmatpush1.bf16.msra.mxu0 %v3230
        %3529 = vmatprep.subr.bf16.mxu0 %v3239
        %3530 = vmatpush1.bf16.msra.mxu0 %v3238
        %3531 = vmatprep.subr.bf16.mxu0 %v3247
        %3532 = vmatpush1.bf16.msra.mxu0 %v3246
        %3533 = vmatprep.subr.bf16.mxu0 %v3255
        %3534 = vmatpush1.bf16.msra.mxu0 %v3254
        %3535 = vmatprep.subr.bf16.mxu0 %v3263
        %3536 = vmatpush1.bf16.msra.mxu0 %v3262
        %3537 = vmatprep.subr.bf16.mxu0 %v3271
        %3538 = vmatpush1.bf16.msra.mxu0 %v3270
        %3539 = vmatprep.subr.bf16.mxu0 %v3279
        %3540 = vmatpush1.bf16.msra.mxu0 %v3278
        %3541 = vmatprep.subr.bf16.mxu0 %v3287
        %3542 = vmatpush1.bf16.msra.mxu0 %v3286
        %3543 = vmatprep.subr.bf16.mxu0 %v3295
        %3544 = vmatpush1.bf16.msra.mxu0 %v3294
        %3545 = vmatprep.subr.bf16.mxu0 %v3303
        %3546 = vmatpush1.bf16.msra.mxu0 %v3302
        %3547 = vmatprep.subr.bf16.mxu0 %v3311
        %3548 = vmatpush1.bf16.msra.mxu0 %v3310
        %3549 = vmatprep.subr.bf16.mxu0 %v3319
        %3550 = vmatpush1.bf16.msra.mxu0 %v3318
        %3551 = vmatprep.subr.bf16.mxu0 %v3327
        %3552 = vmatpush1.bf16.msra.mxu0 %v3326
        %3553 = vmatprep.subr.bf16.mxu0 %v3335
        %3554 = vmatpush1.bf16.msra.mxu0 %v3334
        %3555 = vmatprep.subr.bf16.mxu0 %v3343
        %3556 = vmatpush1.bf16.msra.mxu0 %v3342
        %3557 = vmatprep.subr.bf16.mxu0 %v3351
        %3558 = vmatpush1.bf16.msra.mxu0 %v3350
        %3559 = vmatprep.mubr.bf16.mxu0 %v2673
        %3560 = vmatmul.mubr.bf16.gmra.mrb[0].mxu0 %v2672
        %v3561 = vpop.f32.mrb[0].mxu0
        %v3562 = vadd.f32 %v2815, %v3561
        %v3563 = vpop.f32.mrb[0].mxu0
        %v3564 = vadd.f32 %v2819, %v3563
        %v3565 = vpop.f32.mrb[0].mxu0
        %v3566 = vadd.f32 %v2815, %v3565
        %v3567 = vpop.f32.mrb[0].mxu0
        %v3568 = vadd.f32 %v2819, %v3567
        %3569 = vdwg.mxu0
        %3570 = vmatprep.subr.bf16.mxu0 %v3233
        %3571 = vmatpush1.bf16.msra.mxu0 %v3232
        %3572 = vmatprep.subr.bf16.mxu0 %v3241
        %3573 = vmatpush1.bf16.msra.mxu0 %v3240
        %3574 = vmatprep.subr.bf16.mxu0 %v3249
        %3575 = vmatpush1.bf16.msra.mxu0 %v3248
        %3576 = vmatprep.subr.bf16.mxu0 %v3257
        %3577 = vmatpush1.bf16.msra.mxu0 %v3256
        %3578 = vmatprep.subr.bf16.mxu0 %v3265
        %3579 = vmatpush1.bf16.msra.mxu0 %v3264
        %3580 = vmatprep.subr.bf16.mxu0 %v3273
        %3581 = vmatpush1.bf16.msra.mxu0 %v3272
        %3582 = vmatprep.subr.bf16.mxu0 %v3281
        %3583 = vmatpush1.bf16.msra.mxu0 %v3280
        %3584 = vmatprep.subr.bf16.mxu0 %v3289
        %3585 = vmatpush1.bf16.msra.mxu0 %v3288
        %3586 = vmatprep.subr.bf16.mxu0 %v3297
        %3587 = vmatpush1.bf16.msra.mxu0 %v3296
        %3588 = vmatprep.subr.bf16.mxu0 %v3305
        %3589 = vmatpush1.bf16.msra.mxu0 %v3304
        %3590 = vmatprep.subr.bf16.mxu0 %v3313
        %3591 = vmatpush1.bf16.msra.mxu0 %v3312
        %3592 = vmatprep.subr.bf16.mxu0 %v3321
        %3593 = vmatpush1.bf16.msra.mxu0 %v3320
        %3594 = vmatprep.subr.bf16.mxu0 %v3329
        %3595 = vmatpush1.bf16.msra.mxu0 %v3328
        %3596 = vmatprep.subr.bf16.mxu0 %v3337
        %3597 = vmatpush1.bf16.msra.mxu0 %v3336
        %3598 = vmatprep.subr.bf16.mxu0 %v3345
        %3599 = vmatpush1.bf16.msra.mxu0 %v3344
        %3600 = vmatprep.subr.bf16.mxu0 %v3353
        %3601 = vmatpush1.bf16.msra.mxu0 %v3352
        %3602 = vmatprep.mubr.bf16.mxu0 %v2673
        %3603 = vmatmul.mubr.bf16.gmra.mrb[0].mxu0 %v2672
        %v3604 = vpop.f32.mrb[0].mxu0
        %v3605 = vadd.f32 %v2823, %v3604
        %v3606 = vpop.f32.mrb[0].mxu0
        %v3607 = vadd.f32 %v2827, %v3606
        %v3608 = vpop.f32.mrb[0].mxu0
        %v3609 = vadd.f32 %v2823, %v3608
        %v3610 = vpop.f32.mrb[0].mxu0
        %v3611 = vadd.f32 %v2827, %v3610
        %3612 = vdwg.mxu0
        %3613 = vmatprep.subr.bf16.mxu0 %v3235
        %3614 = vmatpush1.bf16.msra.mxu0 %v3234
        %3615 = vmatprep.subr.bf16.mxu0 %v3243
        %3616 = vmatpush1.bf16.msra.mxu0 %v3242
        %3617 = vmatprep.subr.bf16.mxu0 %v3251
        %3618 = vmatpush1.bf16.msra.mxu0 %v3250
        %3619 = vmatprep.subr.bf16.mxu0 %v3259
        %3620 = vmatpush1.bf16.msra.mxu0 %v3258
        %3621 = vmatprep.subr.bf16.mxu0 %v3267
        %3622 = vmatpush1.bf16.msra.mxu0 %v3266
        %3623 = vmatprep.subr.bf16.mxu0 %v3275
        %3624 = vmatpush1.bf16.msra.mxu0 %v3274
        %3625 = vmatprep.subr.bf16.mxu0 %v3283
        %3626 = vmatpush1.bf16.msra.mxu0 %v3282
        %3627 = vmatprep.subr.bf16.mxu0 %v3291
        %3628 = vmatpush1.bf16.msra.mxu0 %v3290
        %3629 = vmatprep.subr.bf16.mxu0 %v3299
        %3630 = vmatpush1.bf16.msra.mxu0 %v3298
        %3631 = vmatprep.subr.bf16.mxu0 %v3307
        %3632 = vmatpush1.bf16.msra.mxu0 %v3306
        %3633 = vmatprep.subr.bf16.mxu0 %v3315
        %3634 = vmatpush1.bf16.msra.mxu0 %v3314
        %3635 = vmatprep.subr.bf16.mxu0 %v3323
        %3636 = vmatpush1.bf16.msra.mxu0 %v3322
        %3637 = vmatprep.subr.bf16.mxu0 %v3331
        %3638 = vmatpush1.bf16.msra.mxu0 %v3330
        %3639 = vmatprep.subr.bf16.mxu0 %v3339
        %3640 = vmatpush1.bf16.msra.mxu0 %v3338
        %3641 = vmatprep.subr.bf16.mxu0 %v3347
        %3642 = vmatpush1.bf16.msra.mxu0 %v3346
        %3643 = vmatprep.subr.bf16.mxu0 %v3355
        %3644 = vmatpush1.bf16.msra.mxu0 %v3354
        %3645 = vmatprep.mubr.bf16.mxu0 %v2673
        %3646 = vmatmul.mubr.bf16.gmra.mrb[0].mxu0 %v2672
        %v3647 = vpop.f32.mrb[0].mxu0
        %v3648 = vadd.f32 %v2831, %v3647
        %v3649 = vpop.f32.mrb[0].mxu0
        %v3650 = vadd.f32 %v2835, %v3649
        %v3651 = vpop.f32.mrb[0].mxu0
        %v3652 = vadd.f32 %v2831, %v3651
        %v3653 = vpop.f32.mrb[0].mxu0
        %v3654 = vadd.f32 %v2835, %v3653
        %3655 = vdwg.mxu0
        %v3656 = vmul.f32 %v3519, 0.5
        %v3657 = vmul.f32 %v3521, 0.5
        %v3658 = vmul.f32 %v3562, 0.5
        %v3659 = vmul.f32 %v3564, 0.5
        %v3660 = vmul.f32 %v3605, 0.5
        %v3661 = vmul.f32 %v3607, 0.5
        %v3662 = vmul.f32 %v3648, 0.5
        %v3663 = vmul.f32 %v3650, 0.5
        %v3664 = vmul.f32 %v3523, 0.5
        %v3665 = vmul.f32 %v3525, 0.5
        %v3666 = vmul.f32 %v3566, 0.5
        %v3667 = vmul.f32 %v3568, 0.5
        %v3668 = vmul.f32 %v3609, 0.5
        %v3669 = vmul.f32 %v3611, 0.5
        %v3670 = vmul.f32 %v3652, 0.5
        %v3671 = vmul.f32 %v3654, 0.5
        %v3672 = vmul.f32 %v3519, 0.70710677
        %v3673 = vmul.f32 %v3521, 0.70710677
        %v3674 = vmul.f32 %v3562, 0.70710677
        %v3675 = vmul.f32 %v3564, 0.70710677
        %v3676 = vmul.f32 %v3605, 0.70710677
        %v3677 = vmul.f32 %v3607, 0.70710677
        %v3678 = vmul.f32 %v3648, 0.70710677
        %v3679 = vmul.f32 %v3650, 0.70710677
        %v3680 = vmul.f32 %v3523, 0.70710677
        %v3681 = vmul.f32 %v3525, 0.70710677
        %v3682 = vmul.f32 %v3566, 0.70710677
        %v3683 = vmul.f32 %v3568, 0.70710677
        %v3684 = vmul.f32 %v3609, 0.70710677
        %v3685 = vmul.f32 %v3611, 0.70710677
        %v3686 = vmul.f32 %v3652, 0.70710677
        %v3687 = vmul.f32 %v3654, 0.70710677
        %v3688 = vand.u32 2147483647, %v3672
        %v3689 = vand.u32 2147483647, %v3673
        %v3690 = vand.u32 2147483647, %v3674
        %v3691 = vand.u32 2147483647, %v3675
        %v3692 = vand.u32 2147483647, %v3676
        %v3693 = vand.u32 2147483647, %v3677
        %v3694 = vand.u32 2147483647, %v3678
        %v3695 = vand.u32 2147483647, %v3679
        %v3696 = vand.u32 2147483647, %v3680
        %v3697 = vand.u32 2147483647, %v3681
        %v3698 = vand.u32 2147483647, %v3682
        %v3699 = vand.u32 2147483647, %v3683
        %v3700 = vand.u32 2147483647, %v3684
        %v3701 = vand.u32 2147483647, %v3685
        %v3702 = vand.u32 2147483647, %v3686
        %v3703 = vand.u32 2147483647, %v3687
        %v3704 = vmul.f32 %v3688, 0.3275911
        %v3705 = vmul.f32 %v3689, 0.3275911
        %v3706 = vmul.f32 %v3690, 0.3275911
        %v3707 = vmul.f32 %v3691, 0.3275911
        %v3708 = vmul.f32 %v3692, 0.3275911
        %v3709 = vmul.f32 %v3693, 0.3275911
        %v3710 = vmul.f32 %v3694, 0.3275911
        %v3711 = vmul.f32 %v3695, 0.3275911
        %v3712 = vmul.f32 %v3696, 0.3275911
        %v3713 = vmul.f32 %v3697, 0.3275911
        %v3714 = vmul.f32 %v3698, 0.3275911
        %v3715 = vmul.f32 %v3699, 0.3275911
        %v3716 = vmul.f32 %v3700, 0.3275911
        %v3717 = vmul.f32 %v3701, 0.3275911
        %v3718 = vmul.f32 %v3702, 0.3275911
        %v3719 = vmul.f32 %v3703, 0.3275911
        %v3720 = vadd.f32 %v3704, 1.0
        %v3721 = vadd.f32 %v3705, 1.0
        %v3722 = vadd.f32 %v3706, 1.0
        %v3723 = vadd.f32 %v3707, 1.0
        %v3724 = vadd.f32 %v3708, 1.0
        %v3725 = vadd.f32 %v3709, 1.0
        %v3726 = vadd.f32 %v3710, 1.0
        %v3727 = vadd.f32 %v3711, 1.0
        %v3728 = vadd.f32 %v3712, 1.0
        %v3729 = vadd.f32 %v3713, 1.0
        %v3730 = vadd.f32 %v3714, 1.0
        %v3731 = vadd.f32 %v3715, 1.0
        %v3732 = vadd.f32 %v3716, 1.0
        %v3733 = vadd.f32 %v3717, 1.0
        %v3734 = vadd.f32 %v3718, 1.0
        %v3735 = vadd.f32 %v3719, 1.0
        %v3736 = vrcp.pop %v3720
        %v3737 = vmul.f32 1.0, %v3736
        %v3738 = vrcp.pop %v3721
        %v3739 = vmul.f32 1.0, %v3738
        %v3740 = vrcp.pop %v3722
        %v3741 = vmul.f32 1.0, %v3740
        %v3742 = vrcp.pop %v3723
        %v3743 = vmul.f32 1.0, %v3742
        %v3744 = vrcp.pop %v3724
        %v3745 = vmul.f32 1.0, %v3744
        %v3746 = vrcp.pop %v3725
        %v3747 = vmul.f32 1.0, %v3746
        %v3748 = vrcp.pop %v3726
        %v3749 = vmul.f32 1.0, %v3748
        %v3750 = vrcp.pop %v3727
        %v3751 = vmul.f32 1.0, %v3750
        %v3752 = vrcp.pop %v3728
        %v3753 = vmul.f32 1.0, %v3752
        %v3754 = vrcp.pop %v3729
        %v3755 = vmul.f32 1.0, %v3754
        %v3756 = vrcp.pop %v3730
        %v3757 = vmul.f32 1.0, %v3756
        %v3758 = vrcp.pop %v3731
        %v3759 = vmul.f32 1.0, %v3758
        %v3760 = vrcp.pop %v3732
        %v3761 = vmul.f32 1.0, %v3760
        %v3762 = vrcp.pop %v3733
        %v3763 = vmul.f32 1.0, %v3762
        %v3764 = vrcp.pop %v3734
        %v3765 = vmul.f32 1.0, %v3764
        %v3766 = vrcp.pop %v3735
        %v3767 = vmul.f32 1.0, %v3766
        %v3768 = vmul.f32 %v3737, 1.0614054
        %v3769 = vmul.f32 %v3739, 1.0614054
        %v3770 = vmul.f32 %v3741, 1.0614054
        %v3771 = vmul.f32 %v3743, 1.0614054
        %v3772 = vmul.f32 %v3745, 1.0614054
        %v3773 = vmul.f32 %v3747, 1.0614054
        %v3774 = vmul.f32 %v3749, 1.0614054
        %v3775 = vmul.f32 %v3751, 1.0614054
        %v3776 = vmul.f32 %v3753, 1.0614054
        %v3777 = vmul.f32 %v3755, 1.0614054
        %v3778 = vmul.f32 %v3757, 1.0614054
        %v3779 = vmul.f32 %v3759, 1.0614054
        %v3780 = vmul.f32 %v3761, 1.0614054
        %v3781 = vmul.f32 %v3763, 1.0614054
        %v3782 = vmul.f32 %v3765, 1.0614054
        %v3783 = vmul.f32 %v3767, 1.0614054
        %v3784 = vadd.f32 %v3768, -1.4531521
        %v3785 = vadd.f32 %v3769, -1.4531521
        %v3786 = vadd.f32 %v3770, -1.4531521
        %v3787 = vadd.f32 %v3771, -1.4531521
        %v3788 = vadd.f32 %v3772, -1.4531521
        %v3789 = vadd.f32 %v3773, -1.4531521
        %v3790 = vadd.f32 %v3774, -1.4531521
        %v3791 = vadd.f32 %v3775, -1.4531521
        %v3792 = vadd.f32 %v3776, -1.4531521
        %v3793 = vadd.f32 %v3777, -1.4531521
        %v3794 = vadd.f32 %v3778, -1.4531521
        %v3795 = vadd.f32 %v3779, -1.4531521
        %v3796 = vadd.f32 %v3780, -1.4531521
        %v3797 = vadd.f32 %v3781, -1.4531521
        %v3798 = vadd.f32 %v3782, -1.4531521
        %v3799 = vadd.f32 %v3783, -1.4531521
        %v3800 = vmul.f32 %v3784, %v3737
        %v3801 = vmul.f32 %v3785, %v3739
        %v3802 = vmul.f32 %v3786, %v3741
        %v3803 = vmul.f32 %v3787, %v3743
        %v3804 = vmul.f32 %v3788, %v3745
        %v3805 = vmul.f32 %v3789, %v3747
        %v3806 = vmul.f32 %v3790, %v3749
        %v3807 = vmul.f32 %v3791, %v3751
        %v3808 = vmul.f32 %v3792, %v3753
        %v3809 = vmul.f32 %v3793, %v3755
        %v3810 = vmul.f32 %v3794, %v3757
        %v3811 = vmul.f32 %v3795, %v3759
        %v3812 = vmul.f32 %v3796, %v3761
        %v3813 = vmul.f32 %v3797, %v3763
        %v3814 = vmul.f32 %v3798, %v3765
        %v3815 = vmul.f32 %v3799, %v3767
        %v3816 = vadd.f32 %v3800, 1.4214138
        %v3817 = vadd.f32 %v3801, 1.4214138
        %v3818 = vadd.f32 %v3802, 1.4214138
        %v3819 = vadd.f32 %v3803, 1.4214138
        %v3820 = vadd.f32 %v3804, 1.4214138
        %v3821 = vadd.f32 %v3805, 1.4214138
        %v3822 = vadd.f32 %v3806, 1.4214138
        %v3823 = vadd.f32 %v3807, 1.4214138
        %v3824 = vadd.f32 %v3808, 1.4214138
        %v3825 = vadd.f32 %v3809, 1.4214138
        %v3826 = vadd.f32 %v3810, 1.4214138
        %v3827 = vadd.f32 %v3811, 1.4214138
        %v3828 = vadd.f32 %v3812, 1.4214138
        %v3829 = vadd.f32 %v3813, 1.4214138
        %v3830 = vadd.f32 %v3814, 1.4214138
        %v3831 = vadd.f32 %v3815, 1.4214138
        %v3832 = vmul.f32 %v3816, %v3737
        %v3833 = vmul.f32 %v3817, %v3739
        %v3834 = vmul.f32 %v3818, %v3741
        %v3835 = vmul.f32 %v3819, %v3743
        %v3836 = vmul.f32 %v3820, %v3745
        %v3837 = vmul.f32 %v3821, %v3747
        %v3838 = vmul.f32 %v3822, %v3749
        %v3839 = vmul.f32 %v3823, %v3751
        %v3840 = vmul.f32 %v3824, %v3753
        %v3841 = vmul.f32 %v3825, %v3755
        %v3842 = vmul.f32 %v3826, %v3757
        %v3843 = vmul.f32 %v3827, %v3759
        %v3844 = vmul.f32 %v3828, %v3761
        %v3845 = vmul.f32 %v3829, %v3763
        %v3846 = vmul.f32 %v3830, %v3765
        %v3847 = vmul.f32 %v3831, %v3767
        %v3848 = vadd.f32 %v3832, -0.28449672
        %v3849 = vadd.f32 %v3833, -0.28449672
        %v3850 = vadd.f32 %v3834, -0.28449672
        %v3851 = vadd.f32 %v3835, -0.28449672
        %v3852 = vadd.f32 %v3836, -0.28449672
        %v3853 = vadd.f32 %v3837, -0.28449672
        %v3854 = vadd.f32 %v3838, -0.28449672
        %v3855 = vadd.f32 %v3839, -0.28449672
        %v3856 = vadd.f32 %v3840, -0.28449672
        %v3857 = vadd.f32 %v3841, -0.28449672
        %v3858 = vadd.f32 %v3842, -0.28449672
        %v3859 = vadd.f32 %v3843, -0.28449672
        %v3860 = vadd.f32 %v3844, -0.28449672
        %v3861 = vadd.f32 %v3845, -0.28449672
        %v3862 = vadd.f32 %v3846, -0.28449672
        %v3863 = vadd.f32 %v3847, -0.28449672
        %v3864 = vmul.f32 %v3848, %v3737
        %v3865 = vmul.f32 %v3849, %v3739
        %v3866 = vmul.f32 %v3850, %v3741
        %v3867 = vmul.f32 %v3851, %v3743
        %v3868 = vmul.f32 %v3852, %v3745
        %v3869 = vmul.f32 %v3853, %v3747
        %v3870 = vmul.f32 %v3854, %v3749
        %v3871 = vmul.f32 %v3855, %v3751
        %v3872 = vmul.f32 %v3856, %v3753
        %v3873 = vmul.f32 %v3857, %v3755
        %v3874 = vmul.f32 %v3858, %v3757
        %v3875 = vmul.f32 %v3859, %v3759
        %v3876 = vmul.f32 %v3860, %v3761
        %v3877 = vmul.f32 %v3861, %v3763
        %v3878 = vmul.f32 %v3862, %v3765
        %v3879 = vmul.f32 %v3863, %v3767
        %v3880 = vadd.f32 %v3864, 0.2548296
        %v3881 = vadd.f32 %v3865, 0.2548296
        %v3882 = vadd.f32 %v3866, 0.2548296
        %v3883 = vadd.f32 %v3867, 0.2548296
        %v3884 = vadd.f32 %v3868, 0.2548296
        %v3885 = vadd.f32 %v3869, 0.2548296
        %v3886 = vadd.f32 %v3870, 0.2548296
        %v3887 = vadd.f32 %v3871, 0.2548296
        %v3888 = vadd.f32 %v3872, 0.2548296
        %v3889 = vadd.f32 %v3873, 0.2548296
        %v3890 = vadd.f32 %v3874, 0.2548296
        %v3891 = vadd.f32 %v3875, 0.2548296
        %v3892 = vadd.f32 %v3876, 0.2548296
        %v3893 = vadd.f32 %v3877, 0.2548296
        %v3894 = vadd.f32 %v3878, 0.2548296
        %v3895 = vadd.f32 %v3879, 0.2548296
        %v3896 = vmul.f32 %v3880, %v3737
        %v3897 = vmul.f32 %v3881, %v3739
        %v3898 = vmul.f32 %v3882, %v3741
        %v3899 = vmul.f32 %v3883, %v3743
        %v3900 = vmul.f32 %v3884, %v3745
        %v3901 = vmul.f32 %v3885, %v3747
        %v3902 = vmul.f32 %v3886, %v3749
        %v3903 = vmul.f32 %v3887, %v3751
        %v3904 = vmul.f32 %v3888, %v3753
        %v3905 = vmul.f32 %v3889, %v3755
        %v3906 = vmul.f32 %v3890, %v3757
        %v3907 = vmul.f32 %v3891, %v3759
        %v3908 = vmul.f32 %v3892, %v3761
        %v3909 = vmul.f32 %v3893, %v3763
        %v3910 = vmul.f32 %v3894, %v3765
        %v3911 = vmul.f32 %v3895, %v3767
        %v3912 = vmul.f32 %v3688, %v3688
        %v3913 = vmul.f32 %v3689, %v3689
        %v3914 = vmul.f32 %v3690, %v3690
        %v3915 = vmul.f32 %v3691, %v3691
        %v3916 = vmul.f32 %v3692, %v3692
        %v3917 = vmul.f32 %v3693, %v3693
        %v3918 = vmul.f32 %v3694, %v3694
        %v3919 = vmul.f32 %v3695, %v3695
        %v3920 = vmul.f32 %v3696, %v3696
        %v3921 = vmul.f32 %v3697, %v3697
        %v3922 = vmul.f32 %v3698, %v3698
        %v3923 = vmul.f32 %v3699, %v3699
        %v3924 = vmul.f32 %v3700, %v3700
        %v3925 = vmul.f32 %v3701, %v3701
        %v3926 = vmul.f32 %v3702, %v3702
        %v3927 = vmul.f32 %v3703, %v3703
        %v3928 = vsub.f32 0.0, %v3912
        %v3929 = vsub.f32 0.0, %v3913
        %v3930 = vsub.f32 0.0, %v3914
        %v3931 = vsub.f32 0.0, %v3915
        %v3932 = vsub.f32 0.0, %v3916
        %v3933 = vsub.f32 0.0, %v3917
        %v3934 = vsub.f32 0.0, %v3918
        %v3935 = vsub.f32 0.0, %v3919
        %v3936 = vsub.f32 0.0, %v3920
        %v3937 = vsub.f32 0.0, %v3921
        %v3938 = vsub.f32 0.0, %v3922
        %v3939 = vsub.f32 0.0, %v3923
        %v3940 = vsub.f32 0.0, %v3924
        %v3941 = vsub.f32 0.0, %v3925
        %v3942 = vsub.f32 0.0, %v3926
        %v3943 = vsub.f32 0.0, %v3927
        %v3944 = vmul.f32 %v3928, 1.442695
        %v3945 = vpow.pop %v3944
        %v3946 = vmul.f32 %v3929, 1.442695
        %v3947 = vpow.pop %v3946
        %v3948 = vmul.f32 %v3930, 1.442695
        %v3949 = vpow.pop %v3948
        %v3950 = vmul.f32 %v3931, 1.442695
        %v3951 = vpow.pop %v3950
        %v3952 = vmul.f32 %v3932, 1.442695
        %v3953 = vpow.pop %v3952
        %v3954 = vmul.f32 %v3933, 1.442695
        %v3955 = vpow.pop %v3954
        %v3956 = vmul.f32 %v3934, 1.442695
        %v3957 = vpow.pop %v3956
        %v3958 = vmul.f32 %v3935, 1.442695
        %v3959 = vpow.pop %v3958
        %v3960 = vmul.f32 %v3936, 1.442695
        %v3961 = vpow.pop %v3960
        %v3962 = vmul.f32 %v3937, 1.442695
        %v3963 = vpow.pop %v3962
        %v3964 = vmul.f32 %v3938, 1.442695
        %v3965 = vpow.pop %v3964
        %v3966 = vmul.f32 %v3939, 1.442695
        %v3967 = vpow.pop %v3966
        %v3968 = vmul.f32 %v3940, 1.442695
        %v3969 = vpow.pop %v3968
        %v3970 = vmul.f32 %v3941, 1.442695
        %v3971 = vpow.pop %v3970
        %v3972 = vmul.f32 %v3942, 1.442695
        %v3973 = vpow.pop %v3972
        %v3974 = vmul.f32 %v3943, 1.442695
        %v3975 = vpow.pop %v3974
        %v3976 = vmul.f32 %v3896, %v3945
        %v3977 = vmul.f32 %v3897, %v3947
        %v3978 = vmul.f32 %v3898, %v3949
        %v3979 = vmul.f32 %v3899, %v3951
        %v3980 = vmul.f32 %v3900, %v3953
        %v3981 = vmul.f32 %v3901, %v3955
        %v3982 = vmul.f32 %v3902, %v3957
        %v3983 = vmul.f32 %v3903, %v3959
        %v3984 = vmul.f32 %v3904, %v3961
        %v3985 = vmul.f32 %v3905, %v3963
        %v3986 = vmul.f32 %v3906, %v3965
        %v3987 = vmul.f32 %v3907, %v3967
        %v3988 = vmul.f32 %v3908, %v3969
        %v3989 = vmul.f32 %v3909, %v3971
        %v3990 = vmul.f32 %v3910, %v3973
        %v3991 = vmul.f32 %v3911, %v3975
        %v3992 = vsub.f32 1.0, %v3976
        %v3993 = vsub.f32 1.0, %v3977
        %v3994 = vsub.f32 1.0, %v3978
        %v3995 = vsub.f32 1.0, %v3979
        %v3996 = vsub.f32 1.0, %v3980
        %v3997 = vsub.f32 1.0, %v3981
        %v3998 = vsub.f32 1.0, %v3982
        %v3999 = vsub.f32 1.0, %v3983
        %v4000 = vsub.f32 1.0, %v3984
        %v4001 = vsub.f32 1.0, %v3985
        %v4002 = vsub.f32 1.0, %v3986
        %v4003 = vsub.f32 1.0, %v3987
        %v4004 = vsub.f32 1.0, %v3988
        %v4005 = vsub.f32 1.0, %v3989
        %v4006 = vsub.f32 1.0, %v3990
        %v4007 = vsub.f32 1.0, %v3991
        %vm4008 = vcmp.ge.f32.partialorder %v3672, 0.0
        %vm4009 = vcmp.ge.f32.partialorder %v3673, 0.0
        %vm4010 = vcmp.ge.f32.partialorder %v3674, 0.0
        %vm4011 = vcmp.ge.f32.partialorder %v3675, 0.0
        %vm4012 = vcmp.ge.f32.partialorder %v3676, 0.0
        %vm4013 = vcmp.ge.f32.partialorder %v3677, 0.0
        %vm4014 = vcmp.ge.f32.partialorder %v3678, 0.0
        %vm4015 = vcmp.ge.f32.partialorder %v3679, 0.0
        %vm4016 = vcmp.ge.f32.partialorder %v3680, 0.0
        %vm4017 = vcmp.ge.f32.partialorder %v3681, 0.0
        %vm4018 = vcmp.ge.f32.partialorder %v3682, 0.0
        %vm4019 = vcmp.ge.f32.partialorder %v3683, 0.0
        %vm4020 = vcmp.ge.f32.partialorder %v3684, 0.0
        %vm4021 = vcmp.ge.f32.partialorder %v3685, 0.0
        %vm4022 = vcmp.ge.f32.partialorder %v3686, 0.0
        %vm4023 = vcmp.ge.f32.partialorder %v3687, 0.0
        %v4024 = vsub.f32 0.0, %v3992
        %v4025 = vsub.f32 0.0, %v3993
        %v4026 = vsub.f32 0.0, %v3994
        %v4027 = vsub.f32 0.0, %v3995
        %v4028 = vsub.f32 0.0, %v3996
        %v4029 = vsub.f32 0.0, %v3997
        %v4030 = vsub.f32 0.0, %v3998
        %v4031 = vsub.f32 0.0, %v3999
        %v4032 = vsub.f32 0.0, %v4000
        %v4033 = vsub.f32 0.0, %v4001
        %v4034 = vsub.f32 0.0, %v4002
        %v4035 = vsub.f32 0.0, %v4003
        %v4036 = vsub.f32 0.0, %v4004
        %v4037 = vsub.f32 0.0, %v4005
        %v4038 = vsub.f32 0.0, %v4006
        %v4039 = vsub.f32 0.0, %v4007
        %v4040 = vsel %vm4008, %v3992, %v4024
        %v4041 = vsel %vm4009, %v3993, %v4025
        %v4042 = vsel %vm4010, %v3994, %v4026
        %v4043 = vsel %vm4011, %v3995, %v4027
        %v4044 = vsel %vm4012, %v3996, %v4028
        %v4045 = vsel %vm4013, %v3997, %v4029
        %v4046 = vsel %vm4014, %v3998, %v4030
        %v4047 = vsel %vm4015, %v3999, %v4031
        %v4048 = vsel %vm4016, %v4000, %v4032
        %v4049 = vsel %vm4017, %v4001, %v4033
        %v4050 = vsel %vm4018, %v4002, %v4034
        %v4051 = vsel %vm4019, %v4003, %v4035
        %v4052 = vsel %vm4020, %v4004, %v4036
        %v4053 = vsel %vm4021, %v4005, %v4037
        %v4054 = vsel %vm4022, %v4006, %v4038
        %v4055 = vsel %vm4023, %v4007, %v4039
        %v4056 = vadd.f32 %v4040, 1.0
        %v4057 = vadd.f32 %v4041, 1.0
        %v4058 = vadd.f32 %v4042, 1.0
        %v4059 = vadd.f32 %v4043, 1.0
        %v4060 = vadd.f32 %v4044, 1.0
        %v4061 = vadd.f32 %v4045, 1.0
        %v4062 = vadd.f32 %v4046, 1.0
        %v4063 = vadd.f32 %v4047, 1.0
        %v4064 = vadd.f32 %v4048, 1.0
        %v4065 = vadd.f32 %v4049, 1.0
        %v4066 = vadd.f32 %v4050, 1.0
        %v4067 = vadd.f32 %v4051, 1.0
        %v4068 = vadd.f32 %v4052, 1.0
        %v4069 = vadd.f32 %v4053, 1.0
        %v4070 = vadd.f32 %v4054, 1.0
        %v4071 = vadd.f32 %v4055, 1.0
        %v4072 = vmul.f32 %v3656, %v4056
        %v4073 = vmul.f32 %v3657, %v4057
        %v4074 = vmul.f32 %v3658, %v4058
        %v4075 = vmul.f32 %v3659, %v4059
        %v4076 = vmul.f32 %v3660, %v4060
        %v4077 = vmul.f32 %v3661, %v4061
        %v4078 = vmul.f32 %v3662, %v4062
        %v4079 = vmul.f32 %v3663, %v4063
        %v4080 = vmul.f32 %v3664, %v4064
        %v4081 = vmul.f32 %v3665, %v4065
        %v4082 = vmul.f32 %v3666, %v4066
        %v4083 = vmul.f32 %v3667, %v4067
        %v4084 = vmul.f32 %v3668, %v4068
        %v4085 = vmul.f32 %v3669, %v4069
        %v4086 = vmul.f32 %v3670, %v4070
        %v4087 = vmul.f32 %v3671, %v4071
        %v4088 = vpack.c.bf16 %v4080, %v4072
        %v4089 = vpack.c.bf16 %v4081, %v4073
        %v4090 = vpack.c.bf16 %v4082, %v4074
        %v4091 = vpack.c.bf16 %v4083, %v4075
        %v4092 = vpack.c.bf16 %v4084, %v4076
        %v4093 = vpack.c.bf16 %v4085, %v4077
        %v4094 = vpack.c.bf16 %v4086, %v4078
        %v4095 = vpack.c.bf16 %v4087, %v4079
        %v4096 = vld [vmem:[#allocation7] sm:$0xff]
        %v4097 = vld [vmem:[#allocation7 + $0x8] sm:$0xff]
        %v4098 = vld [vmem:[#allocation7 + $0x10] sm:$0xff]
        %v4099 = vld [vmem:[#allocation7 + $0x18] sm:$0xff]
        %v4100 = vld [vmem:[#allocation7 + $0x20] sm:$0xff]
        %v4101 = vld [vmem:[#allocation7 + $0x28] sm:$0xff]
        %v4102 = vld [vmem:[#allocation7 + $0x30] sm:$0xff]
        %v4103 = vld [vmem:[#allocation7 + $0x38] sm:$0xff]
        %v4104 = vld [vmem:[#allocation7 + $0x40] sm:$0xff]
        %v4105 = vld [vmem:[#allocation7 + $0x48] sm:$0xff]
        %v4106 = vld [vmem:[#allocation7 + $0x50] sm:$0xff]
        %v4107 = vld [vmem:[#allocation7 + $0x58] sm:$0xff]
        %v4108 = vld [vmem:[#allocation7 + $0x60] sm:$0xff]
        %v4109 = vld [vmem:[#allocation7 + $0x68] sm:$0xff]
        %v4110 = vld [vmem:[#allocation7 + $0x70] sm:$0xff]
        %v4111 = vld [vmem:[#allocation7 + $0x78] sm:$0xff]
        %v4112 = vld [vmem:[#allocation7 + $0x80] sm:$0xff]
        %v4113 = vld [vmem:[#allocation7 + $0x88] sm:$0xff]
        %v4114 = vld [vmem:[#allocation7 + $0x90] sm:$0xff]
        %v4115 = vld [vmem:[#allocation7 + $0x98] sm:$0xff]
        %v4116 = vld [vmem:[#allocation7 + $0xa0] sm:$0xff]
        %v4117 = vld [vmem:[#allocation7 + $0xa8] sm:$0xff]
        %v4118 = vld [vmem:[#allocation7 + $0xb0] sm:$0xff]
        %v4119 = vld [vmem:[#allocation7 + $0xb8] sm:$0xff]
        %v4120 = vld [vmem:[#allocation7 + $0xc0] sm:$0xff]
        %v4121 = vld [vmem:[#allocation7 + $0xc8] sm:$0xff]
        %v4122 = vld [vmem:[#allocation7 + $0xd0] sm:$0xff]
        %v4123 = vld [vmem:[#allocation7 + $0xd8] sm:$0xff]
        %v4124 = vld [vmem:[#allocation7 + $0xe0] sm:$0xff]
        %v4125 = vld [vmem:[#allocation7 + $0xe8] sm:$0xff]
        %v4126 = vld [vmem:[#allocation7 + $0xf0] sm:$0xff]
        %v4127 = vld [vmem:[#allocation7 + $0xf8] sm:$0xff]
        %v4128 = vld [vmem:[#allocation7 + $0x100] sm:$0xff]
        %v4129 = vld [vmem:[#allocation7 + $0x108] sm:$0xff]
        %v4130 = vld [vmem:[#allocation7 + $0x110] sm:$0xff]
        %v4131 = vld [vmem:[#allocation7 + $0x118] sm:$0xff]
        %v4132 = vld [vmem:[#allocation7 + $0x120] sm:$0xff]
        %v4133 = vld [vmem:[#allocation7 + $0x128] sm:$0xff]
        %v4134 = vld [vmem:[#allocation7 + $0x130] sm:$0xff]
        %v4135 = vld [vmem:[#allocation7 + $0x138] sm:$0xff]
        %v4136 = vld [vmem:[#allocation7 + $0x140] sm:$0xff]
        %v4137 = vld [vmem:[#allocation7 + $0x148] sm:$0xff]
        %v4138 = vld [vmem:[#allocation7 + $0x150] sm:$0xff]
        %v4139 = vld [vmem:[#allocation7 + $0x158] sm:$0xff]
        %v4140 = vld [vmem:[#allocation7 + $0x160] sm:$0xff]
        %v4141 = vld [vmem:[#allocation7 + $0x168] sm:$0xff]
        %v4142 = vld [vmem:[#allocation7 + $0x170] sm:$0xff]
        %v4143 = vld [vmem:[#allocation7 + $0x178] sm:$0xff]
        %v4144 = vld [vmem:[#allocation7 + $0x180] sm:$0xff]
        %v4145 = vld [vmem:[#allocation7 + $0x188] sm:$0xff]
        %v4146 = vld [vmem:[#allocation7 + $0x190] sm:$0xff]
        %v4147 = vld [vmem:[#allocation7 + $0x198] sm:$0xff]
        %v4148 = vld [vmem:[#allocation7 + $0x1a0] sm:$0xff]
        %v4149 = vld [vmem:[#allocation7 + $0x1a8] sm:$0xff]
        %v4150 = vld [vmem:[#allocation7 + $0x1b0] sm:$0xff]
        %v4151 = vld [vmem:[#allocation7 + $0x1b8] sm:$0xff]
        %v4152 = vld [vmem:[#allocation7 + $0x1c0] sm:$0xff]
        %v4153 = vld [vmem:[#allocation7 + $0x1c8] sm:$0xff]
        %v4154 = vld [vmem:[#allocation7 + $0x1d0] sm:$0xff]
        %v4155 = vld [vmem:[#allocation7 + $0x1d8] sm:$0xff]
        %v4156 = vld [vmem:[#allocation7 + $0x1e0] sm:$0xff]
        %v4157 = vld [vmem:[#allocation7 + $0x1e8] sm:$0xff]
        %v4158 = vld [vmem:[#allocation7 + $0x1f0] sm:$0xff]
        %v4159 = vld [vmem:[#allocation7 + $0x1f8] sm:$0xff]
        %v4160 = vld [vmem:[#allocation7 + $0x200] sm:$0xff]
        %v4161 = vld [vmem:[#allocation7 + $0x208] sm:$0xff]
        %v4162 = vld [vmem:[#allocation7 + $0x210] sm:$0xff]
        %v4163 = vld [vmem:[#allocation7 + $0x218] sm:$0xff]
        %v4164 = vld [vmem:[#allocation7 + $0x220] sm:$0xff]
        %v4165 = vld [vmem:[#allocation7 + $0x228] sm:$0xff]
        %v4166 = vld [vmem:[#allocation7 + $0x230] sm:$0xff]
        %v4167 = vld [vmem:[#allocation7 + $0x238] sm:$0xff]
        %v4168 = vld [vmem:[#allocation7 + $0x240] sm:$0xff]
        %v4169 = vld [vmem:[#allocation7 + $0x248] sm:$0xff]
        %v4170 = vld [vmem:[#allocation7 + $0x250] sm:$0xff]
        %v4171 = vld [vmem:[#allocation7 + $0x258] sm:$0xff]
        %v4172 = vld [vmem:[#allocation7 + $0x260] sm:$0xff]
        %v4173 = vld [vmem:[#allocation7 + $0x268] sm:$0xff]
        %v4174 = vld [vmem:[#allocation7 + $0x270] sm:$0xff]
        %v4175 = vld [vmem:[#allocation7 + $0x278] sm:$0xff]
        %v4176 = vld [vmem:[#allocation7 + $0x280] sm:$0xff]
        %v4177 = vld [vmem:[#allocation7 + $0x288] sm:$0xff]
        %v4178 = vld [vmem:[#allocation7 + $0x290] sm:$0xff]
        %v4179 = vld [vmem:[#allocation7 + $0x298] sm:$0xff]
        %v4180 = vld [vmem:[#allocation7 + $0x2a0] sm:$0xff]
        %v4181 = vld [vmem:[#allocation7 + $0x2a8] sm:$0xff]
        %v4182 = vld [vmem:[#allocation7 + $0x2b0] sm:$0xff]
        %v4183 = vld [vmem:[#allocation7 + $0x2b8] sm:$0xff]
        %v4184 = vld [vmem:[#allocation7 + $0x2c0] sm:$0xff]
        %v4185 = vld [vmem:[#allocation7 + $0x2c8] sm:$0xff]
        %v4186 = vld [vmem:[#allocation7 + $0x2d0] sm:$0xff]
        %v4187 = vld [vmem:[#allocation7 + $0x2d8] sm:$0xff]
        %v4188 = vld [vmem:[#allocation7 + $0x2e0] sm:$0xff]
        %v4189 = vld [vmem:[#allocation7 + $0x2e8] sm:$0xff]
        %v4190 = vld [vmem:[#allocation7 + $0x2f0] sm:$0xff]
        %v4191 = vld [vmem:[#allocation7 + $0x2f8] sm:$0xff]
        %v4192 = vld [vmem:[#allocation7 + $0x300] sm:$0xff]
        %v4193 = vld [vmem:[#allocation7 + $0x308] sm:$0xff]
        %v4194 = vld [vmem:[#allocation7 + $0x310] sm:$0xff]
        %v4195 = vld [vmem:[#allocation7 + $0x318] sm:$0xff]
        %v4196 = vld [vmem:[#allocation7 + $0x320] sm:$0xff]
        %v4197 = vld [vmem:[#allocation7 + $0x328] sm:$0xff]
        %v4198 = vld [vmem:[#allocation7 + $0x330] sm:$0xff]
        %v4199 = vld [vmem:[#allocation7 + $0x338] sm:$0xff]
        %v4200 = vld [vmem:[#allocation7 + $0x340] sm:$0xff]
        %v4201 = vld [vmem:[#allocation7 + $0x348] sm:$0xff]
        %v4202 = vld [vmem:[#allocation7 + $0x350] sm:$0xff]
        %v4203 = vld [vmem:[#allocation7 + $0x358] sm:$0xff]
        %v4204 = vld [vmem:[#allocation7 + $0x360] sm:$0xff]
        %v4205 = vld [vmem:[#allocation7 + $0x368] sm:$0xff]
        %v4206 = vld [vmem:[#allocation7 + $0x370] sm:$0xff]
        %v4207 = vld [vmem:[#allocation7 + $0x378] sm:$0xff]
        %v4208 = vld [vmem:[#allocation7 + $0x380] sm:$0xff]
        %v4209 = vld [vmem:[#allocation7 + $0x388] sm:$0xff]
        %v4210 = vld [vmem:[#allocation7 + $0x390] sm:$0xff]
        %v4211 = vld [vmem:[#allocation7 + $0x398] sm:$0xff]
        %v4212 = vld [vmem:[#allocation7 + $0x3a0] sm:$0xff]
        %v4213 = vld [vmem:[#allocation7 + $0x3a8] sm:$0xff]
        %v4214 = vld [vmem:[#allocation7 + $0x3b0] sm:$0xff]
        %v4215 = vld [vmem:[#allocation7 + $0x3b8] sm:$0xff]
        %v4216 = vld [vmem:[#allocation7 + $0x3c0] sm:$0xff]
        %v4217 = vld [vmem:[#allocation7 + $0x3c8] sm:$0xff]
        %v4218 = vld [vmem:[#allocation7 + $0x3d0] sm:$0xff]
        %v4219 = vld [vmem:[#allocation7 + $0x3d8] sm:$0xff]
        %v4220 = vld [vmem:[#allocation7 + $0x3e0] sm:$0xff]
        %v4221 = vld [vmem:[#allocation7 + $0x3e8] sm:$0xff]
        %v4222 = vld [vmem:[#allocation7 + $0x3f0] sm:$0xff]
        %v4223 = vld [vmem:[#allocation7 + $0x3f8] sm:$0xff]
        %v4224 = vld [vmem:[%s12] sm:$0x3]
        %v4226 = vlaneseq
        %v4227 = vshrl.u32 %v4226, 7
        %v4228 = vsub.s32 0, %v4227
        %v4229 = vrot.slane %v4224, %v4228
        %v4230 = vlaneseq
        %v4231 = vshrl.u32 %v4230, 7
        %v4232 = vsub.s32 1, %v4231
        %v4233 = vrot.slane %v4224, %v4232
        %v4364 = vunpack.c.l.b16 %v4096
        %v4365 = vunpack.c.h.b16 %v4096
        %v4366 = vunpack.c.l.b16 %v4097
        %v4367 = vunpack.c.h.b16 %v4097
        %v4368 = vunpack.c.l.b16 %v4098
        %v4369 = vunpack.c.h.b16 %v4098
        %v4370 = vunpack.c.l.b16 %v4099
        %v4371 = vunpack.c.h.b16 %v4099
        %v4372 = vunpack.c.l.b16 %v4100
        %v4373 = vunpack.c.h.b16 %v4100
        %v4374 = vunpack.c.l.b16 %v4101
        %v4375 = vunpack.c.h.b16 %v4101
        %v4376 = vunpack.c.l.b16 %v4102
        %v4377 = vunpack.c.h.b16 %v4102
        %v4378 = vunpack.c.l.b16 %v4103
        %v4379 = vunpack.c.h.b16 %v4103
        %v4380 = vunpack.c.l.b16 %v4104
        %v4381 = vunpack.c.h.b16 %v4104
        %v4382 = vunpack.c.l.b16 %v4105
        %v4383 = vunpack.c.h.b16 %v4105
        %v4384 = vunpack.c.l.b16 %v4106
        %v4385 = vunpack.c.h.b16 %v4106
        %v4386 = vunpack.c.l.b16 %v4107
        %v4387 = vunpack.c.h.b16 %v4107
        %v4388 = vunpack.c.l.b16 %v4108
        %v4389 = vunpack.c.h.b16 %v4108
        %v4390 = vunpack.c.l.b16 %v4109
        %v4391 = vunpack.c.h.b16 %v4109
        %v4392 = vunpack.c.l.b16 %v4110
        %v4393 = vunpack.c.h.b16 %v4110
        %v4394 = vunpack.c.l.b16 %v4111
        %v4395 = vunpack.c.h.b16 %v4111
        %v4396 = vunpack.c.l.b16 %v4112
        %v4397 = vunpack.c.h.b16 %v4112
        %v4398 = vunpack.c.l.b16 %v4113
        %v4399 = vunpack.c.h.b16 %v4113
        %v4400 = vunpack.c.l.b16 %v4114
        %v4401 = vunpack.c.h.b16 %v4114
        %v4402 = vunpack.c.l.b16 %v4115
        %v4403 = vunpack.c.h.b16 %v4115
        %v4404 = vunpack.c.l.b16 %v4116
        %v4405 = vunpack.c.h.b16 %v4116
        %v4406 = vunpack.c.l.b16 %v4117
        %v4407 = vunpack.c.h.b16 %v4117
        %v4408 = vunpack.c.l.b16 %v4118
        %v4409 = vunpack.c.h.b16 %v4118
        %v4410 = vunpack.c.l.b16 %v4119
        %v4411 = vunpack.c.h.b16 %v4119
        %v4412 = vunpack.c.l.b16 %v4120
        %v4413 = vunpack.c.h.b16 %v4120
        %v4414 = vunpack.c.l.b16 %v4121
        %v4415 = vunpack.c.h.b16 %v4121
        %v4416 = vunpack.c.l.b16 %v4122
        %v4417 = vunpack.c.h.b16 %v4122
        %v4418 = vunpack.c.l.b16 %v4123
        %v4419 = vunpack.c.h.b16 %v4123
        %v4420 = vunpack.c.l.b16 %v4124
        %v4421 = vunpack.c.h.b16 %v4124
        %v4422 = vunpack.c.l.b16 %v4125
        %v4423 = vunpack.c.h.b16 %v4125
        %v4424 = vunpack.c.l.b16 %v4126
        %v4425 = vunpack.c.h.b16 %v4126
        %v4426 = vunpack.c.l.b16 %v4127
        %v4427 = vunpack.c.h.b16 %v4127
        %v4428 = vunpack.c.l.b16 %v4128
        %v4429 = vunpack.c.h.b16 %v4128
        %v4430 = vunpack.c.l.b16 %v4129
        %v4431 = vunpack.c.h.b16 %v4129
        %v4432 = vunpack.c.l.b16 %v4130
        %v4433 = vunpack.c.h.b16 %v4130
        %v4434 = vunpack.c.l.b16 %v4131
        %v4435 = vunpack.c.h.b16 %v4131
        %v4436 = vunpack.c.l.b16 %v4132
        %v4437 = vunpack.c.h.b16 %v4132
        %v4438 = vunpack.c.l.b16 %v4133
        %v4439 = vunpack.c.h.b16 %v4133
        %v4440 = vunpack.c.l.b16 %v4134
        %v4441 = vunpack.c.h.b16 %v4134
        %v4442 = vunpack.c.l.b16 %v4135
        %v4443 = vunpack.c.h.b16 %v4135
        %v4444 = vunpack.c.l.b16 %v4136
        %v4445 = vunpack.c.h.b16 %v4136
        %v4446 = vunpack.c.l.b16 %v4137
        %v4447 = vunpack.c.h.b16 %v4137
        %v4448 = vunpack.c.l.b16 %v4138
        %v4449 = vunpack.c.h.b16 %v4138
        %v4450 = vunpack.c.l.b16 %v4139
        %v4451 = vunpack.c.h.b16 %v4139
        %v4452 = vunpack.c.l.b16 %v4140
        %v4453 = vunpack.c.h.b16 %v4140
        %v4454 = vunpack.c.l.b16 %v4141
        %v4455 = vunpack.c.h.b16 %v4141
        %v4456 = vunpack.c.l.b16 %v4142
        %v4457 = vunpack.c.h.b16 %v4142
        %v4458 = vunpack.c.l.b16 %v4143
        %v4459 = vunpack.c.h.b16 %v4143
        %v4460 = vunpack.c.l.b16 %v4144
        %v4461 = vunpack.c.h.b16 %v4144
        %v4462 = vunpack.c.l.b16 %v4145
        %v4463 = vunpack.c.h.b16 %v4145
        %v4464 = vunpack.c.l.b16 %v4146
        %v4465 = vunpack.c.h.b16 %v4146
        %v4466 = vunpack.c.l.b16 %v4147
        %v4467 = vunpack.c.h.b16 %v4147
        %v4468 = vunpack.c.l.b16 %v4148
        %v4469 = vunpack.c.h.b16 %v4148
        %v4470 = vunpack.c.l.b16 %v4149
        %v4471 = vunpack.c.h.b16 %v4149
        %v4472 = vunpack.c.l.b16 %v4150
        %v4473 = vunpack.c.h.b16 %v4150
        %v4474 = vunpack.c.l.b16 %v4151
        %v4475 = vunpack.c.h.b16 %v4151
        %v4476 = vunpack.c.l.b16 %v4152
        %v4477 = vunpack.c.h.b16 %v4152
        %v4478 = vunpack.c.l.b16 %v4153
        %v4479 = vunpack.c.h.b16 %v4153
        %v4480 = vunpack.c.l.b16 %v4154
        %v4481 = vunpack.c.h.b16 %v4154
        %v4482 = vunpack.c.l.b16 %v4155
        %v4483 = vunpack.c.h.b16 %v4155
        %v4484 = vunpack.c.l.b16 %v4156
        %v4485 = vunpack.c.h.b16 %v4156
        %v4486 = vunpack.c.l.b16 %v4157
        %v4487 = vunpack.c.h.b16 %v4157
        %v4488 = vunpack.c.l.b16 %v4158
        %v4489 = vunpack.c.h.b16 %v4158
        %v4490 = vunpack.c.l.b16 %v4159
        %v4491 = vunpack.c.h.b16 %v4159
        %v4492 = vunpack.c.l.b16 %v4160
        %v4493 = vunpack.c.h.b16 %v4160
        %v4494 = vunpack.c.l.b16 %v4161
        %v4495 = vunpack.c.h.b16 %v4161
        %v4496 = vunpack.c.l.b16 %v4162
        %v4497 = vunpack.c.h.b16 %v4162
        %v4498 = vunpack.c.l.b16 %v4163
        %v4499 = vunpack.c.h.b16 %v4163
        %v4500 = vunpack.c.l.b16 %v4164
        %v4501 = vunpack.c.h.b16 %v4164
        %v4502 = vunpack.c.l.b16 %v4165
        %v4503 = vunpack.c.h.b16 %v4165
        %v4504 = vunpack.c.l.b16 %v4166
        %v4505 = vunpack.c.h.b16 %v4166
        %v4506 = vunpack.c.l.b16 %v4167
        %v4507 = vunpack.c.h.b16 %v4167
        %v4508 = vunpack.c.l.b16 %v4168
        %v4509 = vunpack.c.h.b16 %v4168
        %v4510 = vunpack.c.l.b16 %v4169
        %v4511 = vunpack.c.h.b16 %v4169
        %v4512 = vunpack.c.l.b16 %v4170
        %v4513 = vunpack.c.h.b16 %v4170
        %v4514 = vunpack.c.l.b16 %v4171
        %v4515 = vunpack.c.h.b16 %v4171
        %v4516 = vunpack.c.l.b16 %v4172
        %v4517 = vunpack.c.h.b16 %v4172
        %v4518 = vunpack.c.l.b16 %v4173
        %v4519 = vunpack.c.h.b16 %v4173
        %v4520 = vunpack.c.l.b16 %v4174
        %v4521 = vunpack.c.h.b16 %v4174
        %v4522 = vunpack.c.l.b16 %v4175
        %v4523 = vunpack.c.h.b16 %v4175
        %v4524 = vunpack.c.l.b16 %v4176
        %v4525 = vunpack.c.h.b16 %v4176
        %v4526 = vunpack.c.l.b16 %v4177
        %v4527 = vunpack.c.h.b16 %v4177
        %v4528 = vunpack.c.l.b16 %v4178
        %v4529 = vunpack.c.h.b16 %v4178
        %v4530 = vunpack.c.l.b16 %v4179
        %v4531 = vunpack.c.h.b16 %v4179
        %v4532 = vunpack.c.l.b16 %v4180
        %v4533 = vunpack.c.h.b16 %v4180
        %v4534 = vunpack.c.l.b16 %v4181
        %v4535 = vunpack.c.h.b16 %v4181
        %v4536 = vunpack.c.l.b16 %v4182
        %v4537 = vunpack.c.h.b16 %v4182
        %v4538 = vunpack.c.l.b16 %v4183
        %v4539 = vunpack.c.h.b16 %v4183
        %v4540 = vunpack.c.l.b16 %v4184
        %v4541 = vunpack.c.h.b16 %v4184
        %v4542 = vunpack.c.l.b16 %v4185
        %v4543 = vunpack.c.h.b16 %v4185
        %v4544 = vunpack.c.l.b16 %v4186
        %v4545 = vunpack.c.h.b16 %v4186
        %v4546 = vunpack.c.l.b16 %v4187
        %v4547 = vunpack.c.h.b16 %v4187
        %v4548 = vunpack.c.l.b16 %v4188
        %v4549 = vunpack.c.h.b16 %v4188
        %v4550 = vunpack.c.l.b16 %v4189
        %v4551 = vunpack.c.h.b16 %v4189
        %v4552 = vunpack.c.l.b16 %v4190
        %v4553 = vunpack.c.h.b16 %v4190
        %v4554 = vunpack.c.l.b16 %v4191
        %v4555 = vunpack.c.h.b16 %v4191
        %v4556 = vunpack.c.l.b16 %v4192
        %v4557 = vunpack.c.h.b16 %v4192
        %v4558 = vunpack.c.l.b16 %v4193
        %v4559 = vunpack.c.h.b16 %v4193
        %v4560 = vunpack.c.l.b16 %v4194
        %v4561 = vunpack.c.h.b16 %v4194
        %v4562 = vunpack.c.l.b16 %v4195
        %v4563 = vunpack.c.h.b16 %v4195
        %v4564 = vunpack.c.l.b16 %v4196
        %v4565 = vunpack.c.h.b16 %v4196
        %v4566 = vunpack.c.l.b16 %v4197
        %v4567 = vunpack.c.h.b16 %v4197
        %v4568 = vunpack.c.l.b16 %v4198
        %v4569 = vunpack.c.h.b16 %v4198
        %v4570 = vunpack.c.l.b16 %v4199
        %v4571 = vunpack.c.h.b16 %v4199
        %v4572 = vunpack.c.l.b16 %v4200
        %v4573 = vunpack.c.h.b16 %v4200
        %v4574 = vunpack.c.l.b16 %v4201
        %v4575 = vunpack.c.h.b16 %v4201
        %v4576 = vunpack.c.l.b16 %v4202
        %v4577 = vunpack.c.h.b16 %v4202
        %v4578 = vunpack.c.l.b16 %v4203
        %v4579 = vunpack.c.h.b16 %v4203
        %v4580 = vunpack.c.l.b16 %v4204
        %v4581 = vunpack.c.h.b16 %v4204
        %v4582 = vunpack.c.l.b16 %v4205
        %v4583 = vunpack.c.h.b16 %v4205
        %v4584 = vunpack.c.l.b16 %v4206
        %v4585 = vunpack.c.h.b16 %v4206
        %v4586 = vunpack.c.l.b16 %v4207
        %v4587 = vunpack.c.h.b16 %v4207
        %v4588 = vunpack.c.l.b16 %v4208
        %v4589 = vunpack.c.h.b16 %v4208
        %v4590 = vunpack.c.l.b16 %v4209
        %v4591 = vunpack.c.h.b16 %v4209
        %v4592 = vunpack.c.l.b16 %v4210
        %v4593 = vunpack.c.h.b16 %v4210
        %v4594 = vunpack.c.l.b16 %v4211
        %v4595 = vunpack.c.h.b16 %v4211
        %v4596 = vunpack.c.l.b16 %v4212
        %v4597 = vunpack.c.h.b16 %v4212
        %v4598 = vunpack.c.l.b16 %v4213
        %v4599 = vunpack.c.h.b16 %v4213
        %v4600 = vunpack.c.l.b16 %v4214
        %v4601 = vunpack.c.h.b16 %v4214
        %v4602 = vunpack.c.l.b16 %v4215
        %v4603 = vunpack.c.h.b16 %v4215
        %v4604 = vunpack.c.l.b16 %v4216
        %v4605 = vunpack.c.h.b16 %v4216
        %v4606 = vunpack.c.l.b16 %v4217
        %v4607 = vunpack.c.h.b16 %v4217
        %v4608 = vunpack.c.l.b16 %v4218
        %v4609 = vunpack.c.h.b16 %v4218
        %v4610 = vunpack.c.l.b16 %v4219
        %v4611 = vunpack.c.h.b16 %v4219
        %v4612 = vunpack.c.l.b16 %v4220
        %v4613 = vunpack.c.h.b16 %v4220
        %v4614 = vunpack.c.l.b16 %v4221
        %v4615 = vunpack.c.h.b16 %v4221
        %v4616 = vunpack.c.l.b16 %v4222
        %v4617 = vunpack.c.h.b16 %v4222
        %v4618 = vunpack.c.l.b16 %v4223
        %v4619 = vunpack.c.h.b16 %v4223
        %v4620 = vpack.c.b16 %v4366, %v4364
        %v4621 = vpack.c.b16 %v4367, %v4365
        %v4622 = vpack.c.b16 %v4370, %v4368
        %v4623 = vpack.c.b16 %v4371, %v4369
        %v4624 = vpack.c.b16 %v4374, %v4372
        %v4625 = vpack.c.b16 %v4375, %v4373
        %v4626 = vpack.c.b16 %v4378, %v4376
        %v4627 = vpack.c.b16 %v4379, %v4377
        %v4628 = vpack.c.b16 %v4382, %v4380
        %v4629 = vpack.c.b16 %v4383, %v4381
        %v4630 = vpack.c.b16 %v4386, %v4384
        %v4631 = vpack.c.b16 %v4387, %v4385
        %v4632 = vpack.c.b16 %v4390, %v4388
        %v4633 = vpack.c.b16 %v4391, %v4389
        %v4634 = vpack.c.b16 %v4394, %v4392
        %v4635 = vpack.c.b16 %v4395, %v4393
        %v4636 = vpack.c.b16 %v4398, %v4396
        %v4637 = vpack.c.b16 %v4399, %v4397
        %v4638 = vpack.c.b16 %v4402, %v4400
        %v4639 = vpack.c.b16 %v4403, %v4401
        %v4640 = vpack.c.b16 %v4406, %v4404
        %v4641 = vpack.c.b16 %v4407, %v4405
        %v4642 = vpack.c.b16 %v4410, %v4408
        %v4643 = vpack.c.b16 %v4411, %v4409
        %v4644 = vpack.c.b16 %v4414, %v4412
        %v4645 = vpack.c.b16 %v4415, %v4413
        %v4646 = vpack.c.b16 %v4418, %v4416
        %v4647 = vpack.c.b16 %v4419, %v4417
        %v4648 = vpack.c.b16 %v4422, %v4420
        %v4649 = vpack.c.b16 %v4423, %v4421
        %v4650 = vpack.c.b16 %v4426, %v4424
        %v4651 = vpack.c.b16 %v4427, %v4425
        %v4652 = vpack.c.b16 %v4430, %v4428
        %v4653 = vpack.c.b16 %v4431, %v4429
        %v4654 = vpack.c.b16 %v4434, %v4432
        %v4655 = vpack.c.b16 %v4435, %v4433
        %v4656 = vpack.c.b16 %v4438, %v4436
        %v4657 = vpack.c.b16 %v4439, %v4437
        %v4658 = vpack.c.b16 %v4442, %v4440
        %v4659 = vpack.c.b16 %v4443, %v4441
        %v4660 = vpack.c.b16 %v4446, %v4444
        %v4661 = vpack.c.b16 %v4447, %v4445
        %v4662 = vpack.c.b16 %v4450, %v4448
        %v4663 = vpack.c.b16 %v4451, %v4449
        %v4664 = vpack.c.b16 %v4454, %v4452
        %v4665 = vpack.c.b16 %v4455, %v4453
        %v4666 = vpack.c.b16 %v4458, %v4456
        %v4667 = vpack.c.b16 %v4459, %v4457
        %v4668 = vpack.c.b16 %v4462, %v4460
        %v4669 = vpack.c.b16 %v4463, %v4461
        %v4670 = vpack.c.b16 %v4466, %v4464
        %v4671 = vpack.c.b16 %v4467, %v4465
        %v4672 = vpack.c.b16 %v4470, %v4468
        %v4673 = vpack.c.b16 %v4471, %v4469
        %v4674 = vpack.c.b16 %v4474, %v4472
        %v4675 = vpack.c.b16 %v4475, %v4473
        %v4676 = vpack.c.b16 %v4478, %v4476
        %v4677 = vpack.c.b16 %v4479, %v4477
        %v4678 = vpack.c.b16 %v4482, %v4480
        %v4679 = vpack.c.b16 %v4483, %v4481
        %v4680 = vpack.c.b16 %v4486, %v4484
        %v4681 = vpack.c.b16 %v4487, %v4485
        %v4682 = vpack.c.b16 %v4490, %v4488
        %v4683 = vpack.c.b16 %v4491, %v4489
        %v4684 = vpack.c.b16 %v4494, %v4492
        %v4685 = vpack.c.b16 %v4495, %v4493
        %v4686 = vpack.c.b16 %v4498, %v4496
        %v4687 = vpack.c.b16 %v4499, %v4497
        %v4688 = vpack.c.b16 %v4502, %v4500
        %v4689 = vpack.c.b16 %v4503, %v4501
        %v4690 = vpack.c.b16 %v4506, %v4504
        %v4691 = vpack.c.b16 %v4507, %v4505
        %v4692 = vpack.c.b16 %v4510, %v4508
        %v4693 = vpack.c.b16 %v4511, %v4509
        %v4694 = vpack.c.b16 %v4514, %v4512
        %v4695 = vpack.c.b16 %v4515, %v4513
        %v4696 = vpack.c.b16 %v4518, %v4516
        %v4697 = vpack.c.b16 %v4519, %v4517
        %v4698 = vpack.c.b16 %v4522, %v4520
        %v4699 = vpack.c.b16 %v4523, %v4521
        %v4700 = vpack.c.b16 %v4526, %v4524
        %v4701 = vpack.c.b16 %v4527, %v4525
        %v4702 = vpack.c.b16 %v4530, %v4528
        %v4703 = vpack.c.b16 %v4531, %v4529
        %v4704 = vpack.c.b16 %v4534, %v4532
        %v4705 = vpack.c.b16 %v4535, %v4533
        %v4706 = vpack.c.b16 %v4538, %v4536
        %v4707 = vpack.c.b16 %v4539, %v4537
        %v4708 = vpack.c.b16 %v4542, %v4540
        %v4709 = vpack.c.b16 %v4543, %v4541
        %v4710 = vpack.c.b16 %v4546, %v4544
        %v4711 = vpack.c.b16 %v4547, %v4545
        %v4712 = vpack.c.b16 %v4550, %v4548
        %v4713 = vpack.c.b16 %v4551, %v4549
        %v4714 = vpack.c.b16 %v4554, %v4552
        %v4715 = vpack.c.b16 %v4555, %v4553
        %v4716 = vpack.c.b16 %v4558, %v4556
        %v4717 = vpack.c.b16 %v4559, %v4557
        %v4718 = vpack.c.b16 %v4562, %v4560
        %v4719 = vpack.c.b16 %v4563, %v4561
        %v4720 = vpack.c.b16 %v4566, %v4564
        %v4721 = vpack.c.b16 %v4567, %v4565
        %v4722 = vpack.c.b16 %v4570, %v4568
        %v4723 = vpack.c.b16 %v4571, %v4569
        %v4724 = vpack.c.b16 %v4574, %v4572
        %v4725 = vpack.c.b16 %v4575, %v4573
        %v4726 = vpack.c.b16 %v4578, %v4576
        %v4727 = vpack.c.b16 %v4579, %v4577
        %v4728 = vpack.c.b16 %v4582, %v4580
        %v4729 = vpack.c.b16 %v4583, %v4581
        %v4730 = vpack.c.b16 %v4586, %v4584
        %v4731 = vpack.c.b16 %v4587, %v4585
        %v4732 = vpack.c.b16 %v4590, %v4588
        %v4733 = vpack.c.b16 %v4591, %v4589
        %v4734 = vpack.c.b16 %v4594, %v4592
        %v4735 = vpack.c.b16 %v4595, %v4593
        %v4736 = vpack.c.b16 %v4598, %v4596
        %v4737 = vpack.c.b16 %v4599, %v4597
        %v4738 = vpack.c.b16 %v4602, %v4600
        %v4739 = vpack.c.b16 %v4603, %v4601
        %v4740 = vpack.c.b16 %v4606, %v4604
        %v4741 = vpack.c.b16 %v4607, %v4605
        %v4742 = vpack.c.b16 %v4610, %v4608
        %v4743 = vpack.c.b16 %v4611, %v4609
        %v4744 = vpack.c.b16 %v4614, %v4612
        %v4745 = vpack.c.b16 %v4615, %v4613
        %v4746 = vpack.c.b16 %v4618, %v4616
        %v4747 = vpack.c.b16 %v4619, %v4617
        %4876 = vmatprep.subr.bf16.mxu0 %v4621
        %4877 = vmatpush1.bf16.msra.mxu0 %v4620
        %4878 = vmatprep.subr.bf16.mxu0 %v4623
        %4879 = vmatpush1.bf16.msra.mxu0 %v4622
        %4880 = vmatprep.subr.bf16.mxu0 %v4625
        %4881 = vmatpush1.bf16.msra.mxu0 %v4624
        %4882 = vmatprep.subr.bf16.mxu0 %v4627
        %4883 = vmatpush1.bf16.msra.mxu0 %v4626
        %4884 = vmatprep.subr.bf16.mxu0 %v4629
        %4885 = vmatpush1.bf16.msra.mxu0 %v4628
        %4886 = vmatprep.subr.bf16.mxu0 %v4631
        %4887 = vmatpush1.bf16.msra.mxu0 %v4630
        %4888 = vmatprep.subr.bf16.mxu0 %v4633
        %4889 = vmatpush1.bf16.msra.mxu0 %v4632
        %4890 = vmatprep.subr.bf16.mxu0 %v4635
        %4891 = vmatpush1.bf16.msra.mxu0 %v4634
        %4892 = vmatprep.subr.bf16.mxu0 %v4637
        %4893 = vmatpush1.bf16.msra.mxu0 %v4636
        %4894 = vmatprep.subr.bf16.mxu0 %v4639
        %4895 = vmatpush1.bf16.msra.mxu0 %v4638
        %4896 = vmatprep.subr.bf16.mxu0 %v4641
        %4897 = vmatpush1.bf16.msra.mxu0 %v4640
        %4898 = vmatprep.subr.bf16.mxu0 %v4643
        %4899 = vmatpush1.bf16.msra.mxu0 %v4642
        %4900 = vmatprep.subr.bf16.mxu0 %v4645
        %4901 = vmatpush1.bf16.msra.mxu0 %v4644
        %4902 = vmatprep.subr.bf16.mxu0 %v4647
        %4903 = vmatpush1.bf16.msra.mxu0 %v4646
        %4904 = vmatprep.subr.bf16.mxu0 %v4649
        %4905 = vmatpush1.bf16.msra.mxu0 %v4648
        %4906 = vmatprep.subr.bf16.mxu0 %v4651
        %4907 = vmatpush1.bf16.msra.mxu0 %v4650
        %4908 = vmatprep.mubr.bf16.mxu0 %v4089
        %4909 = vmatmul.mubr.bf16.gmra.mrb[0].mxu0 %v4088
        %v4910 = vpop.f32.mrb[0].mxu0
        %v4911 = vadd.f32 %v4229, %v4910
        %v4912 = vpop.f32.mrb[0].mxu0
        %v4913 = vadd.f32 %v4233, %v4912
        %v4914 = vpop.f32.mrb[0].mxu0
        %v4915 = vadd.f32 %v4229, %v4914
        %v4916 = vpop.f32.mrb[0].mxu0
        %v4917 = vadd.f32 %v4233, %v4916
        %4918 = vdwg.mxu0
        %4919 = vmatprep.subr.bf16.mxu0 %v4653
        %4920 = vmatpush1.bf16.msra.mxu0 %v4652
        %4921 = vmatprep.subr.bf16.mxu0 %v4655
        %4922 = vmatpush1.bf16.msra.mxu0 %v4654
        %4923 = vmatprep.subr.bf16.mxu0 %v4657
        %4924 = vmatpush1.bf16.msra.mxu0 %v4656
        %4925 = vmatprep.subr.bf16.mxu0 %v4659
        %4926 = vmatpush1.bf16.msra.mxu0 %v4658
        %4927 = vmatprep.subr.bf16.mxu0 %v4661
        %4928 = vmatpush1.bf16.msra.mxu0 %v4660
        %4929 = vmatprep.subr.bf16.mxu0 %v4663
        %4930 = vmatpush1.bf16.msra.mxu0 %v4662
        %4931 = vmatprep.subr.bf16.mxu0 %v4665
        %4932 = vmatpush1.bf16.msra.mxu0 %v4664
        %4933 = vmatprep.subr.bf16.mxu0 %v4667
        %4934 = vmatpush1.bf16.msra.mxu0 %v4666
        %4935 = vmatprep.subr.bf16.mxu0 %v4669
        %4936 = vmatpush1.bf16.msra.mxu0 %v4668
        %4937 = vmatprep.subr.bf16.mxu0 %v4671
        %4938 = vmatpush1.bf16.msra.mxu0 %v4670
        %4939 = vmatprep.subr.bf16.mxu0 %v4673
        %4940 = vmatpush1.bf16.msra.mxu0 %v4672
        %4941 = vmatprep.subr.bf16.mxu0 %v4675
        %4942 = vmatpush1.bf16.msra.mxu0 %v4674
        %4943 = vmatprep.subr.bf16.mxu0 %v4677
        %4944 = vmatpush1.bf16.msra.mxu0 %v4676
        %4945 = vmatprep.subr.bf16.mxu0 %v4679
        %4946 = vmatpush1.bf16.msra.mxu0 %v4678
        %4947 = vmatprep.subr.bf16.mxu0 %v4681
        %4948 = vmatpush1.bf16.msra.mxu0 %v4680
        %4949 = vmatprep.subr.bf16.mxu0 %v4683
        %4950 = vmatpush1.bf16.msra.mxu0 %v4682
        %4951 = vmatprep.mubr.bf16.mxu0 %v4091
        %4952 = vmatmul.mubr.bf16.gmra.mrb[0].mxu0 %v4090
        %v4953 = vpop.f32.mrb[0].mxu0
        %v4954 = vadd.f32 %v4911, %v4953
        %v4955 = vpop.f32.mrb[0].mxu0
        %v4956 = vadd.f32 %v4913, %v4955
        %v4957 = vpop.f32.mrb[0].mxu0
        %v4958 = vadd.f32 %v4915, %v4957
        %v4959 = vpop.f32.mrb[0].mxu0
        %v4960 = vadd.f32 %v4917, %v4959
        %4961 = vdwg.mxu0
        %4962 = vmatprep.subr.bf16.mxu0 %v4685
        %4963 = vmatpush1.bf16.msra.mxu0 %v4684
        %4964 = vmatprep.subr.bf16.mxu0 %v4687
        %4965 = vmatpush1.bf16.msra.mxu0 %v4686
        %4966 = vmatprep.subr.bf16.mxu0 %v4689
        %4967 = vmatpush1.bf16.msra.mxu0 %v4688
        %4968 = vmatprep.subr.bf16.mxu0 %v4691
        %4969 = vmatpush1.bf16.msra.mxu0 %v4690
        %4970 = vmatprep.subr.bf16.mxu0 %v4693
        %4971 = vmatpush1.bf16.msra.mxu0 %v4692
        %4972 = vmatprep.subr.bf16.mxu0 %v4695
        %4973 = vmatpush1.bf16.msra.mxu0 %v4694
        %4974 = vmatprep.subr.bf16.mxu0 %v4697
        %4975 = vmatpush1.bf16.msra.mxu0 %v4696
        %4976 = vmatprep.subr.bf16.mxu0 %v4699
        %4977 = vmatpush1.bf16.msra.mxu0 %v4698
        %4978 = vmatprep.subr.bf16.mxu0 %v4701
        %4979 = vmatpush1.bf16.msra.mxu0 %v4700
        %4980 = vmatprep.subr.bf16.mxu0 %v4703
        %4981 = vmatpush1.bf16.msra.mxu0 %v4702
        %4982 = vmatprep.subr.bf16.mxu0 %v4705
        %4983 = vmatpush1.bf16.msra.mxu0 %v4704
        %4984 = vmatprep.subr.bf16.mxu0 %v4707
        %4985 = vmatpush1.bf16.msra.mxu0 %v4706
        %4986 = vmatprep.subr.bf16.mxu0 %v4709
        %4987 = vmatpush1.bf16.msra.mxu0 %v4708
        %4988 = vmatprep.subr.bf16.mxu0 %v4711
        %4989 = vmatpush1.bf16.msra.mxu0 %v4710
        %4990 = vmatprep.subr.bf16.mxu0 %v4713
        %4991 = vmatpush1.bf16.msra.mxu0 %v4712
        %4992 = vmatprep.subr.bf16.mxu0 %v4715
        %4993 = vmatpush1.bf16.msra.mxu0 %v4714
        %4994 = vmatprep.mubr.bf16.mxu0 %v4093
        %4995 = vmatmul.mubr.bf16.gmra.mrb[0].mxu0 %v4092
        %v4996 = vpop.f32.mrb[0].mxu0
        %v4997 = vadd.f32 %v4954, %v4996
        %v4998 = vpop.f32.mrb[0].mxu0
        %v4999 = vadd.f32 %v4956, %v4998
        %v5000 = vpop.f32.mrb[0].mxu0
        %v5001 = vadd.f32 %v4958, %v5000
        %v5002 = vpop.f32.mrb[0].mxu0
        %v5003 = vadd.f32 %v4960, %v5002
        %5004 = vdwg.mxu0
        %5005 = vmatprep.subr.bf16.mxu0 %v4717
        %5006 = vmatpush1.bf16.msra.mxu0 %v4716
        %5007 = vmatprep.subr.bf16.mxu0 %v4719
        %5008 = vmatpush1.bf16.msra.mxu0 %v4718
        %5009 = vmatprep.subr.bf16.mxu0 %v4721
        %5010 = vmatpush1.bf16.msra.mxu0 %v4720
        %5011 = vmatprep.subr.bf16.mxu0 %v4723
        %5012 = vmatpush1.bf16.msra.mxu0 %v4722
        %5013 = vmatprep.subr.bf16.mxu0 %v4725
        %5014 = vmatpush1.bf16.msra.mxu0 %v4724
        %5015 = vmatprep.subr.bf16.mxu0 %v4727
        %5016 = vmatpush1.bf16.msra.mxu0 %v4726
        %5017 = vmatprep.subr.bf16.mxu0 %v4729
        %5018 = vmatpush1.bf16.msra.mxu0 %v4728
        %5019 = vmatprep.subr.bf16.mxu0 %v4731
        %5020 = vmatpush1.bf16.msra.mxu0 %v4730
        %5021 = vmatprep.subr.bf16.mxu0 %v4733
        %5022 = vmatpush1.bf16.msra.mxu0 %v4732
        %5023 = vmatprep.subr.bf16.mxu0 %v4735
        %5024 = vmatpush1.bf16.msra.mxu0 %v4734
        %5025 = vmatprep.subr.bf16.mxu0 %v4737
        %5026 = vmatpush1.bf16.msra.mxu0 %v4736
        %5027 = vmatprep.subr.bf16.mxu0 %v4739
        %5028 = vmatpush1.bf16.msra.mxu0 %v4738
        %5029 = vmatprep.subr.bf16.mxu0 %v4741
        %5030 = vmatpush1.bf16.msra.mxu0 %v4740
        %5031 = vmatprep.subr.bf16.mxu0 %v4743
        %5032 = vmatpush1.bf16.msra.mxu0 %v4742
        %5033 = vmatprep.subr.bf16.mxu0 %v4745
        %5034 = vmatpush1.bf16.msra.mxu0 %v4744
        %5035 = vmatprep.subr.bf16.mxu0 %v4747
        %5036 = vmatpush1.bf16.msra.mxu0 %v4746
        %5037 = vmatprep.mubr.bf16.mxu0 %v4095
        %5038 = vmatmul.mubr.bf16.gmra.mrb[0].mxu0 %v4094
        %v5039 = vpop.f32.mrb[0].mxu0
        %v5040 = vadd.f32 %v4997, %v5039
        %v5041 = vpop.f32.mrb[0].mxu0
        %v5042 = vadd.f32 %v4999, %v5041
        %v5043 = vpop.f32.mrb[0].mxu0
        %v5044 = vadd.f32 %v5001, %v5043
        %v5045 = vpop.f32.mrb[0].mxu0
        %v5046 = vadd.f32 %v5003, %v5045
        %5047 = vdwg.mxu0
        %v5048 = vadd.f32 %v5040, %v2604
        %v5049 = vadd.f32 %v5042, %v2605
        %v5050 = vadd.f32 %v5044, %v2606
        %v5051 = vadd.f32 %v5046, %v2607
        %5052 = vst [vmem:[%s499] sm:$0xff] %v5048
        %5053 = vst [vmem:[%s499 + $0x8] sm:$0xff] %v5049
        %5054 = vst [vmem:[%s499 + $0x10] sm:$0xff] %v5050
        %5055 = vst [vmem:[%s499 + $0x18] sm:$0xff] %v5051
        %p5056 = scmp.lt.s32.totalorder %s27, 1
        %s5057 = scalar_select %p5056, %s27, 1
        %s5058 = smul.addr %s5057, 4
        %s5059 = smul.addr %s5058, 8
        %s5060 = scalar_lea.vmem %s13, %s5059
        // Predicated region
        $region89: #{transformer_block.1} parent=71 // pred_check
          %p5061 = pneg %p323
        $region90: #{transformer_block.1} parent=71 // pred_check_branch
          %5063 = sbr.rel (%p5061) target = $region92
        $region91: #{transformer_block.1} parent=71 // pred_region
          _
        $region92: #{transformer_block.1} parent=71 // pred_fallthru
          _
      $region72: #{transformer_block.1} parent=5 // pred_fallthru
        _
      %p5064 = scmp.le.s32.totalorder 2, %s22
      // Predicated region
      $region93: #{transformer_block.1} parent=5 // pred_check
        %p5065 = pneg %p5064
      $region94: #{transformer_block.1} parent=5 // pred_check_branch
        %5067 = sbr.rel (%p5065) target = $region96
      $region95: #{transformer_block.1} parent=5 // pred_region
        %s5068 = ssub.s32 %s22, 2
        // Predicated region
        $region97: #{transformer_block.1} parent=95 // pred_check
          %p5069 = pneg %p329
        $region98: #{transformer_block.1} parent=95 // pred_check_branch
          %5071 = sbr.rel (%p5069) target = $region100
        $region99: #{transformer_block.1} parent=95 // pred_region
          %p5072 = scmp.lt.s32.totalorder %s28, 1
          %s5073 = scalar_select %p5072, %s28, 1
          %s5074 = smul.addr %s5073, 4
          %s5075 = smul.addr %s5074, 8
          %s5076 = scalar_lea.vmem %s13, %s5075
        $region100: #{transformer_block.1} parent=95 // pred_fallthru
          _
      $region96: #{transformer_block.1} parent=5 // pred_fallthru
        _
    $region6: #{transformer_block.1} parent=1 // loop_footer
      %s26 = sadd.s32 1, %s22
    $region7: #{transformer_block.1} parent=1 // loop_footer_branch
      %21 = sbr.rel target = $region3
    $region8: #{transformer_block.1} parent=1 // loop_exit
      _
    %5077 = vsyncpa [#allocation3], 1
    %s5078 = scalar_lea.sflag [#allocation3], 1
    %5079 = vsyncpa %s5078, 1
    %5080 = vsyncpa [#allocation5], 1
    %5081 = vsyncpa [#allocation8], 1

</llo_original>
